<compile_context>
chip_gen: v7x
topology: tpu7x:2x2x1
jax: 0.10.0
libtpu: 0.0.40
codegen_flags: <defaults>
</compile_context>

<pallas_src>
import functools

import jax
import jax.numpy as jnp
from jax.experimental import pallas as pl
from jax.experimental.pallas import tpu as pltpu

EPS = 1e-5  # torch.nn.LayerNorm default eps


# ---------------------------------------------------------------------------
# small in-kernel math helpers (all f32)
# ---------------------------------------------------------------------------
def _layernorm(x, g, b):
    mu = jnp.mean(x, axis=-1, keepdims=True)
    xc = x - mu
    var = jnp.mean(xc * xc, axis=-1, keepdims=True)
    return xc * jax.lax.rsqrt(var + EPS) * g + b


def _gelu(x):
    # tanh-approximate GELU (EUP tanh). torch.nn.GELU default is exact erf; |err| < ~1e-3.
    c = 0.7978845608028654  # sqrt(2/pi)
    return 0.5 * x * (1.0 + jnp.tanh(c * (x + 0.044715 * x * x * x)))


# ---------------------------------------------------------------------------
# Fused transformer layer on a (Bt, N, D) activation block:
#   x -> LN -> qkv -> per-(batch,head) softmax(q k^T) v -> out-proj -> +x
#     -> LN -> Linear -> GELU -> Linear -> +x
# vec rows: [ln1_g, ln1_b, b_out, ln2_g, ln2_b, b2, (fin_g, fin_b for last layer)].
# Returns the (Bt*N, D) f32 activations after both residual adds.
# ---------------------------------------------------------------------------
def _layer_compute(x3, vec, wqkv_t, wout, w1, b1, w2, *, heads, dim_head, scale,
                   attn_store=None):
    bt, n, d = x3.shape
    inner = heads * dim_head
    rows = bt * n
    cdt = wqkv_t.dtype  # bf16 MXU operand dtype

    ln1_g, ln1_b = vec[0:1, :], vec[1:2, :]
    b_out = vec[2:3, :]
    ln2_g, ln2_b = vec[3:4, :], vec[4:5, :]
    b2 = vec[5:6, :]

    x2 = x3.reshape(rows, d)

    # ---------------- Attention (pre-LN), residual fused ----------------
    xn = _layernorm(x2, ln1_g, ln1_b)
    # One big MXU matmul in a transposed (3*inner, rows) layout so per-head q/k/v
    # slices are sublane-aligned row slices.
    qkv_t = jax.lax.dot_general(wqkv_t, xn.astype(cdt), (((1,), (1,)), ((), ())),
                                preferred_element_type=jnp.float32)        # (3*inner, rows)
    # Fold softmax scale into q; cast q/k/v once to bf16 for the attention GEMMs.
    q_all = (qkv_t[0:inner, :] * scale).astype(cdt)
    k_all = qkv_t[inner:2 * inner, :].astype(cdt)
    v_all = qkv_t[2 * inner:3 * inner, :].astype(cdt)

    batch_outs = []
    for bi in range(bt):                      # static unroll over the batch tile
        c0 = bi * n
        head_outs = []
        for h in range(heads):                # static unroll over heads
            r0 = h * dim_head
            q_t = q_all[r0:r0 + dim_head, c0:c0 + n]        # (dh, n)
            k_t = k_all[r0:r0 + dim_head, c0:c0 + n]        # (dh, n)
            v_t = v_all[r0:r0 + dim_head, c0:c0 + n]        # (dh, n)
            # logits[i, j] = q_i . k_j — contract the dh dim of both (no transposes).
            dots = jax.lax.dot_general(q_t, k_t, (((0,), (0,)), ((), ())),
                                       preferred_element_type=jnp.float32)   # (n, n)
            dots = dots - jnp.max(dots, axis=-1, keepdims=True)
            e = jnp.exp(dots)
            a = e * pl.reciprocal(jnp.sum(e, axis=-1, keepdims=True), approx=True)
            if attn_store is not None:
                attn_store(bi, h, a)          # per-head direct store (no stacking)
            # out[i, :] = sum_j a[i, j] * v[j, :] — contract the n dim of both.
            head_outs.append(
                jax.lax.dot_general(a.astype(cdt), v_t, (((1,), (1,)), ((), ())),
                                    preferred_element_type=jnp.float32))     # (n, dh)
        batch_outs.append(jnp.concatenate(head_outs, axis=-1))               # (n, inner)
    o_cat = jnp.concatenate(batch_outs, axis=0)                              # (rows, inner)

    y = jnp.dot(o_cat.astype(cdt), wout, preferred_element_type=jnp.float32) + b_out
    x2 = x2 + y

    # ---------------- FeedForward (pre-LN), residual fused ----------------
    xn2 = _layernorm(x2, ln2_g, ln2_b)
    hdn = jnp.dot(xn2.astype(cdt), w1, preferred_element_type=jnp.float32) + b1
    hdn = _gelu(hdn)
    y2 = jnp.dot(hdn.astype(cdt), w2, preferred_element_type=jnp.float32) + b2
    return x2 + y2


# ---------------------------------------------------------------------------
# Kernels: intermediate layers (no attention-map output), and the last layer
# (emits attention maps per head + applies the final LayerNorm).
# ---------------------------------------------------------------------------
def _layer_kernel(x_ref, vec_ref, wqkv_ref, wout_ref, w1_ref, b1_ref, w2_ref, o_ref,
                  *, heads, dim_head, scale):
    x3 = x_ref[...].astype(jnp.float32)                                   # (Bt, N, D)
    out2 = _layer_compute(x3, vec_ref[...], wqkv_ref[...], wout_ref[...],
                          w1_ref[...], b1_ref[...], w2_ref[...],
                          heads=heads, dim_head=dim_head, scale=scale)
    o_ref[...] = out2.reshape(x3.shape).astype(o_ref.dtype)


def _last_layer_kernel(x_ref, vec_ref, wqkv_ref, wout_ref, w1_ref, b1_ref, w2_ref,
                       o_ref, attn_ref, *, heads, dim_head, scale):
    x3 = x_ref[...].astype(jnp.float32)                                   # (Bt, N, D)
    vec = vec_ref[...]

    def store_attn(bi, h, a):
        attn_ref[bi, h] = a.astype(attn_ref.dtype)

    out2 = _layer_compute(x3, vec, wqkv_ref[...], wout_ref[...],
                          w1_ref[...], b1_ref[...], w2_ref[...],
                          heads=heads, dim_head=dim_head, scale=scale,
                          attn_store=store_attn)
    fin_g, fin_b = vec[6:7, :], vec[7:8, :]
    o_ref[...] = _layernorm(out2, fin_g, fin_b).reshape(x3.shape).astype(o_ref.dtype)


# ---------------------------------------------------------------------------
# Host-side helpers
# ---------------------------------------------------------------------------
def _vmem_limit_bytes():
    try:
        cap = int(pltpu.get_tpu_info().vmem_capacity_bytes)
    except Exception:
        cap = 64 * 1024 * 1024  # conservative (v7x per-TC VMEM)
    # leave headroom for Mosaic-internal scratch; cap at 100 MiB on 128 MiB chips
    return min(int(cap * 0.875), 100 * 1024 * 1024)


def _choose_batch_tile(B, N, D, inner, mlp_dim, heads, emit_attn, act_budget_bytes):
    """Largest/smallest suitable divisor Bt of B: target Bt*N >= 256 MXU rows, fit VMEM."""
    def act_bytes(bt):
        rows = bt * N
        a = 4 * rows * (4 * D + 3 * inner + mlp_dim)        # f32 activations in flight
        a += 2 * 2 * bt * N * D * 4                         # x in + out blocks (dbl-buffered)
        if emit_attn:
            a += 2 * bt * heads * N * N * 4                 # attn output block (dbl-buffered)
        else:
            a += 2 * N * N * 4                              # transient per-head maps
        return a

    budget = max(act_budget_bytes, 1 << 20)
    divisors = [d for d in range(1, B + 1) if B % d == 0]
    fitting = [d for d in divisors if act_bytes(d) <= budget]
    if not fitting:
        return 1
    for d in fitting:
        if d * N >= 256:
            return d
    return fitting[-1]


def _pack_vecs(ap, fp, final_ln=None):
    rows = [ap["ln_g"], ap["ln_b"], ap["b_out"], fp["ln_g"], fp["ln_b"], fp["b2"]]
    if final_ln is not None:
        rows += [final_ln["ln_g"], final_ln["ln_b"]]
    return jnp.concatenate(rows, axis=0).astype(jnp.float32)   # (6 or 8, D)


def transformer_layer(x, p, heads, dim_head, *, final_ln=None):
    """One fused transformer layer. If final_ln is given this is the LAST layer:
    the final LayerNorm is fused in and the attention maps are emitted."""
    B, N, D = x.shape
    ap, fp = p["attn"], p["ff"]
    inner = heads * dim_head
    M = fp["w1"].shape[1]
    scale = dim_head ** (-0.5)
    is_last = final_ln is not None

    vmem_limit = _vmem_limit_bytes()
    # bf16 weights; assume worst-case double buffering when budgeting activations.
    weight_bytes = 2 * 2 * (4 * inner * D + 2 * D * M)
    bt = _choose_batch_tile(B, N, D, inner, M, heads, is_last, vmem_limit - weight_bytes)
    grid = (B // bt,)

    vec = _pack_vecs(ap, fp, final_ln)
    args = [x, vec, ap["w_qkv_t"], ap["w_out"], fp["w1"], fp["b1"], fp["w2"]]

    cparams = pltpu.CompilerParams(
        dimension_semantics=("parallel",),
        vmem_limit_bytes=vmem_limit,
    )

    def build_in_specs(buffered):
        def wspec(shape):
            idx = lambda b: (0, 0)
            if buffered:
                # weights/biases never change across the grid -> single buffer
                return pl.BlockSpec(shape, idx, pipeline_mode=pl.Buffered(1))
            return pl.BlockSpec(shape, idx)

        return [
            pl.BlockSpec((bt, N, D), lambda b: (b, 0, 0)),   # x block
            wspec(vec.shape),                                # packed LN/bias vectors
            wspec((3 * inner, D)),                           # w_qkv (torch layout, bf16)
            wspec((inner, D)),                               # w_out (bf16)
            wspec((D, M)),                                   # w1 (bf16)
            wspec((1, M)),                                   # b1 (f32)
            wspec((M, D)),                                   # w2 (bf16)
        ]

    def call(buffered):
        in_specs = build_in_specs(buffered)
        if not is_last:
            kern = functools.partial(_layer_kernel, heads=heads, dim_head=dim_head,
                                     scale=scale)
            out = pl.pallas_call(
                kern,
                out_shape=jax.ShapeDtypeStruct((B, N, D), x.dtype),
                grid=grid,
                in_specs=in_specs,
                out_specs=pl.BlockSpec((bt, N, D), lambda b: (b, 0, 0)),
                compiler_params=cparams,
            )(*args)
            return out, None

        kern = functools.partial(_last_layer_kernel, heads=heads, dim_head=dim_head,
                                 scale=scale)
        out, attn = pl.pallas_call(
            kern,
            out_shape=(jax.ShapeDtypeStruct((B, N, D), x.dtype),
                       jax.ShapeDtypeStruct((B, heads, N, N), jnp.float32)),
            grid=grid,
            in_specs=in_specs,
            out_specs=(pl.BlockSpec((bt, N, D), lambda b: (b, 0, 0)),
                       pl.BlockSpec((bt, heads, N, N), lambda b: (b, 0, 0, 0))),
            compiler_params=cparams,
        )(*args)
        return out, attn

    try:
        return call(True)      # single-buffered weights (preferred)
    except Exception:
        return call(False)     # fallback if pipeline_mode/Buffered(1) is unavailable


def transformer_forward(x, layer_params, final_ln, heads, dim_head):
    depth = len(layer_params)
    attn = None
    for i, p in enumerate(layer_params):
        is_last = (i == depth - 1)
        x, a = transformer_layer(x, p, heads, dim_head,
                                 final_ln=final_ln if is_last else None)
        if is_last:
            attn = a
    return x, attn


# ---------------------------------------------------------------------------
# Deterministic synthetic parameter init (shapes follow the module __init__).
# LayerNorm: gamma=1, beta=0 (torch default). to_qkv has no bias (bias=False).
# Linear weights stored in bf16 (MXU-native); LN params and biases stay f32.
# w_qkv_t uses the torch nn.Linear layout (out_features, in_features) so the kernel's
# per-head slices are sublane-aligned row slices.
# ---------------------------------------------------------------------------
def init_params(key, dim, depth, heads, dim_head, mlp_dim, weight_dtype=jnp.bfloat16):
    inner = heads * dim_head
    layers = []
    for _ in range(depth):
        key, k0, k1, k2, k3, k4, k5, k6 = jax.random.split(key, 8)
        attn_p = {
            "ln_g": jnp.ones((1, dim), jnp.float32),
            "ln_b": jnp.zeros((1, dim), jnp.float32),
            "w_qkv_t": (0.05 * jax.random.normal(k0, (3 * inner, dim), jnp.float32)
                        ).astype(weight_dtype),
            "w_out": (0.05 * jax.random.normal(k1, (inner, dim), jnp.float32)
                      ).astype(weight_dtype),
            "b_out": 0.01 * jax.random.normal(k2, (1, dim), jnp.float32),
        }
        ff_p = {
            "ln_g": jnp.ones((1, dim), jnp.float32),
            "ln_b": jnp.zeros((1, dim), jnp.float32),
            "w1": (0.05 * jax.random.normal(k3, (dim, mlp_dim), jnp.float32)
                   ).astype(weight_dtype),
            "b1": 0.01 * jax.random.normal(k4, (1, mlp_dim), jnp.float32),
            "w2": (0.05 * jax.random.normal(k5, (mlp_dim, dim), jnp.float32)
                   ).astype(weight_dtype),
            "b2": 0.01 * jax.random.normal(k6, (1, dim), jnp.float32),
        }
        layers.append({"attn": attn_p, "ff": ff_p})
    final_ln = {"ln_g": jnp.ones((1, dim), jnp.float32),
                "ln_b": jnp.zeros((1, dim), jnp.float32)}
    return layers, final_ln


if __name__ == "__main__":
    # small shapes consistent with the module: Transformer(dim=32, depth=2,
    # heads=4, dim_head=8, mlp_dim=64) applied to x of shape (B=2, N=8, D=32)
    B, N, D = 2, 8, 32
    depth, heads, dim_head, mlp_dim = 2, 4, 8, 64

    key = jax.random.PRNGKey(0)
    key, kx = jax.random.split(key)
    x = jax.random.normal(kx, (B, N, D), jnp.float32)

    layer_params, final_ln = init_params(key, D, depth, heads, dim_head, mlp_dim)

    out, attn = transformer_forward(x, layer_params, final_ln, heads, dim_head)
    out = jax.block_until_ready(out)
    attn = jax.block_until_ready(attn)

    assert out.shape == (B, N, D)
    assert attn.shape == (B, heads, N, N)
    print("KERNEL_OK")
</pallas_src>

<mosaic_0001>
module attributes {stable_mosaic.version = 11 : i64} {
  func.func @_layer_kernel(%arg0: i32, %arg1: memref<2x8x32xf32, #tpu.memory_space<vmem>>, %arg2: memref<6x32xf32, #tpu.memory_space<vmem>>, %arg3: memref<96x32xbf16, #tpu.memory_space<vmem>>, %arg4: memref<32x32xbf16, #tpu.memory_space<vmem>>, %arg5: memref<32x64xbf16, #tpu.memory_space<vmem>>, %arg6: memref<1x64xf32, #tpu.memory_space<vmem>>, %arg7: memref<64x32xbf16, #tpu.memory_space<vmem>>, %arg8: memref<2x8x32xf32, #tpu.memory_space<vmem>>) attributes {dimension_semantics = [#tpu.dimension_semantics<parallel>], iteration_bounds = array<i64: 1>, scalar_prefetch = 0 : i64, scratch_operands = 0 : i64, tpu.core_type = #tpu.core_type<tc>, window_params = [{transform_indices = @transform_0, window_bounds = array<i64: 2, 8, 32>}, {pipeline_mode = #tpu.pipeline_mode<synchronous>, transform_indices = @transform_1, window_bounds = array<i64: 6, 32>}, {pipeline_mode = #tpu.pipeline_mode<synchronous>, transform_indices = @transform_2, window_bounds = array<i64: 96, 32>}, {pipeline_mode = #tpu.pipeline_mode<synchronous>, transform_indices = @transform_3, window_bounds = array<i64: 32, 32>}, {pipeline_mode = #tpu.pipeline_mode<synchronous>, transform_indices = @transform_4, window_bounds = array<i64: 32, 64>}, {pipeline_mode = #tpu.pipeline_mode<synchronous>, transform_indices = @transform_5, window_bounds = array<i64: 1, 64>}, {pipeline_mode = #tpu.pipeline_mode<synchronous>, transform_indices = @transform_6, window_bounds = array<i64: 64, 32>}, {transform_indices = @transform_7, window_bounds = array<i64: 2, 8, 32>}]} {
    %c0 = arith.constant 0 : index
    %c0_0 = arith.constant 0 : index
    %c0_1 = arith.constant 0 : index
    %0 = vector.load %arg1[%c0, %c0_0, %c0_1] : memref<2x8x32xf32, #tpu.memory_space<vmem>>, vector<2x8x32xf32>
    %c0_2 = arith.constant 0 : index
    %c0_3 = arith.constant 0 : index
    %1 = vector.load %arg2[%c0_2, %c0_3] : memref<6x32xf32, #tpu.memory_space<vmem>>, vector<6x32xf32>
    %c0_4 = arith.constant 0 : index
    %c0_5 = arith.constant 0 : index
    %2 = vector.load %arg3[%c0_4, %c0_5] : memref<96x32xbf16, #tpu.memory_space<vmem>>, vector<96x32xbf16>
    %c0_6 = arith.constant 0 : index
    %c0_7 = arith.constant 0 : index
    %3 = vector.load %arg4[%c0_6, %c0_7] : memref<32x32xbf16, #tpu.memory_space<vmem>>, vector<32x32xbf16>
    %c0_8 = arith.constant 0 : index
    %c0_9 = arith.constant 0 : index
    %4 = vector.load %arg5[%c0_8, %c0_9] : memref<32x64xbf16, #tpu.memory_space<vmem>>, vector<32x64xbf16>
    %c0_10 = arith.constant 0 : index
    %c0_11 = arith.constant 0 : index
    %5 = vector.load %arg6[%c0_10, %c0_11] : memref<1x64xf32, #tpu.memory_space<vmem>>, vector<1x64xf32>
    %c0_12 = arith.constant 0 : index
    %c0_13 = arith.constant 0 : index
    %6 = vector.load %arg7[%c0_12, %c0_13] : memref<64x32xbf16, #tpu.memory_space<vmem>>, vector<64x32xbf16>
    %7 = vector.extract_strided_slice %1 {offsets = [0, 0], sizes = [1, 32], strides = [1, 1]} : vector<6x32xf32> to vector<1x32xf32>
    %8 = vector.extract_strided_slice %1 {offsets = [1, 0], sizes = [1, 32], strides = [1, 1]} : vector<6x32xf32> to vector<1x32xf32>
    %9 = vector.extract_strided_slice %1 {offsets = [2, 0], sizes = [1, 32], strides = [1, 1]} : vector<6x32xf32> to vector<1x32xf32>
    %10 = vector.extract_strided_slice %1 {offsets = [3, 0], sizes = [1, 32], strides = [1, 1]} : vector<6x32xf32> to vector<1x32xf32>
    %11 = vector.extract_strided_slice %1 {offsets = [4, 0], sizes = [1, 32], strides = [1, 1]} : vector<6x32xf32> to vector<1x32xf32>
    %12 = vector.extract_strided_slice %1 {offsets = [5, 0], sizes = [1, 32], strides = [1, 1]} : vector<6x32xf32> to vector<1x32xf32>
    %13 = vector.shape_cast %0 : vector<2x8x32xf32> to vector<16x32xf32>
    %cst = arith.constant dense<0.000000e+00> : vector<16xf32>
    %14 = vector.multi_reduction <add>, %13, %cst [1] : vector<16x32xf32> to vector<16xf32>
    %15 = vector.shape_cast %14 : vector<16xf32> to vector<16x1xf32>
    %cst_14 = arith.constant 3.200000e+01 : f32
    %16 = vector.broadcast %cst_14 : f32 to vector<16x1xf32>
    %17 = arith.divf %15, %16 : vector<16x1xf32>
    %18 = vector.broadcast %17 : vector<16x1xf32> to vector<16x32xf32>
    %19 = arith.subf %13, %18 : vector<16x32xf32>
    %20 = arith.mulf %19, %19 : vector<16x32xf32>
    %cst_15 = arith.constant dense<0.000000e+00> : vector<16xf32>
    %21 = vector.multi_reduction <add>, %20, %cst_15 [1] : vector<16x32xf32> to vector<16xf32>
    %22 = vector.shape_cast %21 : vector<16xf32> to vector<16x1xf32>
    %cst_16 = arith.constant 3.200000e+01 : f32
    %23 = vector.broadcast %cst_16 : f32 to vector<16x1xf32>
    %24 = arith.divf %22, %23 : vector<16x1xf32>
    %cst_17 = arith.constant 9.99999974E-6 : f32
    %25 = vector.broadcast %cst_17 : f32 to vector<16x1xf32>
    %26 = arith.addf %24, %25 : vector<16x1xf32>
    %27 = math.rsqrt %26 : vector<16x1xf32>
    %28 = vector.broadcast %27 : vector<16x1xf32> to vector<16x32xf32>
    %29 = arith.mulf %19, %28 : vector<16x32xf32>
    %30 = vector.broadcast %7 : vector<1x32xf32> to vector<16x32xf32>
    %31 = arith.mulf %29, %30 : vector<16x32xf32>
    %32 = vector.broadcast %8 : vector<1x32xf32> to vector<16x32xf32>
    %33 = arith.addf %31, %32 : vector<16x32xf32>
    %34 = arith.truncf %33 : vector<16x32xf32> to vector<16x32xbf16>
    %cst_18 = arith.constant dense<0.000000e+00> : vector<96x16xf32>
    %35 = tpu.matmul %2, %34, %cst_18 {dimension_numbers = #tpu.dot_dimension_numbers<[1], [1], [0], [0], [0, 0, 1, 0], [], []>} : vector<96x32xbf16>, vector<16x32xbf16>, vector<96x16xf32> -> vector<96x16xf32>
    %36 = vector.extract_strided_slice %35 {offsets = [0, 0], sizes = [32, 16], strides = [1, 1]} : vector<96x16xf32> to vector<32x16xf32>
    %cst_19 = arith.constant 0.353553385 : f32
    %37 = vector.broadcast %cst_19 : f32 to vector<32x16xf32>
    %38 = arith.mulf %36, %37 : vector<32x16xf32>
    %39 = arith.truncf %38 : vector<32x16xf32> to vector<32x16xbf16>
    %40 = vector.extract_strided_slice %35 {offsets = [32, 0], sizes = [32, 16], strides = [1, 1]} : vector<96x16xf32> to vector<32x16xf32>
    %41 = arith.truncf %40 : vector<32x16xf32> to vector<32x16xbf16>
    %42 = vector.extract_strided_slice %35 {offsets = [64, 0], sizes = [32, 16], strides = [1, 1]} : vector<96x16xf32> to vector<32x16xf32>
    %43 = arith.truncf %42 : vector<32x16xf32> to vector<32x16xbf16>
    %44 = vector.extract_strided_slice %39 {offsets = [0, 0], sizes = [8, 8], strides = [1, 1]} : vector<32x16xbf16> to vector<8x8xbf16>
    %45 = vector.extract_strided_slice %41 {offsets = [0, 0], sizes = [8, 8], strides = [1, 1]} : vector<32x16xbf16> to vector<8x8xbf16>
    %46 = vector.extract_strided_slice %43 {offsets = [0, 0], sizes = [8, 8], strides = [1, 1]} : vector<32x16xbf16> to vector<8x8xbf16>
    %cst_20 = arith.constant dense<0.000000e+00> : vector<8x8xf32>
    %47 = tpu.matmul %44, %45, %cst_20 {dimension_numbers = #tpu.dot_dimension_numbers<[0], [0], [1], [1], [0, 1, 1, 1], [], []>} : vector<8x8xbf16>, vector<8x8xbf16>, vector<8x8xf32> -> vector<8x8xf32>
    %cst_21 = arith.constant dense<0xFF800000> : vector<8xf32>
    %48 = vector.multi_reduction <maximumf>, %47, %cst_21 [1] : vector<8x8xf32> to vector<8xf32>
    %49 = vector.shape_cast %48 : vector<8xf32> to vector<8x1xf32>
    %50 = vector.broadcast %49 : vector<8x1xf32> to vector<8x8xf32>
    %51 = arith.subf %47, %50 : vector<8x8xf32>
    %52 = math.exp %51 : vector<8x8xf32>
    %cst_22 = arith.constant dense<0.000000e+00> : vector<8xf32>
    %53 = vector.multi_reduction <add>, %52, %cst_22 [1] : vector<8x8xf32> to vector<8xf32>
    %54 = vector.shape_cast %53 : vector<8xf32> to vector<8x1xf32>
    %55 = tpu.reciprocal %54 {approx = true} : vector<8x1xf32> -> vector<8x1xf32>
    %56 = vector.broadcast %55 : vector<8x1xf32> to vector<8x8xf32>
    %57 = arith.mulf %52, %56 : vector<8x8xf32>
    %58 = arith.truncf %57 : vector<8x8xf32> to vector<8x8xbf16>
    %cst_23 = arith.constant dense<0.000000e+00> : vector<8x8xf32>
    %59 = tpu.matmul %58, %46, %cst_23 {dimension_numbers = #tpu.dot_dimension_numbers<[1], [1], [0], [0], [0, 0, 1, 0], [], []>} : vector<8x8xbf16>, vector<8x8xbf16>, vector<8x8xf32> -> vector<8x8xf32>
    %60 = vector.extract_strided_slice %39 {offsets = [8, 0], sizes = [8, 8], strides = [1, 1]} : vector<32x16xbf16> to vector<8x8xbf16>
    %61 = vector.extract_strided_slice %41 {offsets = [8, 0], sizes = [8, 8], strides = [1, 1]} : vector<32x16xbf16> to vector<8x8xbf16>
    %62 = vector.extract_strided_slice %43 {offsets = [8, 0], sizes = [8, 8], strides = [1, 1]} : vector<32x16xbf16> to vector<8x8xbf16>
    %cst_24 = arith.constant dense<0.000000e+00> : vector<8x8xf32>
    %63 = tpu.matmul %60, %61, %cst_24 {dimension_numbers = #tpu.dot_dimension_numbers<[0], [0], [1], [1], [0, 1, 1, 1], [], []>} : vector<8x8xbf16>, vector<8x8xbf16>, vector<8x8xf32> -> vector<8x8xf32>
    %cst_25 = arith.constant dense<0xFF800000> : vector<8xf32>
    %64 = vector.multi_reduction <maximumf>, %63, %cst_25 [1] : vector<8x8xf32> to vector<8xf32>
    %65 = vector.shape_cast %64 : vector<8xf32> to vector<8x1xf32>
    %66 = vector.broadcast %65 : vector<8x1xf32> to vector<8x8xf32>
    %67 = arith.subf %63, %66 : vector<8x8xf32>
    %68 = math.exp %67 : vector<8x8xf32>
    %cst_26 = arith.constant dense<0.000000e+00> : vector<8xf32>
    %69 = vector.multi_reduction <add>, %68, %cst_26 [1] : vector<8x8xf32> to vector<8xf32>
    %70 = vector.shape_cast %69 : vector<8xf32> to vector<8x1xf32>
    %71 = tpu.reciprocal %70 {approx = true} : vector<8x1xf32> -> vector<8x1xf32>
    %72 = vector.broadcast %71 : vector<8x1xf32> to vector<8x8xf32>
    %73 = arith.mulf %68, %72 : vector<8x8xf32>
    %74 = arith.truncf %73 : vector<8x8xf32> to vector<8x8xbf16>
    %cst_27 = arith.constant dense<0.000000e+00> : vector<8x8xf32>
    %75 = tpu.matmul %74, %62, %cst_27 {dimension_numbers = #tpu.dot_dimension_numbers<[1], [1], [0], [0], [0, 0, 1, 0], [], []>} : vector<8x8xbf16>, vector<8x8xbf16>, vector<8x8xf32> -> vector<8x8xf32>
    %76 = vector.extract_strided_slice %39 {offsets = [16, 0], sizes = [8, 8], strides = [1, 1]} : vector<32x16xbf16> to vector<8x8xbf16>
    %77 = vector.extract_strided_slice %41 {offsets = [16, 0], sizes = [8, 8], strides = [1, 1]} : vector<32x16xbf16> to vector<8x8xbf16>
    %78 = vector.extract_strided_slice %43 {offsets = [16, 0], sizes = [8, 8], strides = [1, 1]} : vector<32x16xbf16> to vector<8x8xbf16>
    %cst_28 = arith.constant dense<0.000000e+00> : vector<8x8xf32>
    %79 = tpu.matmul %76, %77, %cst_28 {dimension_numbers = #tpu.dot_dimension_numbers<[0], [0], [1], [1], [0, 1, 1, 1], [], []>} : vector<8x8xbf16>, vector<8x8xbf16>, vector<8x8xf32> -> vector<8x8xf32>
    %cst_29 = arith.constant dense<0xFF800000> : vector<8xf32>
    %80 = vector.multi_reduction <maximumf>, %79, %cst_29 [1] : vector<8x8xf32> to vector<8xf32>
    %81 = vector.shape_cast %80 : vector<8xf32> to vector<8x1xf32>
    %82 = vector.broadcast %81 : vector<8x1xf32> to vector<8x8xf32>
    %83 = arith.subf %79, %82 : vector<8x8xf32>
    %84 = math.exp %83 : vector<8x8xf32>
    %cst_30 = arith.constant dense<0.000000e+00> : vector<8xf32>
    %85 = vector.multi_reduction <add>, %84, %cst_30 [1] : vector<8x8xf32> to vector<8xf32>
    %86 = vector.shape_cast %85 : vector<8xf32> to vector<8x1xf32>
    %87 = tpu.reciprocal %86 {approx = true} : vector<8x1xf32> -> vector<8x1xf32>
    %88 = vector.broadcast %87 : vector<8x1xf32> to vector<8x8xf32>
    %89 = arith.mulf %84, %88 : vector<8x8xf32>
    %90 = arith.truncf %89 : vector<8x8xf32> to vector<8x8xbf16>
    %cst_31 = arith.constant dense<0.000000e+00> : vector<8x8xf32>
    %91 = tpu.matmul %90, %78, %cst_31 {dimension_numbers = #tpu.dot_dimension_numbers<[1], [1], [0], [0], [0, 0, 1, 0], [], []>} : vector<8x8xbf16>, vector<8x8xbf16>, vector<8x8xf32> -> vector<8x8xf32>
    %92 = vector.extract_strided_slice %39 {offsets = [24, 0], sizes = [8, 8], strides = [1, 1]} : vector<32x16xbf16> to vector<8x8xbf16>
    %93 = vector.extract_strided_slice %41 {offsets = [24, 0], sizes = [8, 8], strides = [1, 1]} : vector<32x16xbf16> to vector<8x8xbf16>
    %94 = vector.extract_strided_slice %43 {offsets = [24, 0], sizes = [8, 8], strides = [1, 1]} : vector<32x16xbf16> to vector<8x8xbf16>
    %cst_32 = arith.constant dense<0.000000e+00> : vector<8x8xf32>
    %95 = tpu.matmul %92, %93, %cst_32 {dimension_numbers = #tpu.dot_dimension_numbers<[0], [0], [1], [1], [0, 1, 1, 1], [], []>} : vector<8x8xbf16>, vector<8x8xbf16>, vector<8x8xf32> -> vector<8x8xf32>
    %cst_33 = arith.constant dense<0xFF800000> : vector<8xf32>
    %96 = vector.multi_reduction <maximumf>, %95, %cst_33 [1] : vector<8x8xf32> to vector<8xf32>
    %97 = vector.shape_cast %96 : vector<8xf32> to vector<8x1xf32>
    %98 = vector.broadcast %97 : vector<8x1xf32> to vector<8x8xf32>
    %99 = arith.subf %95, %98 : vector<8x8xf32>
    %100 = math.exp %99 : vector<8x8xf32>
    %cst_34 = arith.constant dense<0.000000e+00> : vector<8xf32>
    %101 = vector.multi_reduction <add>, %100, %cst_34 [1] : vector<8x8xf32> to vector<8xf32>
    %102 = vector.shape_cast %101 : vector<8xf32> to vector<8x1xf32>
    %103 = tpu.reciprocal %102 {approx = true} : vector<8x1xf32> -> vector<8x1xf32>
    %104 = vector.broadcast %103 : vector<8x1xf32> to vector<8x8xf32>
    %105 = arith.mulf %100, %104 : vector<8x8xf32>
    %106 = arith.truncf %105 : vector<8x8xf32> to vector<8x8xbf16>
    %cst_35 = arith.constant dense<0.000000e+00> : vector<8x8xf32>
    %107 = tpu.matmul %106, %94, %cst_35 {dimension_numbers = #tpu.dot_dimension_numbers<[1], [1], [0], [0], [0, 0, 1, 0], [], []>} : vector<8x8xbf16>, vector<8x8xbf16>, vector<8x8xf32> -> vector<8x8xf32>
    %108 = tpu.concatenate %59, %75, %91, %107 in 1 : vector<8x8xf32>, vector<8x8xf32>, vector<8x8xf32>, vector<8x8xf32> -> vector<8x32xf32>
    %109 = vector.extract_strided_slice %39 {offsets = [0, 8], sizes = [8, 8], strides = [1, 1]} : vector<32x16xbf16> to vector<8x8xbf16>
    %110 = vector.extract_strided_slice %41 {offsets = [0, 8], sizes = [8, 8], strides = [1, 1]} : vector<32x16xbf16> to vector<8x8xbf16>
    %111 = vector.extract_strided_slice %43 {offsets = [0, 8], sizes = [8, 8], strides = [1, 1]} : vector<32x16xbf16> to vector<8x8xbf16>
    %cst_36 = arith.constant dense<0.000000e+00> : vector<8x8xf32>
    %112 = tpu.matmul %109, %110, %cst_36 {dimension_numbers = #tpu.dot_dimension_numbers<[0], [0], [1], [1], [0, 1, 1, 1], [], []>} : vector<8x8xbf16>, vector<8x8xbf16>, vector<8x8xf32> -> vector<8x8xf32>
    %cst_37 = arith.constant dense<0xFF800000> : vector<8xf32>
    %113 = vector.multi_reduction <maximumf>, %112, %cst_37 [1] : vector<8x8xf32> to vector<8xf32>
    %114 = vector.shape_cast %113 : vector<8xf32> to vector<8x1xf32>
    %115 = vector.broadcast %114 : vector<8x1xf32> to vector<8x8xf32>
    %116 = arith.subf %112, %115 : vector<8x8xf32>
    %117 = math.exp %116 : vector<8x8xf32>
    %cst_38 = arith.constant dense<0.000000e+00> : vector<8xf32>
    %118 = vector.multi_reduction <add>, %117, %cst_38 [1] : vector<8x8xf32> to vector<8xf32>
    %119 = vector.shape_cast %118 : vector<8xf32> to vector<8x1xf32>
    %120 = tpu.reciprocal %119 {approx = true} : vector<8x1xf32> -> vector<8x1xf32>
    %121 = vector.broadcast %120 : vector<8x1xf32> to vector<8x8xf32>
    %122 = arith.mulf %117, %121 : vector<8x8xf32>
    %123 = arith.truncf %122 : vector<8x8xf32> to vector<8x8xbf16>
    %cst_39 = arith.constant dense<0.000000e+00> : vector<8x8xf32>
    %124 = tpu.matmul %123, %111, %cst_39 {dimension_numbers = #tpu.dot_dimension_numbers<[1], [1], [0], [0], [0, 0, 1, 0], [], []>} : vector<8x8xbf16>, vector<8x8xbf16>, vector<8x8xf32> -> vector<8x8xf32>
    %125 = vector.extract_strided_slice %39 {offsets = [8, 8], sizes = [8, 8], strides = [1, 1]} : vector<32x16xbf16> to vector<8x8xbf16>
    %126 = vector.extract_strided_slice %41 {offsets = [8, 8], sizes = [8, 8], strides = [1, 1]} : vector<32x16xbf16> to vector<8x8xbf16>
    %127 = vector.extract_strided_slice %43 {offsets = [8, 8], sizes = [8, 8], strides = [1, 1]} : vector<32x16xbf16> to vector<8x8xbf16>
    %cst_40 = arith.constant dense<0.000000e+00> : vector<8x8xf32>
    %128 = tpu.matmul %125, %126, %cst_40 {dimension_numbers = #tpu.dot_dimension_numbers<[0], [0], [1], [1], [0, 1, 1, 1], [], []>} : vector<8x8xbf16>, vector<8x8xbf16>, vector<8x8xf32> -> vector<8x8xf32>
    %cst_41 = arith.constant dense<0xFF800000> : vector<8xf32>
    %129 = vector.multi_reduction <maximumf>, %128, %cst_41 [1] : vector<8x8xf32> to vector<8xf32>
    %130 = vector.shape_cast %129 : vector<8xf32> to vector<8x1xf32>
    %131 = vector.broadcast %130 : vector<8x1xf32> to vector<8x8xf32>
    %132 = arith.subf %128, %131 : vector<8x8xf32>
    %133 = math.exp %132 : vector<8x8xf32>
    %cst_42 = arith.constant dense<0.000000e+00> : vector<8xf32>
    %134 = vector.multi_reduction <add>, %133, %cst_42 [1] : vector<8x8xf32> to vector<8xf32>
    %135 = vector.shape_cast %134 : vector<8xf32> to vector<8x1xf32>
    %136 = tpu.reciprocal %135 {approx = true} : vector<8x1xf32> -> vector<8x1xf32>
    %137 = vector.broadcast %136 : vector<8x1xf32> to vector<8x8xf32>
    %138 = arith.mulf %133, %137 : vector<8x8xf32>
    %139 = arith.truncf %138 : vector<8x8xf32> to vector<8x8xbf16>
    %cst_43 = arith.constant dense<0.000000e+00> : vector<8x8xf32>
    %140 = tpu.matmul %139, %127, %cst_43 {dimension_numbers = #tpu.dot_dimension_numbers<[1], [1], [0], [0], [0, 0, 1, 0], [], []>} : vector<8x8xbf16>, vector<8x8xbf16>, vector<8x8xf32> -> vector<8x8xf32>
    %141 = vector.extract_strided_slice %39 {offsets = [16, 8], sizes = [8, 8], strides = [1, 1]} : vector<32x16xbf16> to vector<8x8xbf16>
    %142 = vector.extract_strided_slice %41 {offsets = [16, 8], sizes = [8, 8], strides = [1, 1]} : vector<32x16xbf16> to vector<8x8xbf16>
    %143 = vector.extract_strided_slice %43 {offsets = [16, 8], sizes = [8, 8], strides = [1, 1]} : vector<32x16xbf16> to vector<8x8xbf16>
    %cst_44 = arith.constant dense<0.000000e+00> : vector<8x8xf32>
    %144 = tpu.matmul %141, %142, %cst_44 {dimension_numbers = #tpu.dot_dimension_numbers<[0], [0], [1], [1], [0, 1, 1, 1], [], []>} : vector<8x8xbf16>, vector<8x8xbf16>, vector<8x8xf32> -> vector<8x8xf32>
    %cst_45 = arith.constant dense<0xFF800000> : vector<8xf32>
    %145 = vector.multi_reduction <maximumf>, %144, %cst_45 [1] : vector<8x8xf32> to vector<8xf32>
    %146 = vector.shape_cast %145 : vector<8xf32> to vector<8x1xf32>
    %147 = vector.broadcast %146 : vector<8x1xf32> to vector<8x8xf32>
    %148 = arith.subf %144, %147 : vector<8x8xf32>
    %149 = math.exp %148 : vector<8x8xf32>
    %cst_46 = arith.constant dense<0.000000e+00> : vector<8xf32>
    %150 = vector.multi_reduction <add>, %149, %cst_46 [1] : vector<8x8xf32> to vector<8xf32>
    %151 = vector.shape_cast %150 : vector<8xf32> to vector<8x1xf32>
    %152 = tpu.reciprocal %151 {approx = true} : vector<8x1xf32> -> vector<8x1xf32>
    %153 = vector.broadcast %152 : vector<8x1xf32> to vector<8x8xf32>
    %154 = arith.mulf %149, %153 : vector<8x8xf32>
    %155 = arith.truncf %154 : vector<8x8xf32> to vector<8x8xbf16>
    %cst_47 = arith.constant dense<0.000000e+00> : vector<8x8xf32>
    %156 = tpu.matmul %155, %143, %cst_47 {dimension_numbers = #tpu.dot_dimension_numbers<[1], [1], [0], [0], [0, 0, 1, 0], [], []>} : vector<8x8xbf16>, vector<8x8xbf16>, vector<8x8xf32> -> vector<8x8xf32>
    %157 = vector.extract_strided_slice %39 {offsets = [24, 8], sizes = [8, 8], strides = [1, 1]} : vector<32x16xbf16> to vector<8x8xbf16>
    %158 = vector.extract_strided_slice %41 {offsets = [24, 8], sizes = [8, 8], strides = [1, 1]} : vector<32x16xbf16> to vector<8x8xbf16>
    %159 = vector.extract_strided_slice %43 {offsets = [24, 8], sizes = [8, 8], strides = [1, 1]} : vector<32x16xbf16> to vector<8x8xbf16>
    %cst_48 = arith.constant dense<0.000000e+00> : vector<8x8xf32>
    %160 = tpu.matmul %157, %158, %cst_48 {dimension_numbers = #tpu.dot_dimension_numbers<[0], [0], [1], [1], [0, 1, 1, 1], [], []>} : vector<8x8xbf16>, vector<8x8xbf16>, vector<8x8xf32> -> vector<8x8xf32>
    %cst_49 = arith.constant dense<0xFF800000> : vector<8xf32>
    %161 = vector.multi_reduction <maximumf>, %160, %cst_49 [1] : vector<8x8xf32> to vector<8xf32>
    %162 = vector.shape_cast %161 : vector<8xf32> to vector<8x1xf32>
    %163 = vector.broadcast %162 : vector<8x1xf32> to vector<8x8xf32>
    %164 = arith.subf %160, %163 : vector<8x8xf32>
    %165 = math.exp %164 : vector<8x8xf32>
    %cst_50 = arith.constant dense<0.000000e+00> : vector<8xf32>
    %166 = vector.multi_reduction <add>, %165, %cst_50 [1] : vector<8x8xf32> to vector<8xf32>
    %167 = vector.shape_cast %166 : vector<8xf32> to vector<8x1xf32>
    %168 = tpu.reciprocal %167 {approx = true} : vector<8x1xf32> -> vector<8x1xf32>
    %169 = vector.broadcast %168 : vector<8x1xf32> to vector<8x8xf32>
    %170 = arith.mulf %165, %169 : vector<8x8xf32>
    %171 = arith.truncf %170 : vector<8x8xf32> to vector<8x8xbf16>
    %cst_51 = arith.constant dense<0.000000e+00> : vector<8x8xf32>
    %172 = tpu.matmul %171, %159, %cst_51 {dimension_numbers = #tpu.dot_dimension_numbers<[1], [1], [0], [0], [0, 0, 1, 0], [], []>} : vector<8x8xbf16>, vector<8x8xbf16>, vector<8x8xf32> -> vector<8x8xf32>
    %173 = tpu.concatenate %124, %140, %156, %172 in 1 : vector<8x8xf32>, vector<8x8xf32>, vector<8x8xf32>, vector<8x8xf32> -> vector<8x32xf32>
    %174 = tpu.concatenate %108, %173 in 0 : vector<8x32xf32>, vector<8x32xf32> -> vector<16x32xf32>
    %175 = arith.truncf %174 : vector<16x32xf32> to vector<16x32xbf16>
    %cst_52 = arith.constant dense<0.000000e+00> : vector<16x32xf32>
    %176 = tpu.matmul %175, %3, %cst_52 {dimension_numbers = #tpu.dot_dimension_numbers<[1], [0], [0], [1], [0, 0, 1, 1], [], []>} : vector<16x32xbf16>, vector<32x32xbf16>, vector<16x32xf32> -> vector<16x32xf32>
    %177 = vector.broadcast %9 : vector<1x32xf32> to vector<16x32xf32>
    %178 = arith.addf %176, %177 : vector<16x32xf32>
    %179 = arith.addf %13, %178 : vector<16x32xf32>
    %cst_53 = arith.constant dense<0.000000e+00> : vector<16xf32>
    %180 = vector.multi_reduction <add>, %179, %cst_53 [1] : vector<16x32xf32> to vector<16xf32>
    %181 = vector.shape_cast %180 : vector<16xf32> to vector<16x1xf32>
    %cst_54 = arith.constant 3.200000e+01 : f32
    %182 = vector.broadcast %cst_54 : f32 to vector<16x1xf32>
    %183 = arith.divf %181, %182 : vector<16x1xf32>
    %184 = vector.broadcast %183 : vector<16x1xf32> to vector<16x32xf32>
    %185 = arith.subf %179, %184 : vector<16x32xf32>
    %186 = arith.mulf %185, %185 : vector<16x32xf32>
    %cst_55 = arith.constant dense<0.000000e+00> : vector<16xf32>
    %187 = vector.multi_reduction <add>, %186, %cst_55 [1] : vector<16x32xf32> to vector<16xf32>
    %188 = vector.shape_cast %187 : vector<16xf32> to vector<16x1xf32>
    %cst_56 = arith.constant 3.200000e+01 : f32
    %189 = vector.broadcast %cst_56 : f32 to vector<16x1xf32>
    %190 = arith.divf %188, %189 : vector<16x1xf32>
    %cst_57 = arith.constant 9.99999974E-6 : f32
    %191 = vector.broadcast %cst_57 : f32 to vector<16x1xf32>
    %192 = arith.addf %190, %191 : vector<16x1xf32>
    %193 = math.rsqrt %192 : vector<16x1xf32>
    %194 = vector.broadcast %193 : vector<16x1xf32> to vector<16x32xf32>
    %195 = arith.mulf %185, %194 : vector<16x32xf32>
    %196 = vector.broadcast %10 : vector<1x32xf32> to vector<16x32xf32>
    %197 = arith.mulf %195, %196 : vector<16x32xf32>
    %198 = vector.broadcast %11 : vector<1x32xf32> to vector<16x32xf32>
    %199 = arith.addf %197, %198 : vector<16x32xf32>
    %200 = arith.truncf %199 : vector<16x32xf32> to vector<16x32xbf16>
    %cst_58 = arith.constant dense<0.000000e+00> : vector<16x64xf32>
    %201 = tpu.matmul %200, %4, %cst_58 {dimension_numbers = #tpu.dot_dimension_numbers<[1], [0], [0], [1], [0, 0, 1, 1], [], []>} : vector<16x32xbf16>, vector<32x64xbf16>, vector<16x64xf32> -> vector<16x64xf32>
    %202 = vector.broadcast %5 : vector<1x64xf32> to vector<16x64xf32>
    %203 = arith.addf %201, %202 : vector<16x64xf32>
    %cst_59 = arith.constant 5.000000e-01 : f32
    %204 = vector.broadcast %cst_59 : f32 to vector<16x64xf32>
    %205 = arith.mulf %204, %203 : vector<16x64xf32>
    %cst_60 = arith.constant 4.471500e-02 : f32
    %206 = vector.broadcast %cst_60 : f32 to vector<16x64xf32>
    %207 = arith.mulf %206, %203 : vector<16x64xf32>
    %208 = arith.mulf %207, %203 : vector<16x64xf32>
    %209 = arith.mulf %208, %203 : vector<16x64xf32>
    %210 = arith.addf %203, %209 : vector<16x64xf32>
    %cst_61 = arith.constant 0.797884583 : f32
    %211 = vector.broadcast %cst_61 : f32 to vector<16x64xf32>
    %212 = arith.mulf %211, %210 : vector<16x64xf32>
    %213 = math.tanh %212 : vector<16x64xf32>
    %cst_62 = arith.constant 1.000000e+00 : f32
    %214 = vector.broadcast %cst_62 : f32 to vector<16x64xf32>
    %215 = arith.addf %214, %213 : vector<16x64xf32>
    %216 = arith.mulf %205, %215 : vector<16x64xf32>
    %217 = arith.truncf %216 : vector<16x64xf32> to vector<16x64xbf16>
    %cst_63 = arith.constant dense<0.000000e+00> : vector<16x32xf32>
    %218 = tpu.matmul %217, %6, %cst_63 {dimension_numbers = #tpu.dot_dimension_numbers<[1], [0], [0], [1], [0, 0, 1, 1], [], []>} : vector<16x64xbf16>, vector<64x32xbf16>, vector<16x32xf32> -> vector<16x32xf32>
    %219 = vector.broadcast %12 : vector<1x32xf32> to vector<16x32xf32>
    %220 = arith.addf %218, %219 : vector<16x32xf32>
    %221 = arith.addf %179, %220 : vector<16x32xf32>
    %222 = vector.shape_cast %221 : vector<16x32xf32> to vector<2x8x32xf32>
    %c0_64 = arith.constant 0 : index
    %c0_65 = arith.constant 0 : index
    %c0_66 = arith.constant 0 : index
    %223 = vector.load %arg8[%c0_64, %c0_65, %c0_66] : memref<2x8x32xf32, #tpu.memory_space<vmem>>, vector<2x8x32xf32>
    tpu.vector_store %arg8[%c0_64, %c0_65, %c0_66], %222 {strides = array<i32>} : memref<2x8x32xf32, #tpu.memory_space<vmem>>, vector<2x8x32xf32>,
    return
  }
  func.func @transform_0(%arg0: i32) -> (i32, i32, i32) {
    %c0_i32 = arith.constant 0 : i32
    %c0_i32_0 = arith.constant 0 : i32
    %c0_i32_1 = arith.constant 0 : i32
    return %arg0, %c0_i32, %c0_i32_0 : i32, i32, i32
  }
  func.func @transform_1(%arg0: i32) -> (i32, i32) {
    %c0_i32 = arith.constant 0 : i32
    %c0_i32_0 = arith.constant 0 : i32
    %c0_i32_1 = arith.constant 0 : i32
    return %c0_i32, %c0_i32_0 : i32, i32
  }
  func.func @transform_2(%arg0: i32) -> (i32, i32) {
    %c0_i32 = arith.constant 0 : i32
    %c0_i32_0 = arith.constant 0 : i32
    %c0_i32_1 = arith.constant 0 : i32
    return %c0_i32, %c0_i32_0 : i32, i32
  }
  func.func @transform_3(%arg0: i32) -> (i32, i32) {
    %c0_i32 = arith.constant 0 : i32
    %c0_i32_0 = arith.constant 0 : i32
    %c0_i32_1 = arith.constant 0 : i32
    return %c0_i32, %c0_i32_0 : i32, i32
  }
  func.func @transform_4(%arg0: i32) -> (i32, i32) {
    %c0_i32 = arith.constant 0 : i32
    %c0_i32_0 = arith.constant 0 : i32
    %c0_i32_1 = arith.constant 0 : i32
    return %c0_i32, %c0_i32_0 : i32, i32
  }
  func.func @transform_5(%arg0: i32) -> (i32, i32) {
    %c0_i32 = arith.constant 0 : i32
    %c0_i32_0 = arith.constant 0 : i32
    %c0_i32_1 = arith.constant 0 : i32
    return %c0_i32, %c0_i32_0 : i32, i32
  }
  func.func @transform_6(%arg0: i32) -> (i32, i32) {
    %c0_i32 = arith.constant 0 : i32
    %c0_i32_0 = arith.constant 0 : i32
    %c0_i32_1 = arith.constant 0 : i32
    return %c0_i32, %c0_i32_0 : i32, i32
  }
  func.func @transform_7(%arg0: i32) -> (i32, i32, i32) {
    %c0_i32 = arith.constant 0 : i32
    %c0_i32_0 = arith.constant 0 : i32
    %c0_i32_1 = arith.constant 0 : i32
    return %arg0, %c0_i32, %c0_i32_0 : i32, i32, i32
  }
}

module attributes {stable_mosaic.version = 11 : i64} {
  func.func @_layer_kernel(%arg0: i32, %arg1: memref<2x8x32xf32, #tpu.memory_space<vmem>>, %arg2: memref<6x32xf32, #tpu.memory_space<vmem>>, %arg3: memref<96x32xbf16, #tpu.memory_space<vmem>>, %arg4: memref<32x32xbf16, #tpu.memory_space<vmem>>, %arg5: memref<32x64xbf16, #tpu.memory_space<vmem>>, %arg6: memref<1x64xf32, #tpu.memory_space<vmem>>, %arg7: memref<64x32xbf16, #tpu.memory_space<vmem>>, %arg8: memref<2x8x32xf32, #tpu.memory_space<vmem>>) attributes {dimension_semantics = [#tpu.dimension_semantics<parallel>], iteration_bounds = array<i64: 1>, scalar_prefetch = 0 : i64, scratch_operands = 0 : i64, tpu.core_type = #tpu.core_type<tc>, window_params = [{transform_indices = @transform_0, window_bounds = array<i64: 2, 8, 32>}, {pipeline_mode = #tpu.pipeline_mode<synchronous>, transform_indices = @transform_1, window_bounds = array<i64: 6, 32>}, {pipeline_mode = #tpu.pipeline_mode<synchronous>, transform_indices = @transform_2, window_bounds = array<i64: 96, 32>}, {pipeline_mode = #tpu.pipeline_mode<synchronous>, transform_indices = @transform_3, window_bounds = array<i64: 32, 32>}, {pipeline_mode = #tpu.pipeline_mode<synchronous>, transform_indices = @transform_4, window_bounds = array<i64: 32, 64>}, {pipeline_mode = #tpu.pipeline_mode<synchronous>, transform_indices = @transform_5, window_bounds = array<i64: 1, 64>}, {pipeline_mode = #tpu.pipeline_mode<synchronous>, transform_indices = @transform_6, window_bounds = array<i64: 64, 32>}, {transform_indices = @transform_7, window_bounds = array<i64: 2, 8, 32>}]} {
    %c0 = arith.constant 0 : index
    %c0_0 = arith.constant 0 : index
    %c0_1 = arith.constant 0 : index
    %0 = vector.load %arg1[%c0, %c0_0, %c0_1] : memref<2x8x32xf32, #tpu.memory_space<vmem>>, vector<2x8x32xf32>
    %c0_2 = arith.constant 0 : index
    %c0_3 = arith.constant 0 : index
    %1 = vector.load %arg2[%c0_2, %c0_3] : memref<6x32xf32, #tpu.memory_space<vmem>>, vector<6x32xf32>
    %c0_4 = arith.constant 0 : index
    %c0_5 = arith.constant 0 : index
    %2 = vector.load %arg3[%c0_4, %c0_5] : memref<96x32xbf16, #tpu.memory_space<vmem>>, vector<96x32xbf16>
    %c0_6 = arith.constant 0 : index
    %c0_7 = arith.constant 0 : index
    %3 = vector.load %arg4[%c0_6, %c0_7] : memref<32x32xbf16, #tpu.memory_space<vmem>>, vector<32x32xbf16>
    %c0_8 = arith.constant 0 : index
    %c0_9 = arith.constant 0 : index
    %4 = vector.load %arg5[%c0_8, %c0_9] : memref<32x64xbf16, #tpu.memory_space<vmem>>, vector<32x64xbf16>
    %c0_10 = arith.constant 0 : index
    %c0_11 = arith.constant 0 : index
    %5 = vector.load %arg6[%c0_10, %c0_11] : memref<1x64xf32, #tpu.memory_space<vmem>>, vector<1x64xf32>
    %c0_12 = arith.constant 0 : index
    %c0_13 = arith.constant 0 : index
    %6 = vector.load %arg7[%c0_12, %c0_13] : memref<64x32xbf16, #tpu.memory_space<vmem>>, vector<64x32xbf16>
    %7 = vector.extract_strided_slice %1 {offsets = [0, 0], sizes = [1, 32], strides = [1, 1]} : vector<6x32xf32> to vector<1x32xf32>
    %8 = vector.extract_strided_slice %1 {offsets = [1, 0], sizes = [1, 32], strides = [1, 1]} : vector<6x32xf32> to vector<1x32xf32>
    %9 = vector.extract_strided_slice %1 {offsets = [2, 0], sizes = [1, 32], strides = [1, 1]} : vector<6x32xf32> to vector<1x32xf32>
    %10 = vector.extract_strided_slice %1 {offsets = [3, 0], sizes = [1, 32], strides = [1, 1]} : vector<6x32xf32> to vector<1x32xf32>
    %11 = vector.extract_strided_slice %1 {offsets = [4, 0], sizes = [1, 32], strides = [1, 1]} : vector<6x32xf32> to vector<1x32xf32>
    %12 = vector.extract_strided_slice %1 {offsets = [5, 0], sizes = [1, 32], strides = [1, 1]} : vector<6x32xf32> to vector<1x32xf32>
    %13 = vector.shape_cast %0 : vector<2x8x32xf32> to vector<16x32xf32>
    %cst = arith.constant dense<0.000000e+00> : vector<16xf32>
    %14 = vector.multi_reduction <add>, %13, %cst [1] : vector<16x32xf32> to vector<16xf32>
    %15 = vector.shape_cast %14 : vector<16xf32> to vector<16x1xf32>
    %cst_14 = arith.constant 3.200000e+01 : f32
    %16 = vector.broadcast %cst_14 : f32 to vector<16x1xf32>
    %17 = arith.divf %15, %16 : vector<16x1xf32>
    %18 = vector.broadcast %17 : vector<16x1xf32> to vector<16x32xf32>
    %19 = arith.subf %13, %18 : vector<16x32xf32>
    %20 = arith.mulf %19, %19 : vector<16x32xf32>
    %cst_15 = arith.constant dense<0.000000e+00> : vector<16xf32>
    %21 = vector.multi_reduction <add>, %20, %cst_15 [1] : vector<16x32xf32> to vector<16xf32>
    %22 = vector.shape_cast %21 : vector<16xf32> to vector<16x1xf32>
    %cst_16 = arith.constant 3.200000e+01 : f32
    %23 = vector.broadcast %cst_16 : f32 to vector<16x1xf32>
    %24 = arith.divf %22, %23 : vector<16x1xf32>
    %cst_17 = arith.constant 9.99999974E-6 : f32
    %25 = vector.broadcast %cst_17 : f32 to vector<16x1xf32>
    %26 = arith.addf %24, %25 : vector<16x1xf32>
    %27 = math.rsqrt %26 : vector<16x1xf32>
    %28 = vector.broadcast %27 : vector<16x1xf32> to vector<16x32xf32>
    %29 = arith.mulf %19, %28 : vector<16x32xf32>
    %30 = vector.broadcast %7 : vector<1x32xf32> to vector<16x32xf32>
    %31 = arith.mulf %29, %30 : vector<16x32xf32>
    %32 = vector.broadcast %8 : vector<1x32xf32> to vector<16x32xf32>
    %33 = arith.addf %31, %32 : vector<16x32xf32>
    %34 = arith.truncf %33 : vector<16x32xf32> to vector<16x32xbf16>
    %cst_18 = arith.constant dense<0.000000e+00> : vector<96x16xf32>
    %35 = tpu.matmul %2, %34, %cst_18 {dimension_numbers = #tpu.dot_dimension_numbers<[1], [1], [0], [0], [0, 0, 1, 0], [], []>} : vector<96x32xbf16>, vector<16x32xbf16>, vector<96x16xf32> -> vector<96x16xf32>
    %36 = vector.extract_strided_slice %35 {offsets = [0, 0], sizes = [32, 16], strides = [1, 1]} : vector<96x16xf32> to vector<32x16xf32>
    %cst_19 = arith.constant 0.353553385 : f32
    %37 = vector.broadcast %cst_19 : f32 to vector<32x16xf32>
    %38 = arith.mulf %36, %37 : vector<32x16xf32>
    %39 = arith.truncf %38 : vector<32x16xf32> to vector<32x16xbf16>
    %40 = vector.extract_strided_slice %35 {offsets = [32, 0], sizes = [32, 16], strides = [1, 1]} : vector<96x16xf32> to vector<32x16xf32>
    %41 = arith.truncf %40 : vector<32x16xf32> to vector<32x16xbf16>
    %42 = vector.extract_strided_slice %35 {offsets = [64, 0], sizes = [32, 16], strides = [1, 1]} : vector<96x16xf32> to vector<32x16xf32>
    %43 = arith.truncf %42 : vector<32x16xf32> to vector<32x16xbf16>
    %44 = vector.extract_strided_slice %39 {offsets = [0, 0], sizes = [8, 8], strides = [1, 1]} : vector<32x16xbf16> to vector<8x8xbf16>
    %45 = vector.extract_strided_slice %41 {offsets = [0, 0], sizes = [8, 8], strides = [1, 1]} : vector<32x16xbf16> to vector<8x8xbf16>
    %46 = vector.extract_strided_slice %43 {offsets = [0, 0], sizes = [8, 8], strides = [1, 1]} : vector<32x16xbf16> to vector<8x8xbf16>
    %cst_20 = arith.constant dense<0.000000e+00> : vector<8x8xf32>
    %47 = tpu.matmul %44, %45, %cst_20 {dimension_numbers = #tpu.dot_dimension_numbers<[0], [0], [1], [1], [0, 1, 1, 1], [], []>} : vector<8x8xbf16>, vector<8x8xbf16>, vector<8x8xf32> -> vector<8x8xf32>
    %cst_21 = arith.constant dense<0xFF800000> : vector<8xf32>
    %48 = vector.multi_reduction <maximumf>, %47, %cst_21 [1] : vector<8x8xf32> to vector<8xf32>
    %49 = vector.shape_cast %48 : vector<8xf32> to vector<8x1xf32>
    %50 = vector.broadcast %49 : vector<8x1xf32> to vector<8x8xf32>
    %51 = arith.subf %47, %50 : vector<8x8xf32>
    %52 = math.exp %51 : vector<8x8xf32>
    %cst_22 = arith.constant dense<0.000000e+00> : vector<8xf32>
    %53 = vector.multi_reduction <add>, %52, %cst_22 [1] : vector<8x8xf32> to vector<8xf32>
    %54 = vector.shape_cast %53 : vector<8xf32> to vector<8x1xf32>
    %55 = tpu.reciprocal %54 {approx = true} : vector<8x1xf32> -> vector<8x1xf32>
    %56 = vector.broadcast %55 : vector<8x1xf32> to vector<8x8xf32>
    %57 = arith.mulf %52, %56 : vector<8x8xf32>
    %58 = arith.truncf %57 : vector<8x8xf32> to vector<8x8xbf16>
    %cst_23 = arith.constant dense<0.000000e+00> : vector<8x8xf32>
    %59 = tpu.matmul %58, %46, %cst_23 {dimension_numbers = #tpu.dot_dimension_numbers<[1], [1], [0], [0], [0, 0, 1, 0], [], []>} : vector<8x8xbf16>, vector<8x8xbf16>, vector<8x8xf32> -> vector<8x8xf32>
    %60 = vector.extract_strided_slice %39 {offsets = [8, 0], sizes = [8, 8], strides = [1, 1]} : vector<32x16xbf16> to vector<8x8xbf16>
    %61 = vector.extract_strided_slice %41 {offsets = [8, 0], sizes = [8, 8], strides = [1, 1]} : vector<32x16xbf16> to vector<8x8xbf16>
    %62 = vector.extract_strided_slice %43 {offsets = [8, 0], sizes = [8, 8], strides = [1, 1]} : vector<32x16xbf16> to vector<8x8xbf16>
    %cst_24 = arith.constant dense<0.000000e+00> : vector<8x8xf32>
    %63 = tpu.matmul %60, %61, %cst_24 {dimension_numbers = #tpu.dot_dimension_numbers<[0], [0], [1], [1], [0, 1, 1, 1], [], []>} : vector<8x8xbf16>, vector<8x8xbf16>, vector<8x8xf32> -> vector<8x8xf32>
    %cst_25 = arith.constant dense<0xFF800000> : vector<8xf32>
    %64 = vector.multi_reduction <maximumf>, %63, %cst_25 [1] : vector<8x8xf32> to vector<8xf32>
    %65 = vector.shape_cast %64 : vector<8xf32> to vector<8x1xf32>
    %66 = vector.broadcast %65 : vector<8x1xf32> to vector<8x8xf32>
    %67 = arith.subf %63, %66 : vector<8x8xf32>
    %68 = math.exp %67 : vector<8x8xf32>
    %cst_26 = arith.constant dense<0.000000e+00> : vector<8xf32>
    %69 = vector.multi_reduction <add>, %68, %cst_26 [1] : vector<8x8xf32> to vector<8xf32>
    %70 = vector.shape_cast %69 : vector<8xf32> to vector<8x1xf32>
    %71 = tpu.reciprocal %70 {approx = true} : vector<8x1xf32> -> vector<8x1xf32>
    %72 = vector.broadcast %71 : vector<8x1xf32> to vector<8x8xf32>
    %73 = arith.mulf %68, %72 : vector<8x8xf32>
    %74 = arith.truncf %73 : vector<8x8xf32> to vector<8x8xbf16>
    %cst_27 = arith.constant dense<0.000000e+00> : vector<8x8xf32>
    %75 = tpu.matmul %74, %62, %cst_27 {dimension_numbers = #tpu.dot_dimension_numbers<[1], [1], [0], [0], [0, 0, 1, 0], [], []>} : vector<8x8xbf16>, vector<8x8xbf16>, vector<8x8xf32> -> vector<8x8xf32>
    %76 = vector.extract_strided_slice %39 {offsets = [16, 0], sizes = [8, 8], strides = [1, 1]} : vector<32x16xbf16> to vector<8x8xbf16>
    %77 = vector.extract_strided_slice %41 {offsets = [16, 0], sizes = [8, 8], strides = [1, 1]} : vector<32x16xbf16> to vector<8x8xbf16>
    %78 = vector.extract_strided_slice %43 {offsets = [16, 0], sizes = [8, 8], strides = [1, 1]} : vector<32x16xbf16> to vector<8x8xbf16>
    %cst_28 = arith.constant dense<0.000000e+00> : vector<8x8xf32>
    %79 = tpu.matmul %76, %77, %cst_28 {dimension_numbers = #tpu.dot_dimension_numbers<[0], [0], [1], [1], [0, 1, 1, 1], [], []>} : vector<8x8xbf16>, vector<8x8xbf16>, vector<8x8xf32> -> vector<8x8xf32>
    %cst_29 = arith.constant dense<0xFF800000> : vector<8xf32>
    %80 = vector.multi_reduction <maximumf>, %79, %cst_29 [1] : vector<8x8xf32> to vector<8xf32>
    %81 = vector.shape_cast %80 : vector<8xf32> to vector<8x1xf32>
    %82 = vector.broadcast %81 : vector<8x1xf32> to vector<8x8xf32>
    %83 = arith.subf %79, %82 : vector<8x8xf32>
    %84 = math.exp %83 : vector<8x8xf32>
    %cst_30 = arith.constant dense<0.000000e+00> : vector<8xf32>
    %85 = vector.multi_reduction <add>, %84, %cst_30 [1] : vector<8x8xf32> to vector<8xf32>
    %86 = vector.shape_cast %85 : vector<8xf32> to vector<8x1xf32>
    %87 = tpu.reciprocal %86 {approx = true} : vector<8x1xf32> -> vector<8x1xf32>
    %88 = vector.broadcast %87 : vector<8x1xf32> to vector<8x8xf32>
    %89 = arith.mulf %84, %88 : vector<8x8xf32>
    %90 = arith.truncf %89 : vector<8x8xf32> to vector<8x8xbf16>
    %cst_31 = arith.constant dense<0.000000e+00> : vector<8x8xf32>
    %91 = tpu.matmul %90, %78, %cst_31 {dimension_numbers = #tpu.dot_dimension_numbers<[1], [1], [0], [0], [0, 0, 1, 0], [], []>} : vector<8x8xbf16>, vector<8x8xbf16>, vector<8x8xf32> -> vector<8x8xf32>
    %92 = vector.extract_strided_slice %39 {offsets = [24, 0], sizes = [8, 8], strides = [1, 1]} : vector<32x16xbf16> to vector<8x8xbf16>
    %93 = vector.extract_strided_slice %41 {offsets = [24, 0], sizes = [8, 8], strides = [1, 1]} : vector<32x16xbf16> to vector<8x8xbf16>
    %94 = vector.extract_strided_slice %43 {offsets = [24, 0], sizes = [8, 8], strides = [1, 1]} : vector<32x16xbf16> to vector<8x8xbf16>
    %cst_32 = arith.constant dense<0.000000e+00> : vector<8x8xf32>
    %95 = tpu.matmul %92, %93, %cst_32 {dimension_numbers = #tpu.dot_dimension_numbers<[0], [0], [1], [1], [0, 1, 1, 1], [], []>} : vector<8x8xbf16>, vector<8x8xbf16>, vector<8x8xf32> -> vector<8x8xf32>
    %cst_33 = arith.constant dense<0xFF800000> : vector<8xf32>
    %96 = vector.multi_reduction <maximumf>, %95, %cst_33 [1] : vector<8x8xf32> to vector<8xf32>
    %97 = vector.shape_cast %96 : vector<8xf32> to vector<8x1xf32>
    %98 = vector.broadcast %97 : vector<8x1xf32> to vector<8x8xf32>
    %99 = arith.subf %95, %98 : vector<8x8xf32>
    %100 = math.exp %99 : vector<8x8xf32>
    %cst_34 = arith.constant dense<0.000000e+00> : vector<8xf32>
    %101 = vector.multi_reduction <add>, %100, %cst_34 [1] : vector<8x8xf32> to vector<8xf32>
    %102 = vector.shape_cast %101 : vector<8xf32> to vector<8x1xf32>
    %103 = tpu.reciprocal %102 {approx = true} : vector<8x1xf32> -> vector<8x1xf32>
    %104 = vector.broadcast %103 : vector<8x1xf32> to vector<8x8xf32>
    %105 = arith.mulf %100, %104 : vector<8x8xf32>
    %106 = arith.truncf %105 : vector<8x8xf32> to vector<8x8xbf16>
    %cst_35 = arith.constant dense<0.000000e+00> : vector<8x8xf32>
    %107 = tpu.matmul %106, %94, %cst_35 {dimension_numbers = #tpu.dot_dimension_numbers<[1], [1], [0], [0], [0, 0, 1, 0], [], []>} : vector<8x8xbf16>, vector<8x8xbf16>, vector<8x8xf32> -> vector<8x8xf32>
    %108 = tpu.concatenate %59, %75, %91, %107 in 1 : vector<8x8xf32>, vector<8x8xf32>, vector<8x8xf32>, vector<8x8xf32> -> vector<8x32xf32>
    %109 = vector.extract_strided_slice %39 {offsets = [0, 8], sizes = [8, 8], strides = [1, 1]} : vector<32x16xbf16> to vector<8x8xbf16>
    %110 = vector.extract_strided_slice %41 {offsets = [0, 8], sizes = [8, 8], strides = [1, 1]} : vector<32x16xbf16> to vector<8x8xbf16>
    %111 = vector.extract_strided_slice %43 {offsets = [0, 8], sizes = [8, 8], strides = [1, 1]} : vector<32x16xbf16> to vector<8x8xbf16>
    %cst_36 = arith.constant dense<0.000000e+00> : vector<8x8xf32>
    %112 = tpu.matmul %109, %110, %cst_36 {dimension_numbers = #tpu.dot_dimension_numbers<[0], [0], [1], [1], [0, 1, 1, 1], [], []>} : vector<8x8xbf16>, vector<8x8xbf16>, vector<8x8xf32> -> vector<8x8xf32>
    %cst_37 = arith.constant dense<0xFF800000> : vector<8xf32>
    %113 = vector.multi_reduction <maximumf>, %112, %cst_37 [1] : vector<8x8xf32> to vector<8xf32>
    %114 = vector.shape_cast %113 : vector<8xf32> to vector<8x1xf32>
    %115 = vector.broadcast %114 : vector<8x1xf32> to vector<8x8xf32>
    %116 = arith.subf %112, %115 : vector<8x8xf32>
    %117 = math.exp %116 : vector<8x8xf32>
    %cst_38 = arith.constant dense<0.000000e+00> : vector<8xf32>
    %118 = vector.multi_reduction <add>, %117, %cst_38 [1] : vector<8x8xf32> to vector<8xf32>
    %119 = vector.shape_cast %118 : vector<8xf32> to vector<8x1xf32>
    %120 = tpu.reciprocal %119 {approx = true} : vector<8x1xf32> -> vector<8x1xf32>
    %121 = vector.broadcast %120 : vector<8x1xf32> to vector<8x8xf32>
    %122 = arith.mulf %117, %121 : vector<8x8xf32>
    %123 = arith.truncf %122 : vector<8x8xf32> to vector<8x8xbf16>
    %cst_39 = arith.constant dense<0.000000e+00> : vector<8x8xf32>
    %124 = tpu.matmul %123, %111, %cst_39 {dimension_numbers = #tpu.dot_dimension_numbers<[1], [1], [0], [0], [0, 0, 1, 0], [], []>} : vector<8x8xbf16>, vector<8x8xbf16>, vector<8x8xf32> -> vector<8x8xf32>
    %125 = vector.extract_strided_slice %39 {offsets = [8, 8], sizes = [8, 8], strides = [1, 1]} : vector<32x16xbf16> to vector<8x8xbf16>
    %126 = vector.extract_strided_slice %41 {offsets = [8, 8], sizes = [8, 8], strides = [1, 1]} : vector<32x16xbf16> to vector<8x8xbf16>
    %127 = vector.extract_strided_slice %43 {offsets = [8, 8], sizes = [8, 8], strides = [1, 1]} : vector<32x16xbf16> to vector<8x8xbf16>
    %cst_40 = arith.constant dense<0.000000e+00> : vector<8x8xf32>
    %128 = tpu.matmul %125, %126, %cst_40 {dimension_numbers = #tpu.dot_dimension_numbers<[0], [0], [1], [1], [0, 1, 1, 1], [], []>} : vector<8x8xbf16>, vector<8x8xbf16>, vector<8x8xf32> -> vector<8x8xf32>
    %cst_41 = arith.constant dense<0xFF800000> : vector<8xf32>
    %129 = vector.multi_reduction <maximumf>, %128, %cst_41 [1] : vector<8x8xf32> to vector<8xf32>
    %130 = vector.shape_cast %129 : vector<8xf32> to vector<8x1xf32>
    %131 = vector.broadcast %130 : vector<8x1xf32> to vector<8x8xf32>
    %132 = arith.subf %128, %131 : vector<8x8xf32>
    %133 = math.exp %132 : vector<8x8xf32>
    %cst_42 = arith.constant dense<0.000000e+00> : vector<8xf32>
    %134 = vector.multi_reduction <add>, %133, %cst_42 [1] : vector<8x8xf32> to vector<8xf32>
    %135 = vector.shape_cast %134 : vector<8xf32> to vector<8x1xf32>
    %136 = tpu.reciprocal %135 {approx = true} : vector<8x1xf32> -> vector<8x1xf32>
    %137 = vector.broadcast %136 : vector<8x1xf32> to vector<8x8xf32>
    %138 = arith.mulf %133, %137 : vector<8x8xf32>
    %139 = arith.truncf %138 : vector<8x8xf32> to vector<8x8xbf16>
    %cst_43 = arith.constant dense<0.000000e+00> : vector<8x8xf32>
    %140 = tpu.matmul %139, %127, %cst_43 {dimension_numbers = #tpu.dot_dimension_numbers<[1], [1], [0], [0], [0, 0, 1, 0], [], []>} : vector<8x8xbf16>, vector<8x8xbf16>, vector<8x8xf32> -> vector<8x8xf32>
    %141 = vector.extract_strided_slice %39 {offsets = [16, 8], sizes = [8, 8], strides = [1, 1]} : vector<32x16xbf16> to vector<8x8xbf16>
    %142 = vector.extract_strided_slice %41 {offsets = [16, 8], sizes = [8, 8], strides = [1, 1]} : vector<32x16xbf16> to vector<8x8xbf16>
    %143 = vector.extract_strided_slice %43 {offsets = [16, 8], sizes = [8, 8], strides = [1, 1]} : vector<32x16xbf16> to vector<8x8xbf16>
    %cst_44 = arith.constant dense<0.000000e+00> : vector<8x8xf32>
    %144 = tpu.matmul %141, %142, %cst_44 {dimension_numbers = #tpu.dot_dimension_numbers<[0], [0], [1], [1], [0, 1, 1, 1], [], []>} : vector<8x8xbf16>, vector<8x8xbf16>, vector<8x8xf32> -> vector<8x8xf32>
    %cst_45 = arith.constant dense<0xFF800000> : vector<8xf32>
    %145 = vector.multi_reduction <maximumf>, %144, %cst_45 [1] : vector<8x8xf32> to vector<8xf32>
    %146 = vector.shape_cast %145 : vector<8xf32> to vector<8x1xf32>
    %147 = vector.broadcast %146 : vector<8x1xf32> to vector<8x8xf32>
    %148 = arith.subf %144, %147 : vector<8x8xf32>
    %149 = math.exp %148 : vector<8x8xf32>
    %cst_46 = arith.constant dense<0.000000e+00> : vector<8xf32>
    %150 = vector.multi_reduction <add>, %149, %cst_46 [1] : vector<8x8xf32> to vector<8xf32>
    %151 = vector.shape_cast %150 : vector<8xf32> to vector<8x1xf32>
    %152 = tpu.reciprocal %151 {approx = true} : vector<8x1xf32> -> vector<8x1xf32>
    %153 = vector.broadcast %152 : vector<8x1xf32> to vector<8x8xf32>
    %154 = arith.mulf %149, %153 : vector<8x8xf32>
    %155 = arith.truncf %154 : vector<8x8xf32> to vector<8x8xbf16>
    %cst_47 = arith.constant dense<0.000000e+00> : vector<8x8xf32>
    %156 = tpu.matmul %155, %143, %cst_47 {dimension_numbers = #tpu.dot_dimension_numbers<[1], [1], [0], [0], [0, 0, 1, 0], [], []>} : vector<8x8xbf16>, vector<8x8xbf16>, vector<8x8xf32> -> vector<8x8xf32>
    %157 = vector.extract_strided_slice %39 {offsets = [24, 8], sizes = [8, 8], strides = [1, 1]} : vector<32x16xbf16> to vector<8x8xbf16>
    %158 = vector.extract_strided_slice %41 {offsets = [24, 8], sizes = [8, 8], strides = [1, 1]} : vector<32x16xbf16> to vector<8x8xbf16>
    %159 = vector.extract_strided_slice %43 {offsets = [24, 8], sizes = [8, 8], strides = [1, 1]} : vector<32x16xbf16> to vector<8x8xbf16>
    %cst_48 = arith.constant dense<0.000000e+00> : vector<8x8xf32>
    %160 = tpu.matmul %157, %158, %cst_48 {dimension_numbers = #tpu.dot_dimension_numbers<[0], [0], [1], [1], [0, 1, 1, 1], [], []>} : vector<8x8xbf16>, vector<8x8xbf16>, vector<8x8xf32> -> vector<8x8xf32>
    %cst_49 = arith.constant dense<0xFF800000> : vector<8xf32>
    %161 = vector.multi_reduction <maximumf>, %160, %cst_49 [1] : vector<8x8xf32> to vector<8xf32>
    %162 = vector.shape_cast %161 : vector<8xf32> to vector<8x1xf32>
    %163 = vector.broadcast %162 : vector<8x1xf32> to vector<8x8xf32>
    %164 = arith.subf %160, %163 : vector<8x8xf32>
    %165 = math.exp %164 : vector<8x8xf32>
    %cst_50 = arith.constant dense<0.000000e+00> : vector<8xf32>
    %166 = vector.multi_reduction <add>, %165, %cst_50 [1] : vector<8x8xf32> to vector<8xf32>
    %167 = vector.shape_cast %166 : vector<8xf32> to vector<8x1xf32>
    %168 = tpu.reciprocal %167 {approx = true} : vector<8x1xf32> -> vector<8x1xf32>
    %169 = vector.broadcast %168 : vector<8x1xf32> to vector<8x8xf32>
    %170 = arith.mulf %165, %169 : vector<8x8xf32>
    %171 = arith.truncf %170 : vector<8x8xf32> to vector<8x8xbf16>
    %cst_51 = arith.constant dense<0.000000e+00> : vector<8x8xf32>
    %172 = tpu.matmul %171, %159, %cst_51 {dimension_numbers = #tpu.dot_dimension_numbers<[1], [1], [0], [0], [0, 0, 1, 0], [], []>} : vector<8x8xbf16>, vector<8x8xbf16>, vector<8x8xf32> -> vector<8x8xf32>
    %173 = tpu.concatenate %124, %140, %156, %172 in 1 : vector<8x8xf32>, vector<8x8xf32>, vector<8x8xf32>, vector<8x8xf32> -> vector<8x32xf32>
    %174 = tpu.concatenate %108, %173 in 0 : vector<8x32xf32>, vector<8x32xf32> -> vector<16x32xf32>
    %175 = arith.truncf %174 : vector<16x32xf32> to vector<16x32xbf16>
    %cst_52 = arith.constant dense<0.000000e+00> : vector<16x32xf32>
    %176 = tpu.matmul %175, %3, %cst_52 {dimension_numbers = #tpu.dot_dimension_numbers<[1], [0], [0], [1], [0, 0, 1, 1], [], []>} : vector<16x32xbf16>, vector<32x32xbf16>, vector<16x32xf32> -> vector<16x32xf32>
    %177 = vector.broadcast %9 : vector<1x32xf32> to vector<16x32xf32>
    %178 = arith.addf %176, %177 : vector<16x32xf32>
    %179 = arith.addf %13, %178 : vector<16x32xf32>
    %cst_53 = arith.constant dense<0.000000e+00> : vector<16xf32>
    %180 = vector.multi_reduction <add>, %179, %cst_53 [1] : vector<16x32xf32> to vector<16xf32>
    %181 = vector.shape_cast %180 : vector<16xf32> to vector<16x1xf32>
    %cst_54 = arith.constant 3.200000e+01 : f32
    %182 = vector.broadcast %cst_54 : f32 to vector<16x1xf32>
    %183 = arith.divf %181, %182 : vector<16x1xf32>
    %184 = vector.broadcast %183 : vector<16x1xf32> to vector<16x32xf32>
    %185 = arith.subf %179, %184 : vector<16x32xf32>
    %186 = arith.mulf %185, %185 : vector<16x32xf32>
    %cst_55 = arith.constant dense<0.000000e+00> : vector<16xf32>
    %187 = vector.multi_reduction <add>, %186, %cst_55 [1] : vector<16x32xf32> to vector<16xf32>
    %188 = vector.shape_cast %187 : vector<16xf32> to vector<16x1xf32>
    %cst_56 = arith.constant 3.200000e+01 : f32
    %189 = vector.broadcast %cst_56 : f32 to vector<16x1xf32>
    %190 = arith.divf %188, %189 : vector<16x1xf32>
    %cst_57 = arith.constant 9.99999974E-6 : f32
    %191 = vector.broadcast %cst_57 : f32 to vector<16x1xf32>
    %192 = arith.addf %190, %191 : vector<16x1xf32>
    %193 = math.rsqrt %192 : vector<16x1xf32>
    %194 = vector.broadcast %193 : vector<16x1xf32> to vector<16x32xf32>
    %195 = arith.mulf %185, %194 : vector<16x32xf32>
    %196 = vector.broadcast %10 : vector<1x32xf32> to vector<16x32xf32>
    %197 = arith.mulf %195, %196 : vector<16x32xf32>
    %198 = vector.broadcast %11 : vector<1x32xf32> to vector<16x32xf32>
    %199 = arith.addf %197, %198 : vector<16x32xf32>
    %200 = arith.truncf %199 : vector<16x32xf32> to vector<16x32xbf16>
    %cst_58 = arith.constant dense<0.000000e+00> : vector<16x64xf32>
    %201 = tpu.matmul %200, %4, %cst_58 {dimension_numbers = #tpu.dot_dimension_numbers<[1], [0], [0], [1], [0, 0, 1, 1], [], []>} : vector<16x32xbf16>, vector<32x64xbf16>, vector<16x64xf32> -> vector<16x64xf32>
    %202 = vector.broadcast %5 : vector<1x64xf32> to vector<16x64xf32>
    %203 = arith.addf %201, %202 : vector<16x64xf32>
    %cst_59 = arith.constant 5.000000e-01 : f32
    %204 = vector.broadcast %cst_59 : f32 to vector<16x64xf32>
    %205 = arith.mulf %204, %203 : vector<16x64xf32>
    %cst_60 = arith.constant 4.471500e-02 : f32
    %206 = vector.broadcast %cst_60 : f32 to vector<16x64xf32>
    %207 = arith.mulf %206, %203 : vector<16x64xf32>
    %208 = arith.mulf %207, %203 : vector<16x64xf32>
    %209 = arith.mulf %208, %203 : vector<16x64xf32>
    %210 = arith.addf %203, %209 : vector<16x64xf32>
    %cst_61 = arith.constant 0.797884583 : f32
    %211 = vector.broadcast %cst_61 : f32 to vector<16x64xf32>
    %212 = arith.mulf %211, %210 : vector<16x64xf32>
    %213 = math.tanh %212 : vector<16x64xf32>
    %cst_62 = arith.constant 1.000000e+00 : f32
    %214 = vector.broadcast %cst_62 : f32 to vector<16x64xf32>
    %215 = arith.addf %214, %213 : vector<16x64xf32>
    %216 = arith.mulf %205, %215 : vector<16x64xf32>
    %217 = arith.truncf %216 : vector<16x64xf32> to vector<16x64xbf16>
    %cst_63 = arith.constant dense<0.000000e+00> : vector<16x32xf32>
    %218 = tpu.matmul %217, %6, %cst_63 {dimension_numbers = #tpu.dot_dimension_numbers<[1], [0], [0], [1], [0, 0, 1, 1], [], []>} : vector<16x64xbf16>, vector<64x32xbf16>, vector<16x32xf32> -> vector<16x32xf32>
    %219 = vector.broadcast %12 : vector<1x32xf32> to vector<16x32xf32>
    %220 = arith.addf %218, %219 : vector<16x32xf32>
    %221 = arith.addf %179, %220 : vector<16x32xf32>
    %222 = vector.shape_cast %221 : vector<16x32xf32> to vector<2x8x32xf32>
    %c0_64 = arith.constant 0 : index
    %c0_65 = arith.constant 0 : index
    %c0_66 = arith.constant 0 : index
    %223 = vector.load %arg8[%c0_64, %c0_65, %c0_66] : memref<2x8x32xf32, #tpu.memory_space<vmem>>, vector<2x8x32xf32>
    tpu.vector_store %arg8[%c0_64, %c0_65, %c0_66], %222 {strides = array<i32>} : memref<2x8x32xf32, #tpu.memory_space<vmem>>, vector<2x8x32xf32>,
    return
  }
  func.func @transform_0(%arg0: i32) -> (i32, i32, i32) {
    %c0_i32 = arith.constant 0 : i32
    %c0_i32_0 = arith.constant 0 : i32
    %c0_i32_1 = arith.constant 0 : i32
    return %arg0, %c0_i32, %c0_i32_0 : i32, i32, i32
  }
  func.func @transform_1(%arg0: i32) -> (i32, i32) {
    %c0_i32 = arith.constant 0 : i32
    %c0_i32_0 = arith.constant 0 : i32
    %c0_i32_1 = arith.constant 0 : i32
    return %c0_i32, %c0_i32_0 : i32, i32
  }
  func.func @transform_2(%arg0: i32) -> (i32, i32) {
    %c0_i32 = arith.constant 0 : i32
    %c0_i32_0 = arith.constant 0 : i32
    %c0_i32_1 = arith.constant 0 : i32
    return %c0_i32, %c0_i32_0 : i32, i32
  }
  func.func @transform_3(%arg0: i32) -> (i32, i32) {
    %c0_i32 = arith.constant 0 : i32
    %c0_i32_0 = arith.constant 0 : i32
    %c0_i32_1 = arith.constant 0 : i32
    return %c0_i32, %c0_i32_0 : i32, i32
  }
  func.func @transform_4(%arg0: i32) -> (i32, i32) {
    %c0_i32 = arith.constant 0 : i32
    %c0_i32_0 = arith.constant 0 : i32
    %c0_i32_1 = arith.constant 0 : i32
    return %c0_i32, %c0_i32_0 : i32, i32
  }
  func.func @transform_5(%arg0: i32) -> (i32, i32) {
    %c0_i32 = arith.constant 0 : i32
    %c0_i32_0 = arith.constant 0 : i32
    %c0_i32_1 = arith.constant 0 : i32
    return %c0_i32, %c0_i32_0 : i32, i32
  }
  func.func @transform_6(%arg0: i32) -> (i32, i32) {
    %c0_i32 = arith.constant 0 : i32
    %c0_i32_0 = arith.constant 0 : i32
    %c0_i32_1 = arith.constant 0 : i32
    return %c0_i32, %c0_i32_0 : i32, i32
  }
  func.func @transform_7(%arg0: i32) -> (i32, i32, i32) {
    %c0_i32 = arith.constant 0 : i32
    %c0_i32_0 = arith.constant 0 : i32
    %c0_i32_1 = arith.constant 0 : i32
    return %arg0, %c0_i32, %c0_i32_0 : i32, i32, i32
  }
}

</mosaic_0001>

<llo_original>
// kernel: tpu_custom_call.1
$region0: #{tpu_custom_call.1}
  #allocation0 [shape = 'u32[]', space=smem, size = 0x4, offset = 0x4, fixed_abs, tag = 'smem constant byte address 0x4 - core index']
  #allocation1 [shape = 'u32[144,128]{1,0:T(1,128)}', space=vmem, size = 0x12000, scoped, tag = 'internal scratch']
  %s0 = inlined_call_operand.vmem [shape: f32[2,8,32], index: 0, kind: input, shape index: {}]
  %s1 = inlined_call_operand.vmem [shape: f32[6,32], index: 1, kind: input, shape index: {}]
  %s2 = inlined_call_operand.vmem [shape: bf16[96,32], index: 2, kind: input, shape index: {}]
  %s3 = inlined_call_operand.vmem [shape: bf16[32,32], index: 3, kind: input, shape index: {}]
  %s4 = inlined_call_operand.vmem [shape: bf16[32,64], index: 4, kind: input, shape index: {}]
  %s5 = inlined_call_operand.vmem [shape: f32[1,64], index: 5, kind: input, shape index: {}]
  %s6 = inlined_call_operand.vmem [shape: bf16[64,32], index: 6, kind: input, shape index: {}]
  %s7 = inlined_call_operand.hbm [shape: f32[2,8,32], index: 7, kind: output, shape index: {}]
  %s8 = sld [smem:[#allocation0]]
  $region38: #{tpu_custom_call.1} parent=0
    _
  %s10 = ssub.s32 1, %s8
  %s11 = scalar_select 0, %s10, %s8
  $region1: #{tpu_custom_call.1} parent=0
    #allocation2 [shape = 'u8[8192]{0}', space=vmem, size = 0x2000, scoped, tag = 'output window, operand 0, single buffered']
    #allocation3 [shape = 's32[1]{0}', space=sflag, size = 0x4, scoped, tag = 'scoped memory for tpu_custom_call.1']
    %12 = vsyncpa [#allocation3], 0
    // Predicated region
    $region2: #{tpu_custom_call.1} parent=1 // pred_check
      _
    $region3: #{tpu_custom_call.1} parent=1 // pred_check_branch
      %14 = sbr.rel (0) target = $region5
    $region4: #{tpu_custom_call.1} parent=1 // pred_region
      _
    $region5: #{tpu_custom_call.1} parent=1 // pred_fallthru
      _
    // Predicated region
    $region6: #{tpu_custom_call.1} parent=1 // pred_check
      _
    $region7: #{tpu_custom_call.1} parent=1 // pred_check_branch
      %16 = sbr.rel (0) target = $region9
    $region8: #{tpu_custom_call.1} parent=1 // pred_region
      _
    $region9: #{tpu_custom_call.1} parent=1 // pred_fallthru
      _
    // Predicated region
    $region10: #{tpu_custom_call.1} parent=1 // pred_check
      _
    $region11: #{tpu_custom_call.1} parent=1 // pred_check_branch
      %18 = sbr.rel (0) target = $region13
    $region12: #{tpu_custom_call.1} parent=1 // pred_region
      _
    $region13: #{tpu_custom_call.1} parent=1 // pred_fallthru
      _
    // Predicated region
    $region14: #{tpu_custom_call.1} parent=1 // pred_check
      _
    $region15: #{tpu_custom_call.1} parent=1 // pred_check_branch
      %20 = sbr.rel (0) target = $region17
    $region16: #{tpu_custom_call.1} parent=1 // pred_region
      _
    $region17: #{tpu_custom_call.1} parent=1 // pred_fallthru
      _
    // Predicated region
    $region18: #{tpu_custom_call.1} parent=1 // pred_check
      _
    $region19: #{tpu_custom_call.1} parent=1 // pred_check_branch
      %22 = sbr.rel (0) target = $region21
    $region20: #{tpu_custom_call.1} parent=1 // pred_region
      _
    $region21: #{tpu_custom_call.1} parent=1 // pred_fallthru
      _
    // Predicated region
    $region22: #{tpu_custom_call.1} parent=1 // pred_check
      _
    $region23: #{tpu_custom_call.1} parent=1 // pred_check_branch
      %24 = sbr.rel (0) target = $region25
    $region24: #{tpu_custom_call.1} parent=1 // pred_region
      _
    $region25: #{tpu_custom_call.1} parent=1 // pred_fallthru
      _
    // Predicated region
    $region26: #{tpu_custom_call.1} parent=1 // pred_check
      _
    $region27: #{tpu_custom_call.1} parent=1 // pred_check_branch
      %26 = sbr.rel (0) target = $region29
    $region28: #{tpu_custom_call.1} parent=1 // pred_region
      _
    $region29: #{tpu_custom_call.1} parent=1 // pred_fallthru
      _
    %v28 = vld [vmem:[%s0] sm:$0xff]
    %v29 = vld [vmem:[%s0 + $0x8] sm:$0xff]
    %v30 = vld [vmem:[%s1] sm:$0x3f]
    %v31 = vld [vmem:[%s2] sm:$0xf]
    %v32 = vld [vmem:[%s2 + $0x4] sm:$0xf]
    %v33 = vld [vmem:[%s2 + $0x8] sm:$0xf]
    %v34 = vld [vmem:[%s2 + $0xc] sm:$0xf]
    %v35 = vld [vmem:[%s2 + $0x10] sm:$0xf]
    %v36 = vld [vmem:[%s2 + $0x14] sm:$0xf]
    %v37 = vld [vmem:[%s2 + $0x18] sm:$0xf]
    %v38 = vld [vmem:[%s2 + $0x1c] sm:$0xf]
    %v39 = vld [vmem:[%s2 + $0x20] sm:$0xf]
    %v40 = vld [vmem:[%s2 + $0x24] sm:$0xf]
    %v41 = vld [vmem:[%s2 + $0x28] sm:$0xf]
    %v42 = vld [vmem:[%s2 + $0x2c] sm:$0xf]
    %v43 = vld [vmem:[%s3] sm:$0xf]
    %v44 = vld [vmem:[%s3 + $0x4] sm:$0xf]
    %v45 = vld [vmem:[%s3 + $0x8] sm:$0xf]
    %v46 = vld [vmem:[%s3 + $0xc] sm:$0xf]
    %v47 = vld [vmem:[%s4] sm:$0xf]
    %v48 = vld [vmem:[%s4 + $0x4] sm:$0xf]
    %v49 = vld [vmem:[%s4 + $0x8] sm:$0xf]
    %v50 = vld [vmem:[%s4 + $0xc] sm:$0xf]
    %v51 = vld [vmem:[%s5] sm:$0x1]
    %v52 = vld [vmem:[%s6] sm:$0xf]
    %v53 = vld [vmem:[%s6 + $0x4] sm:$0xf]
    %v54 = vld [vmem:[%s6 + $0x8] sm:$0xf]
    %v55 = vld [vmem:[%s6 + $0xc] sm:$0xf]
    %v56 = vld [vmem:[%s6 + $0x10] sm:$0xf]
    %v57 = vld [vmem:[%s6 + $0x14] sm:$0xf]
    %v58 = vld [vmem:[%s6 + $0x18] sm:$0xf]
    %v59 = vld [vmem:[%s6 + $0x1c] sm:$0xf]
    %vm60 = vcmask 261120
    %v61 = vsel %vm60, %v28, 0.0
    %62 = vadd.xlane.f32.xlu0 %v61
    %v63 = vpop.xlane.xlu0 %62
    %v64 = vsel %vm60, %v29, 0.0
    %65 = vadd.xlane.f32.xlu0 %v64
    %v66 = vpop.xlane.xlu0 %65
    %v67 = vrcp.pop 32.0
    %v68 = vmul.f32 %v63, %v67
    %v69 = vmul.f32 %v66, %v67
    %v70 = vsub.f32 %v28, %v68
    %v71 = vsub.f32 %v29, %v69
    %v72 = vmul.f32 %v70, %v70
    %v73 = vmul.f32 %v71, %v71
    %v74 = vsel %vm60, %v72, 0.0
    %75 = vadd.xlane.f32.xlu0 %v74
    %v76 = vpop.xlane.xlu0 %75
    %v77 = vsel %vm60, %v73, 0.0
    %78 = vadd.xlane.f32.xlu0 %v77
    %v79 = vpop.xlane.xlu0 %78
    %v80 = vmul.f32 %v76, %v67
    %v81 = vmul.f32 %v79, %v67
    %v82 = vadd.f32 %v80, 1e-05
    %v83 = vadd.f32 %v81, 1e-05
    %v84 = vrsqrt.pop %v82
    %v85 = vrsqrt.pop %v83
    %v86 = vmul.f32 %v70, %v84
    %v87 = vmul.f32 %v71, %v85
    %v88 = vlaneseq
    %v89 = vshrl.u32 %v88, 7
    %v90 = vsub.s32 0, %v89
    %v91 = vrot.slane %v30, %v90
    %v92 = vmul.f32 %v86, %v91
    %v93 = vmul.f32 %v87, %v91
    %v94 = vlaneseq
    %v95 = vshrl.u32 %v94, 7
    %v96 = vsub.s32 1, %v95
    %v97 = vrot.slane %v30, %v96
    %v98 = vadd.f32 %v92, %v97
    %v99 = vadd.f32 %v93, %v97
    %v100 = vpack.c.bf16 %v99, %v98
    %v113 = vunpack.c.l.b16 %v31
    %v114 = vunpack.c.l.b16 %v32
    %v115 = vunpack.c.l.b16 %v33
    %v116 = vunpack.c.l.b16 %v34
    %v117 = vunpack.c.l.b16 %v35
    %v118 = vunpack.c.l.b16 %v36
    %v119 = vunpack.c.l.b16 %v37
    %v120 = vunpack.c.l.b16 %v38
    %v121 = vunpack.c.l.b16 %v39
    %v122 = vunpack.c.l.b16 %v40
    %v123 = vunpack.c.l.b16 %v41
    %v124 = vunpack.c.l.b16 %v42
    %v125 = vpack.c.b16 %v114, %v113
    %v126 = vpack.c.b16 %v116, %v115
    %v127 = vpack.c.b16 %v118, %v117
    %v128 = vpack.c.b16 %v120, %v119
    %v129 = vpack.c.b16 %v122, %v121
    %v130 = vpack.c.b16 %v124, %v123
    %v132 = vsel %vm60, %v125, 0
    %v135 = vsel %vm60, %v126, 0
    %v138 = vsel %vm60, %v127, 0
    %v141 = vsel %vm60, %v128, 0
    %v144 = vsel %vm60, %v129, 0
    %v147 = vsel %vm60, %v130, 0
    %v150 = vsel %vm60, %v100, 0
    %152 = vmatprep.subr.bf16.mxu0 0
    %153 = vmatpush1.bf16.xpose.msra.mxu0 %v150
    %154 = vmatprep.subr.bf16.mxu0 0
    %155 = vmatpush1.bf16.xpose.msra.mxu0 0
    %156 = vmatprep.subr.bf16.mxu0 0
    %157 = vmatpush1.bf16.xpose.msra.mxu0 0
    %158 = vmatprep.subr.bf16.mxu0 0
    %159 = vmatpush1.bf16.xpose.msra.mxu0 0
    %160 = vmatprep.subr.bf16.mxu0 0
    %161 = vmatpush1.bf16.xpose.msra.mxu0 0
    %162 = vmatprep.subr.bf16.mxu0 0
    %163 = vmatpush1.bf16.xpose.msra.mxu0 0
    %164 = vmatprep.subr.bf16.mxu0 0
    %165 = vmatpush1.bf16.xpose.msra.mxu0 0
    %166 = vmatprep.subr.bf16.mxu0 0
    %167 = vmatpush1.bf16.xpose.msra.mxu0 0
    %168 = vmatprep.subr.bf16.mxu0 0
    %169 = vmatpush1.bf16.xpose.msra.mxu0 0
    %170 = vmatprep.subr.bf16.mxu0 0
    %171 = vmatpush1.bf16.xpose.msra.mxu0 0
    %172 = vmatprep.subr.bf16.mxu0 0
    %173 = vmatpush1.bf16.xpose.msra.mxu0 0
    %174 = vmatprep.subr.bf16.mxu0 0
    %175 = vmatpush1.bf16.xpose.msra.mxu0 0
    %176 = vmatprep.subr.bf16.mxu0 0
    %177 = vmatpush1.bf16.xpose.msra.mxu0 0
    %178 = vmatprep.subr.bf16.mxu0 0
    %179 = vmatpush1.bf16.xpose.msra.mxu0 0
    %180 = vmatprep.subr.bf16.mxu0 0
    %181 = vmatpush1.bf16.xpose.msra.mxu0 0
    %182 = vmatprep.subr.bf16.mxu0 0
    %183 = vmatpush1.bf16.xpose.msra.mxu0 0
    %184 = vmatprep.mubr.bf16.mxu0 0
    %185 = vmatmul.mubr.bf16.gmra.mrb[0].mxu0 %v132
    %v186 = vpop.f32.mrb[0].mxu0
    %v187 = vadd.f32 0.0, %v186
    %v188 = vpop.f32.mrb[0].mxu0
    %v189 = vpop.f32.mrb[0].mxu0
    %v190 = vadd.f32 0.0, %v189
    %v191 = vpop.f32.mrb[0].mxu0
    %192 = vmatprep.mubr.bf16.mxu0 0
    %193 = vmatmul.mubr.bf16.gmra.mrb[0].mxu0 %v135
    %v194 = vpop.f32.mrb[0].mxu0
    %v195 = vadd.f32 0.0, %v194
    %v196 = vpop.f32.mrb[0].mxu0
    %v197 = vpop.f32.mrb[0].mxu0
    %v198 = vadd.f32 0.0, %v197
    %v199 = vpop.f32.mrb[0].mxu0
    %200 = vmatprep.mubr.bf16.mxu0 0
    %201 = vmatmul.mubr.bf16.gmra.mrb[0].mxu0 %v138
    %v202 = vpop.f32.mrb[0].mxu0
    %v203 = vadd.f32 0.0, %v202
    %v204 = vpop.f32.mrb[0].mxu0
    %v205 = vpop.f32.mrb[0].mxu0
    %v206 = vadd.f32 0.0, %v205
    %v207 = vpop.f32.mrb[0].mxu0
    %208 = vmatprep.mubr.bf16.mxu0 0
    %209 = vmatmul.mubr.bf16.gmra.mrb[0].mxu0 %v141
    %v210 = vpop.f32.mrb[0].mxu0
    %v211 = vadd.f32 0.0, %v210
    %v212 = vpop.f32.mrb[0].mxu0
    %v213 = vpop.f32.mrb[0].mxu0
    %v214 = vadd.f32 0.0, %v213
    %v215 = vpop.f32.mrb[0].mxu0
    %216 = vmatprep.mubr.bf16.mxu0 0
    %217 = vmatmul.mubr.bf16.gmra.mrb[0].mxu0 %v144
    %v218 = vpop.f32.mrb[0].mxu0
    %v219 = vadd.f32 0.0, %v218
    %v220 = vpop.f32.mrb[0].mxu0
    %v221 = vpop.f32.mrb[0].mxu0
    %v222 = vadd.f32 0.0, %v221
    %v223 = vpop.f32.mrb[0].mxu0
    %224 = vmatprep.mubr.bf16.mxu0 0
    %225 = vmatmul.mubr.bf16.gmra.mrb[0].mxu0 %v147
    %v226 = vpop.f32.mrb[0].mxu0
    %v227 = vadd.f32 0.0, %v226
    %v228 = vpop.f32.mrb[0].mxu0
    %v229 = vpop.f32.mrb[0].mxu0
    %v230 = vadd.f32 0.0, %v229
    %v231 = vpop.f32.mrb[0].mxu0
    %232 = vdwg.mxu0
    %v233 = vmul.f32 %v187, 0.35355338
    %v234 = vmul.f32 %v190, 0.35355338
    %v235 = vmul.f32 %v195, 0.35355338
    %v236 = vmul.f32 %v198, 0.35355338
    %v237 = vpack.c.bf16 %v234, %v233
    %v238 = vpack.c.bf16 %v236, %v235
    %v239 = vpack.c.bf16 %v206, %v203
    %v240 = vpack.c.bf16 %v214, %v211
    %v241 = vpack.c.bf16 %v222, %v219
    %v242 = vpack.c.bf16 %v230, %v227
    %243 = vxpose.xlu0.c.b16.start [1/8] %v237, 128
    %244 = vxpose.xlu0.c.b16.cont [2/8] 0, 128
    %245 = vxpose.xlu0.c.b16.cont [3/8] 0, 128
    %246 = vxpose.xlu0.c.b16.cont [4/8] 0, 128
    %247 = vxpose.xlu0.c.b16.cont [5/8] 0, 128
    %248 = vxpose.xlu0.c.b16.cont [6/8] 0, 128
    %249 = vxpose.xlu0.c.b16.cont [7/8] 0, 128
    %250 = vxpose.xlu0.c.b16.end [8/8] 0, 128
    %v251 = vpop.trf.xlu0
    %v252 = vpop.trf.xlu0
    %v253 = vpop.trf.xlu0
    %v254 = vpop.trf.xlu0
    %v255 = vpop.trf.xlu0
    %v256 = vpop.trf.xlu0
    %v257 = vpop.trf.xlu0
    %v258 = vpop.trf.xlu0
    %vm259 = vcmask 64512
    %v261 = vsel %vm259, %v251, 0
    %vm263 = vcmask 1043456
    %v265 = vsel %vm263, %v239, 0
    %267 = vmatprep.subr.bf16.mxu0 0
    %268 = vmatpush1.bf16.msra.mxu0 %v265
    %269 = vmatprep.subr.bf16.mxu0 0
    %270 = vmatpush1.bf16.msra.mxu0 0
    %271 = vmatprep.subr.bf16.mxu0 0
    %272 = vmatpush1.bf16.msra.mxu0 0
    %273 = vmatprep.subr.bf16.mxu0 0
    %274 = vmatpush1.bf16.msra.mxu0 0
    %275 = vmatprep.subr.bf16.mxu0 0
    %276 = vmatpush1.bf16.msra.mxu0 0
    %277 = vmatprep.subr.bf16.mxu0 0
    %278 = vmatpush1.bf16.msra.mxu0 0
    %279 = vmatprep.subr.bf16.mxu0 0
    %280 = vmatpush1.bf16.msra.mxu0 0
    %281 = vmatprep.subr.bf16.mxu0 0
    %282 = vmatpush1.bf16.msra.mxu0 0
    %283 = vmatprep.subr.bf16.mxu0 0
    %284 = vmatpush1.bf16.msra.mxu0 0
    %285 = vmatprep.subr.bf16.mxu0 0
    %286 = vmatpush1.bf16.msra.mxu0 0
    %287 = vmatprep.subr.bf16.mxu0 0
    %288 = vmatpush1.bf16.msra.mxu0 0
    %289 = vmatprep.subr.bf16.mxu0 0
    %290 = vmatpush1.bf16.msra.mxu0 0
    %291 = vmatprep.subr.bf16.mxu0 0
    %292 = vmatpush1.bf16.msra.mxu0 0
    %293 = vmatprep.subr.bf16.mxu0 0
    %294 = vmatpush1.bf16.msra.mxu0 0
    %295 = vmatprep.subr.bf16.mxu0 0
    %296 = vmatpush1.bf16.msra.mxu0 0
    %297 = vmatprep.subr.bf16.mxu0 0
    %298 = vmatpush1.bf16.msra.mxu0 0
    %299 = vmatprep.mubr.bf16.mxu0 0
    %300 = vmatmul.mubr.bf16.gmra.mrb[0].mxu0 %v261
    %v301 = vpop.f32.mrb[0].mxu0
    %v302 = vadd.f32 0.0, %v301
    %v303 = vpop.f32.mrb[0].mxu0
    %v304 = vpop.f32.mrb[0].mxu0
    %v305 = vpop.f32.mrb[0].mxu0
    %306 = vdwg.mxu0
    %v307 = vsel %vm259, %v302, -inf
    %308 = vmax.xlane.f32.xlu0 %v307
    %v309 = vpop.xlane.xlu0 %308
    %v310 = vsub.f32 %v302, %v309
    %v311 = vmul.f32 %v310, 1.442695
    %v312 = vpow.pop %v311
    %v313 = vsel %vm259, %v312, 0.0
    %314 = vadd.xlane.f32.xlu0 %v313
    %v315 = vpop.xlane.xlu0 %314
    %v316 = vrcp.pop %v315
    %v317 = vmul.f32 %v312, %v316
    %v318 = vpack.c.bf16 %v317, %v317
    %v320 = vsel %vm259, %v318, 0
    %v323 = vsel %vm259, %v241, 0
    %325 = vmatprep.subr.bf16.mxu0 0
    %326 = vmatpush1.bf16.xpose.msra.mxu0 %v323
    %327 = vmatprep.subr.bf16.mxu0 0
    %328 = vmatpush1.bf16.xpose.msra.mxu0 0
    %329 = vmatprep.subr.bf16.mxu0 0
    %330 = vmatpush1.bf16.xpose.msra.mxu0 0
    %331 = vmatprep.subr.bf16.mxu0 0
    %332 = vmatpush1.bf16.xpose.msra.mxu0 0
    %333 = vmatprep.subr.bf16.mxu0 0
    %334 = vmatpush1.bf16.xpose.msra.mxu0 0
    %335 = vmatprep.subr.bf16.mxu0 0
    %336 = vmatpush1.bf16.xpose.msra.mxu0 0
    %337 = vmatprep.subr.bf16.mxu0 0
    %338 = vmatpush1.bf16.xpose.msra.mxu0 0
    %339 = vmatprep.subr.bf16.mxu0 0
    %340 = vmatpush1.bf16.xpose.msra.mxu0 0
    %341 = vmatprep.subr.bf16.mxu0 0
    %342 = vmatpush1.bf16.xpose.msra.mxu0 0
    %343 = vmatprep.subr.bf16.mxu0 0
    %344 = vmatpush1.bf16.xpose.msra.mxu0 0
    %345 = vmatprep.subr.bf16.mxu0 0
    %346 = vmatpush1.bf16.xpose.msra.mxu0 0
    %347 = vmatprep.subr.bf16.mxu0 0
    %348 = vmatpush1.bf16.xpose.msra.mxu0 0
    %349 = vmatprep.subr.bf16.mxu0 0
    %350 = vmatpush1.bf16.xpose.msra.mxu0 0
    %351 = vmatprep.subr.bf16.mxu0 0
    %352 = vmatpush1.bf16.xpose.msra.mxu0 0
    %353 = vmatprep.subr.bf16.mxu0 0
    %354 = vmatpush1.bf16.xpose.msra.mxu0 0
    %355 = vmatprep.subr.bf16.mxu0 0
    %356 = vmatpush1.bf16.xpose.msra.mxu0 0
    %357 = vmatprep.mubr.bf16.mxu0 0
    %358 = vmatmul.mubr.bf16.gmra.mrb[0].mxu0 %v320
    %v359 = vpop.f32.mrb[0].mxu0
    %v360 = vadd.f32 0.0, %v359
    %v361 = vpop.f32.mrb[0].mxu0
    %v362 = vpop.f32.mrb[0].mxu0
    %v363 = vpop.f32.mrb[0].mxu0
    %364 = vdwg.mxu0
    %v366 = vrot.slane %v237, 4
    %368 = vxpose.xlu0.c.b16.start [1/8] %v366, 128
    %369 = vxpose.xlu0.c.b16.cont [2/8] 0, 128
    %370 = vxpose.xlu0.c.b16.cont [3/8] 0, 128
    %371 = vxpose.xlu0.c.b16.cont [4/8] 0, 128
    %372 = vxpose.xlu0.c.b16.cont [5/8] 0, 128
    %373 = vxpose.xlu0.c.b16.cont [6/8] 0, 128
    %374 = vxpose.xlu0.c.b16.cont [7/8] 0, 128
    %375 = vxpose.xlu0.c.b16.end [8/8] 0, 128
    %v376 = vpop.trf.xlu0
    %v377 = vpop.trf.xlu0
    %v378 = vpop.trf.xlu0
    %v379 = vpop.trf.xlu0
    %v380 = vpop.trf.xlu0
    %v381 = vpop.trf.xlu0
    %v382 = vpop.trf.xlu0
    %v383 = vpop.trf.xlu0
    %v385 = vrot.slane %v239, 4
    %v387 = vsel %vm259, %v376, 0
    %v390 = vsel %vm263, %v385, 0
    %392 = vmatprep.subr.bf16.mxu0 0
    %393 = vmatpush1.bf16.msra.mxu0 %v390
    %394 = vmatprep.subr.bf16.mxu0 0
    %395 = vmatpush1.bf16.msra.mxu0 0
    %396 = vmatprep.subr.bf16.mxu0 0
    %397 = vmatpush1.bf16.msra.mxu0 0
    %398 = vmatprep.subr.bf16.mxu0 0
    %399 = vmatpush1.bf16.msra.mxu0 0
    %400 = vmatprep.subr.bf16.mxu0 0
    %401 = vmatpush1.bf16.msra.mxu0 0
    %402 = vmatprep.subr.bf16.mxu0 0
    %403 = vmatpush1.bf16.msra.mxu0 0
    %404 = vmatprep.subr.bf16.mxu0 0
    %405 = vmatpush1.bf16.msra.mxu0 0
    %406 = vmatprep.subr.bf16.mxu0 0
    %407 = vmatpush1.bf16.msra.mxu0 0
    %408 = vmatprep.subr.bf16.mxu0 0
    %409 = vmatpush1.bf16.msra.mxu0 0
    %410 = vmatprep.subr.bf16.mxu0 0
    %411 = vmatpush1.bf16.msra.mxu0 0
    %412 = vmatprep.subr.bf16.mxu0 0
    %413 = vmatpush1.bf16.msra.mxu0 0
    %414 = vmatprep.subr.bf16.mxu0 0
    %415 = vmatpush1.bf16.msra.mxu0 0
    %416 = vmatprep.subr.bf16.mxu0 0
    %417 = vmatpush1.bf16.msra.mxu0 0
    %418 = vmatprep.subr.bf16.mxu0 0
    %419 = vmatpush1.bf16.msra.mxu0 0
    %420 = vmatprep.subr.bf16.mxu0 0
    %421 = vmatpush1.bf16.msra.mxu0 0
    %422 = vmatprep.subr.bf16.mxu0 0
    %423 = vmatpush1.bf16.msra.mxu0 0
    %424 = vmatprep.mubr.bf16.mxu0 0
    %425 = vmatmul.mubr.bf16.gmra.mrb[0].mxu0 %v387
    %v426 = vpop.f32.mrb[0].mxu0
    %v427 = vadd.f32 0.0, %v426
    %v428 = vpop.f32.mrb[0].mxu0
    %v429 = vpop.f32.mrb[0].mxu0
    %v430 = vpop.f32.mrb[0].mxu0
    %431 = vdwg.mxu0
    %v432 = vsel %vm259, %v427, -inf
    %433 = vmax.xlane.f32.xlu0 %v432
    %v434 = vpop.xlane.xlu0 %433
    %v435 = vsub.f32 %v427, %v434
    %v436 = vmul.f32 %v435, 1.442695
    %v437 = vpow.pop %v436
    %v438 = vsel %vm259, %v437, 0.0
    %439 = vadd.xlane.f32.xlu0 %v438
    %v440 = vpop.xlane.xlu0 %439
    %v441 = vrcp.pop %v440
    %v442 = vmul.f32 %v437, %v441
    %v443 = vpack.c.bf16 %v442, %v442
    %v445 = vrot.slane %v241, 4
    %v447 = vsel %vm259, %v443, 0
    %v450 = vsel %vm259, %v445, 0
    %452 = vmatprep.subr.bf16.mxu0 0
    %453 = vmatpush1.bf16.xpose.msra.mxu0 %v450
    %454 = vmatprep.subr.bf16.mxu0 0
    %455 = vmatpush1.bf16.xpose.msra.mxu0 0
    %456 = vmatprep.subr.bf16.mxu0 0
    %457 = vmatpush1.bf16.xpose.msra.mxu0 0
    %458 = vmatprep.subr.bf16.mxu0 0
    %459 = vmatpush1.bf16.xpose.msra.mxu0 0
    %460 = vmatprep.subr.bf16.mxu0 0
    %461 = vmatpush1.bf16.xpose.msra.mxu0 0
    %462 = vmatprep.subr.bf16.mxu0 0
    %463 = vmatpush1.bf16.xpose.msra.mxu0 0
    %464 = vmatprep.subr.bf16.mxu0 0
    %465 = vmatpush1.bf16.xpose.msra.mxu0 0
    %466 = vmatprep.subr.bf16.mxu0 0
    %467 = vmatpush1.bf16.xpose.msra.mxu0 0
    %468 = vmatprep.subr.bf16.mxu0 0
    %469 = vmatpush1.bf16.xpose.msra.mxu0 0
    %470 = vmatprep.subr.bf16.mxu0 0
    %471 = vmatpush1.bf16.xpose.msra.mxu0 0
    %472 = vmatprep.subr.bf16.mxu0 0
    %473 = vmatpush1.bf16.xpose.msra.mxu0 0
    %474 = vmatprep.subr.bf16.mxu0 0
    %475 = vmatpush1.bf16.xpose.msra.mxu0 0
    %476 = vmatprep.subr.bf16.mxu0 0
    %477 = vmatpush1.bf16.xpose.msra.mxu0 0
    %478 = vmatprep.subr.bf16.mxu0 0
    %479 = vmatpush1.bf16.xpose.msra.mxu0 0
    %480 = vmatprep.subr.bf16.mxu0 0
    %481 = vmatpush1.bf16.xpose.msra.mxu0 0
    %482 = vmatprep.subr.bf16.mxu0 0
    %483 = vmatpush1.bf16.xpose.msra.mxu0 0
    %484 = vmatprep.mubr.bf16.mxu0 0
    %485 = vmatmul.mubr.bf16.gmra.mrb[0].mxu0 %v447
    %v486 = vpop.f32.mrb[0].mxu0
    %v487 = vadd.f32 0.0, %v486
    %v488 = vpop.f32.mrb[0].mxu0
    %v489 = vpop.f32.mrb[0].mxu0
    %v490 = vpop.f32.mrb[0].mxu0
    %491 = vdwg.mxu0
    %492 = vxpose.xlu0.c.b16.start [1/8] %v238, 128
    %493 = vxpose.xlu0.c.b16.cont [2/8] 0, 128
    %494 = vxpose.xlu0.c.b16.cont [3/8] 0, 128
    %495 = vxpose.xlu0.c.b16.cont [4/8] 0, 128
    %496 = vxpose.xlu0.c.b16.cont [5/8] 0, 128
    %497 = vxpose.xlu0.c.b16.cont [6/8] 0, 128
    %498 = vxpose.xlu0.c.b16.cont [7/8] 0, 128
    %499 = vxpose.xlu0.c.b16.end [8/8] 0, 128
    %v500 = vpop.trf.xlu0
    %v501 = vpop.trf.xlu0
    %v502 = vpop.trf.xlu0
    %v503 = vpop.trf.xlu0
    %v504 = vpop.trf.xlu0
    %v505 = vpop.trf.xlu0
    %v506 = vpop.trf.xlu0
    %v507 = vpop.trf.xlu0
    %v509 = vsel %vm259, %v500, 0
    %v512 = vsel %vm263, %v240, 0
    %514 = vmatprep.subr.bf16.mxu0 0
    %515 = vmatpush1.bf16.msra.mxu0 %v512
    %516 = vmatprep.subr.bf16.mxu0 0
    %517 = vmatpush1.bf16.msra.mxu0 0
    %518 = vmatprep.subr.bf16.mxu0 0
    %519 = vmatpush1.bf16.msra.mxu0 0
    %520 = vmatprep.subr.bf16.mxu0 0
    %521 = vmatpush1.bf16.msra.mxu0 0
    %522 = vmatprep.subr.bf16.mxu0 0
    %523 = vmatpush1.bf16.msra.mxu0 0
    %524 = vmatprep.subr.bf16.mxu0 0
    %525 = vmatpush1.bf16.msra.mxu0 0
    %526 = vmatprep.subr.bf16.mxu0 0
    %527 = vmatpush1.bf16.msra.mxu0 0
    %528 = vmatprep.subr.bf16.mxu0 0
    %529 = vmatpush1.bf16.msra.mxu0 0
    %530 = vmatprep.subr.bf16.mxu0 0
    %531 = vmatpush1.bf16.msra.mxu0 0
    %532 = vmatprep.subr.bf16.mxu0 0
    %533 = vmatpush1.bf16.msra.mxu0 0
    %534 = vmatprep.subr.bf16.mxu0 0
    %535 = vmatpush1.bf16.msra.mxu0 0
    %536 = vmatprep.subr.bf16.mxu0 0
    %537 = vmatpush1.bf16.msra.mxu0 0
    %538 = vmatprep.subr.bf16.mxu0 0
    %539 = vmatpush1.bf16.msra.mxu0 0
    %540 = vmatprep.subr.bf16.mxu0 0
    %541 = vmatpush1.bf16.msra.mxu0 0
    %542 = vmatprep.subr.bf16.mxu0 0
    %543 = vmatpush1.bf16.msra.mxu0 0
    %544 = vmatprep.subr.bf16.mxu0 0
    %545 = vmatpush1.bf16.msra.mxu0 0
    %546 = vmatprep.mubr.bf16.mxu0 0
    %547 = vmatmul.mubr.bf16.gmra.mrb[0].mxu0 %v509
    %v548 = vpop.f32.mrb[0].mxu0
    %v549 = vadd.f32 0.0, %v548
    %v550 = vpop.f32.mrb[0].mxu0
    %v551 = vpop.f32.mrb[0].mxu0
    %v552 = vpop.f32.mrb[0].mxu0
    %553 = vdwg.mxu0
    %v554 = vsel %vm259, %v549, -inf
    %555 = vmax.xlane.f32.xlu0 %v554
    %v556 = vpop.xlane.xlu0 %555
    %v557 = vsub.f32 %v549, %v556
    %v558 = vmul.f32 %v557, 1.442695
    %v559 = vpow.pop %v558
    %v560 = vsel %vm259, %v559, 0.0
    %561 = vadd.xlane.f32.xlu0 %v560
    %v562 = vpop.xlane.xlu0 %561
    %v563 = vrcp.pop %v562
    %v564 = vmul.f32 %v559, %v563
    %v565 = vpack.c.bf16 %v564, %v564
    %v567 = vsel %vm259, %v565, 0
    %v570 = vsel %vm259, %v242, 0
    %572 = vmatprep.subr.bf16.mxu0 0
    %573 = vmatpush1.bf16.xpose.msra.mxu0 %v570
    %574 = vmatprep.subr.bf16.mxu0 0
    %575 = vmatpush1.bf16.xpose.msra.mxu0 0
    %576 = vmatprep.subr.bf16.mxu0 0
    %577 = vmatpush1.bf16.xpose.msra.mxu0 0
    %578 = vmatprep.subr.bf16.mxu0 0
    %579 = vmatpush1.bf16.xpose.msra.mxu0 0
    %580 = vmatprep.subr.bf16.mxu0 0
    %581 = vmatpush1.bf16.xpose.msra.mxu0 0
    %582 = vmatprep.subr.bf16.mxu0 0
    %583 = vmatpush1.bf16.xpose.msra.mxu0 0
    %584 = vmatprep.subr.bf16.mxu0 0
    %585 = vmatpush1.bf16.xpose.msra.mxu0 0
    %586 = vmatprep.subr.bf16.mxu0 0
    %587 = vmatpush1.bf16.xpose.msra.mxu0 0
    %588 = vmatprep.subr.bf16.mxu0 0
    %589 = vmatpush1.bf16.xpose.msra.mxu0 0
    %590 = vmatprep.subr.bf16.mxu0 0
    %591 = vmatpush1.bf16.xpose.msra.mxu0 0
    %592 = vmatprep.subr.bf16.mxu0 0
    %593 = vmatpush1.bf16.xpose.msra.mxu0 0
    %594 = vmatprep.subr.bf16.mxu0 0
    %595 = vmatpush1.bf16.xpose.msra.mxu0 0
    %596 = vmatprep.subr.bf16.mxu0 0
    %597 = vmatpush1.bf16.xpose.msra.mxu0 0
    %598 = vmatprep.subr.bf16.mxu0 0
    %599 = vmatpush1.bf16.xpose.msra.mxu0 0
    %600 = vmatprep.subr.bf16.mxu0 0
    %601 = vmatpush1.bf16.xpose.msra.mxu0 0
    %602 = vmatprep.subr.bf16.mxu0 0
    %603 = vmatpush1.bf16.xpose.msra.mxu0 0
    %604 = vmatprep.mubr.bf16.mxu0 0
    %605 = vmatmul.mubr.bf16.gmra.mrb[0].mxu0 %v567
    %v606 = vpop.f32.mrb[0].mxu0
    %v607 = vadd.f32 0.0, %v606
    %v608 = vpop.f32.mrb[0].mxu0
    %v609 = vpop.f32.mrb[0].mxu0
    %v610 = vpop.f32.mrb[0].mxu0
    %611 = vdwg.mxu0
    %v613 = vrot.slane %v238, 4
    %615 = vxpose.xlu0.c.b16.start [1/8] %v613, 128
    %616 = vxpose.xlu0.c.b16.cont [2/8] 0, 128
    %617 = vxpose.xlu0.c.b16.cont [3/8] 0, 128
    %618 = vxpose.xlu0.c.b16.cont [4/8] 0, 128
    %619 = vxpose.xlu0.c.b16.cont [5/8] 0, 128
    %620 = vxpose.xlu0.c.b16.cont [6/8] 0, 128
    %621 = vxpose.xlu0.c.b16.cont [7/8] 0, 128
    %622 = vxpose.xlu0.c.b16.end [8/8] 0, 128
    %v623 = vpop.trf.xlu0
    %v624 = vpop.trf.xlu0
    %v625 = vpop.trf.xlu0
    %v626 = vpop.trf.xlu0
    %v627 = vpop.trf.xlu0
    %v628 = vpop.trf.xlu0
    %v629 = vpop.trf.xlu0
    %v630 = vpop.trf.xlu0
    %v632 = vrot.slane %v240, 4
    %v634 = vsel %vm259, %v623, 0
    %v637 = vsel %vm263, %v632, 0
    %639 = vmatprep.subr.bf16.mxu0 0
    %640 = vmatpush1.bf16.msra.mxu0 %v637
    %641 = vmatprep.subr.bf16.mxu0 0
    %642 = vmatpush1.bf16.msra.mxu0 0
    %643 = vmatprep.subr.bf16.mxu0 0
    %644 = vmatpush1.bf16.msra.mxu0 0
    %645 = vmatprep.subr.bf16.mxu0 0
    %646 = vmatpush1.bf16.msra.mxu0 0
    %647 = vmatprep.subr.bf16.mxu0 0
    %648 = vmatpush1.bf16.msra.mxu0 0
    %649 = vmatprep.subr.bf16.mxu0 0
    %650 = vmatpush1.bf16.msra.mxu0 0
    %651 = vmatprep.subr.bf16.mxu0 0
    %652 = vmatpush1.bf16.msra.mxu0 0
    %653 = vmatprep.subr.bf16.mxu0 0
    %654 = vmatpush1.bf16.msra.mxu0 0
    %655 = vmatprep.subr.bf16.mxu0 0
    %656 = vmatpush1.bf16.msra.mxu0 0
    %657 = vmatprep.subr.bf16.mxu0 0
    %658 = vmatpush1.bf16.msra.mxu0 0
    %659 = vmatprep.subr.bf16.mxu0 0
    %660 = vmatpush1.bf16.msra.mxu0 0
    %661 = vmatprep.subr.bf16.mxu0 0
    %662 = vmatpush1.bf16.msra.mxu0 0
    %663 = vmatprep.subr.bf16.mxu0 0
    %664 = vmatpush1.bf16.msra.mxu0 0
    %665 = vmatprep.subr.bf16.mxu0 0
    %666 = vmatpush1.bf16.msra.mxu0 0
    %667 = vmatprep.subr.bf16.mxu0 0
    %668 = vmatpush1.bf16.msra.mxu0 0
    %669 = vmatprep.subr.bf16.mxu0 0
    %670 = vmatpush1.bf16.msra.mxu0 0
    %671 = vmatprep.mubr.bf16.mxu0 0
    %672 = vmatmul.mubr.bf16.gmra.mrb[0].mxu0 %v634
    %v673 = vpop.f32.mrb[0].mxu0
    %v674 = vadd.f32 0.0, %v673
    %v675 = vpop.f32.mrb[0].mxu0
    %v676 = vpop.f32.mrb[0].mxu0
    %v677 = vpop.f32.mrb[0].mxu0
    %678 = vdwg.mxu0
    %v679 = vsel %vm259, %v674, -inf
    %680 = vmax.xlane.f32.xlu0 %v679
    %v681 = vpop.xlane.xlu0 %680
    %v682 = vsub.f32 %v674, %v681
    %v683 = vmul.f32 %v682, 1.442695
    %v684 = vpow.pop %v683
    %v685 = vsel %vm259, %v684, 0.0
    %686 = vadd.xlane.f32.xlu0 %v685
    %v687 = vpop.xlane.xlu0 %686
    %v688 = vrcp.pop %v687
    %v689 = vmul.f32 %v684, %v688
    %v690 = vpack.c.bf16 %v689, %v689
    %v692 = vrot.slane %v242, 4
    %v694 = vsel %vm259, %v690, 0
    %v697 = vsel %vm259, %v692, 0
    %699 = vmatprep.subr.bf16.mxu0 0
    %700 = vmatpush1.bf16.xpose.msra.mxu0 %v697
    %701 = vmatprep.subr.bf16.mxu0 0
    %702 = vmatpush1.bf16.xpose.msra.mxu0 0
    %703 = vmatprep.subr.bf16.mxu0 0
    %704 = vmatpush1.bf16.xpose.msra.mxu0 0
    %705 = vmatprep.subr.bf16.mxu0 0
    %706 = vmatpush1.bf16.xpose.msra.mxu0 0
    %707 = vmatprep.subr.bf16.mxu0 0
    %708 = vmatpush1.bf16.xpose.msra.mxu0 0
    %709 = vmatprep.subr.bf16.mxu0 0
    %710 = vmatpush1.bf16.xpose.msra.mxu0 0
    %711 = vmatprep.subr.bf16.mxu0 0
    %712 = vmatpush1.bf16.xpose.msra.mxu0 0
    %713 = vmatprep.subr.bf16.mxu0 0
    %714 = vmatpush1.bf16.xpose.msra.mxu0 0
    %715 = vmatprep.subr.bf16.mxu0 0
    %716 = vmatpush1.bf16.xpose.msra.mxu0 0
    %717 = vmatprep.subr.bf16.mxu0 0
    %718 = vmatpush1.bf16.xpose.msra.mxu0 0
    %719 = vmatprep.subr.bf16.mxu0 0
    %720 = vmatpush1.bf16.xpose.msra.mxu0 0
    %721 = vmatprep.subr.bf16.mxu0 0
    %722 = vmatpush1.bf16.xpose.msra.mxu0 0
    %723 = vmatprep.subr.bf16.mxu0 0
    %724 = vmatpush1.bf16.xpose.msra.mxu0 0
    %725 = vmatprep.subr.bf16.mxu0 0
    %726 = vmatpush1.bf16.xpose.msra.mxu0 0
    %727 = vmatprep.subr.bf16.mxu0 0
    %728 = vmatpush1.bf16.xpose.msra.mxu0 0
    %729 = vmatprep.subr.bf16.mxu0 0
    %730 = vmatpush1.bf16.xpose.msra.mxu0 0
    %731 = vmatprep.mubr.bf16.mxu0 0
    %732 = vmatmul.mubr.bf16.gmra.mrb[0].mxu0 %v694
    %v733 = vpop.f32.mrb[0].mxu0
    %v734 = vadd.f32 0.0, %v733
    %v735 = vpop.f32.mrb[0].mxu0
    %v736 = vpop.f32.mrb[0].mxu0
    %v737 = vpop.f32.mrb[0].mxu0
    %738 = vdwg.mxu0
    %740 = vrot.lane.b32.xlu0 %v487, 8
    %v741 = vpop.permute.xlu0 %740
    %744 = vrot.lane.b32.xlu0 %v607, 16
    %v745 = vpop.permute.xlu0 %744
    %748 = vrot.lane.b32.xlu0 %v734, 24
    %v749 = vpop.permute.xlu0 %748
    %v751 = vsel %vm259, %v360, %v741
    %vm752 = vcmask 130048
    %v753 = vsel %vm752, %v751, %v745
    %vm754 = vcmask 195584
    %v755 = vsel %vm754, %v753, %v749
    %756 = vrot.lane.b32.xlu0 %v237, 120
    %v757 = vpop.permute.xlu0 %756
    %759 = vxpose.xlu0.c.b16.start [1/8] %v757, 128
    %760 = vxpose.xlu0.c.b16.cont [2/8] 0, 128
    %761 = vxpose.xlu0.c.b16.cont [3/8] 0, 128
    %762 = vxpose.xlu0.c.b16.cont [4/8] 0, 128
    %763 = vxpose.xlu0.c.b16.cont [5/8] 0, 128
    %764 = vxpose.xlu0.c.b16.cont [6/8] 0, 128
    %765 = vxpose.xlu0.c.b16.cont [7/8] 0, 128
    %766 = vxpose.xlu0.c.b16.end [8/8] 0, 128
    %v767 = vpop.trf.xlu0
    %v768 = vpop.trf.xlu0
    %v769 = vpop.trf.xlu0
    %v770 = vpop.trf.xlu0
    %v771 = vpop.trf.xlu0
    %v772 = vpop.trf.xlu0
    %v773 = vpop.trf.xlu0
    %v774 = vpop.trf.xlu0
    %775 = vrot.lane.b32.xlu0 %v239, 120
    %v776 = vpop.permute.xlu0 %775
    %v778 = vsel %vm259, %v767, 0
    %v781 = vsel %vm263, %v776, 0
    %783 = vmatprep.subr.bf16.mxu0 0
    %784 = vmatpush1.bf16.msra.mxu0 %v781
    %785 = vmatprep.subr.bf16.mxu0 0
    %786 = vmatpush1.bf16.msra.mxu0 0
    %787 = vmatprep.subr.bf16.mxu0 0
    %788 = vmatpush1.bf16.msra.mxu0 0
    %789 = vmatprep.subr.bf16.mxu0 0
    %790 = vmatpush1.bf16.msra.mxu0 0
    %791 = vmatprep.subr.bf16.mxu0 0
    %792 = vmatpush1.bf16.msra.mxu0 0
    %793 = vmatprep.subr.bf16.mxu0 0
    %794 = vmatpush1.bf16.msra.mxu0 0
    %795 = vmatprep.subr.bf16.mxu0 0
    %796 = vmatpush1.bf16.msra.mxu0 0
    %797 = vmatprep.subr.bf16.mxu0 0
    %798 = vmatpush1.bf16.msra.mxu0 0
    %799 = vmatprep.subr.bf16.mxu0 0
    %800 = vmatpush1.bf16.msra.mxu0 0
    %801 = vmatprep.subr.bf16.mxu0 0
    %802 = vmatpush1.bf16.msra.mxu0 0
    %803 = vmatprep.subr.bf16.mxu0 0
    %804 = vmatpush1.bf16.msra.mxu0 0
    %805 = vmatprep.subr.bf16.mxu0 0
    %806 = vmatpush1.bf16.msra.mxu0 0
    %807 = vmatprep.subr.bf16.mxu0 0
    %808 = vmatpush1.bf16.msra.mxu0 0
    %809 = vmatprep.subr.bf16.mxu0 0
    %810 = vmatpush1.bf16.msra.mxu0 0
    %811 = vmatprep.subr.bf16.mxu0 0
    %812 = vmatpush1.bf16.msra.mxu0 0
    %813 = vmatprep.subr.bf16.mxu0 0
    %814 = vmatpush1.bf16.msra.mxu0 0
    %815 = vmatprep.mubr.bf16.mxu0 0
    %816 = vmatmul.mubr.bf16.gmra.mrb[0].mxu0 %v778
    %v817 = vpop.f32.mrb[0].mxu0
    %v818 = vadd.f32 0.0, %v817
    %v819 = vpop.f32.mrb[0].mxu0
    %v820 = vpop.f32.mrb[0].mxu0
    %v821 = vpop.f32.mrb[0].mxu0
    %822 = vdwg.mxu0
    %v823 = vsel %vm259, %v818, -inf
    %824 = vmax.xlane.f32.xlu0 %v823
    %v825 = vpop.xlane.xlu0 %824
    %v826 = vsub.f32 %v818, %v825
    %v827 = vmul.f32 %v826, 1.442695
    %v828 = vpow.pop %v827
    %v829 = vsel %vm259, %v828, 0.0
    %830 = vadd.xlane.f32.xlu0 %v829
    %v831 = vpop.xlane.xlu0 %830
    %v832 = vrcp.pop %v831
    %v833 = vmul.f32 %v828, %v832
    %v834 = vpack.c.bf16 %v833, %v833
    %835 = vrot.lane.b32.xlu0 %v241, 120
    %v836 = vpop.permute.xlu0 %835
    %v838 = vsel %vm259, %v834, 0
    %v841 = vsel %vm259, %v836, 0
    %843 = vmatprep.subr.bf16.mxu0 0
    %844 = vmatpush1.bf16.xpose.msra.mxu0 %v841
    %845 = vmatprep.subr.bf16.mxu0 0
    %846 = vmatpush1.bf16.xpose.msra.mxu0 0
    %847 = vmatprep.subr.bf16.mxu0 0
    %848 = vmatpush1.bf16.xpose.msra.mxu0 0
    %849 = vmatprep.subr.bf16.mxu0 0
    %850 = vmatpush1.bf16.xpose.msra.mxu0 0
    %851 = vmatprep.subr.bf16.mxu0 0
    %852 = vmatpush1.bf16.xpose.msra.mxu0 0
    %853 = vmatprep.subr.bf16.mxu0 0
    %854 = vmatpush1.bf16.xpose.msra.mxu0 0
    %855 = vmatprep.subr.bf16.mxu0 0
    %856 = vmatpush1.bf16.xpose.msra.mxu0 0
    %857 = vmatprep.subr.bf16.mxu0 0
    %858 = vmatpush1.bf16.xpose.msra.mxu0 0
    %859 = vmatprep.subr.bf16.mxu0 0
    %860 = vmatpush1.bf16.xpose.msra.mxu0 0
    %861 = vmatprep.subr.bf16.mxu0 0
    %862 = vmatpush1.bf16.xpose.msra.mxu0 0
    %863 = vmatprep.subr.bf16.mxu0 0
    %864 = vmatpush1.bf16.xpose.msra.mxu0 0
    %865 = vmatprep.subr.bf16.mxu0 0
    %866 = vmatpush1.bf16.xpose.msra.mxu0 0
    %867 = vmatprep.subr.bf16.mxu0 0
    %868 = vmatpush1.bf16.xpose.msra.mxu0 0
    %869 = vmatprep.subr.bf16.mxu0 0
    %870 = vmatpush1.bf16.xpose.msra.mxu0 0
    %871 = vmatprep.subr.bf16.mxu0 0
    %872 = vmatpush1.bf16.xpose.msra.mxu0 0
    %873 = vmatprep.subr.bf16.mxu0 0
    %874 = vmatpush1.bf16.xpose.msra.mxu0 0
    %875 = vmatprep.mubr.bf16.mxu0 0
    %876 = vmatmul.mubr.bf16.gmra.mrb[0].mxu0 %v838
    %v877 = vpop.f32.mrb[0].mxu0
    %v878 = vadd.f32 0.0, %v877
    %v879 = vpop.f32.mrb[0].mxu0
    %v880 = vpop.f32.mrb[0].mxu0
    %v881 = vpop.f32.mrb[0].mxu0
    %882 = vdwg.mxu0
    %883 = vrot.lane.b32.xlu0 %v366, 120
    %v884 = vpop.permute.xlu0 %883
    %886 = vxpose.xlu0.c.b16.start [1/8] %v884, 128
    %887 = vxpose.xlu0.c.b16.cont [2/8] 0, 128
    %888 = vxpose.xlu0.c.b16.cont [3/8] 0, 128
    %889 = vxpose.xlu0.c.b16.cont [4/8] 0, 128
    %890 = vxpose.xlu0.c.b16.cont [5/8] 0, 128
    %891 = vxpose.xlu0.c.b16.cont [6/8] 0, 128
    %892 = vxpose.xlu0.c.b16.cont [7/8] 0, 128
    %893 = vxpose.xlu0.c.b16.end [8/8] 0, 128
    %v894 = vpop.trf.xlu0
    %v895 = vpop.trf.xlu0
    %v896 = vpop.trf.xlu0
    %v897 = vpop.trf.xlu0
    %v898 = vpop.trf.xlu0
    %v899 = vpop.trf.xlu0
    %v900 = vpop.trf.xlu0
    %v901 = vpop.trf.xlu0
    %902 = vrot.lane.b32.xlu0 %v385, 120
    %v903 = vpop.permute.xlu0 %902
    %v905 = vsel %vm259, %v894, 0
    %v908 = vsel %vm263, %v903, 0
    %910 = vmatprep.subr.bf16.mxu0 0
    %911 = vmatpush1.bf16.msra.mxu0 %v908
    %912 = vmatprep.subr.bf16.mxu0 0
    %913 = vmatpush1.bf16.msra.mxu0 0
    %914 = vmatprep.subr.bf16.mxu0 0
    %915 = vmatpush1.bf16.msra.mxu0 0
    %916 = vmatprep.subr.bf16.mxu0 0
    %917 = vmatpush1.bf16.msra.mxu0 0
    %918 = vmatprep.subr.bf16.mxu0 0
    %919 = vmatpush1.bf16.msra.mxu0 0
    %920 = vmatprep.subr.bf16.mxu0 0
    %921 = vmatpush1.bf16.msra.mxu0 0
    %922 = vmatprep.subr.bf16.mxu0 0
    %923 = vmatpush1.bf16.msra.mxu0 0
    %924 = vmatprep.subr.bf16.mxu0 0
    %925 = vmatpush1.bf16.msra.mxu0 0
    %926 = vmatprep.subr.bf16.mxu0 0
    %927 = vmatpush1.bf16.msra.mxu0 0
    %928 = vmatprep.subr.bf16.mxu0 0
    %929 = vmatpush1.bf16.msra.mxu0 0
    %930 = vmatprep.subr.bf16.mxu0 0
    %931 = vmatpush1.bf16.msra.mxu0 0
    %932 = vmatprep.subr.bf16.mxu0 0
    %933 = vmatpush1.bf16.msra.mxu0 0
    %934 = vmatprep.subr.bf16.mxu0 0
    %935 = vmatpush1.bf16.msra.mxu0 0
    %936 = vmatprep.subr.bf16.mxu0 0
    %937 = vmatpush1.bf16.msra.mxu0 0
    %938 = vmatprep.subr.bf16.mxu0 0
    %939 = vmatpush1.bf16.msra.mxu0 0
    %940 = vmatprep.subr.bf16.mxu0 0
    %941 = vmatpush1.bf16.msra.mxu0 0
    %942 = vmatprep.mubr.bf16.mxu0 0
    %943 = vmatmul.mubr.bf16.gmra.mrb[0].mxu0 %v905
    %v944 = vpop.f32.mrb[0].mxu0
    %v945 = vadd.f32 0.0, %v944
    %v946 = vpop.f32.mrb[0].mxu0
    %v947 = vpop.f32.mrb[0].mxu0
    %v948 = vpop.f32.mrb[0].mxu0
    %949 = vdwg.mxu0
    %v950 = vsel %vm259, %v945, -inf
    %951 = vmax.xlane.f32.xlu0 %v950
    %v952 = vpop.xlane.xlu0 %951
    %v953 = vsub.f32 %v945, %v952
    %v954 = vmul.f32 %v953, 1.442695
    %v955 = vpow.pop %v954
    %v956 = vsel %vm259, %v955, 0.0
    %957 = vadd.xlane.f32.xlu0 %v956
    %v958 = vpop.xlane.xlu0 %957
    %v959 = vrcp.pop %v958
    %v960 = vmul.f32 %v955, %v959
    %v961 = vpack.c.bf16 %v960, %v960
    %962 = vrot.lane.b32.xlu0 %v445, 120
    %v963 = vpop.permute.xlu0 %962
    %v965 = vsel %vm259, %v961, 0
    %v968 = vsel %vm259, %v963, 0
    %970 = vmatprep.subr.bf16.mxu0 0
    %971 = vmatpush1.bf16.xpose.msra.mxu0 %v968
    %972 = vmatprep.subr.bf16.mxu0 0
    %973 = vmatpush1.bf16.xpose.msra.mxu0 0
    %974 = vmatprep.subr.bf16.mxu0 0
    %975 = vmatpush1.bf16.xpose.msra.mxu0 0
    %976 = vmatprep.subr.bf16.mxu0 0
    %977 = vmatpush1.bf16.xpose.msra.mxu0 0
    %978 = vmatprep.subr.bf16.mxu0 0
    %979 = vmatpush1.bf16.xpose.msra.mxu0 0
    %980 = vmatprep.subr.bf16.mxu0 0
    %981 = vmatpush1.bf16.xpose.msra.mxu0 0
    %982 = vmatprep.subr.bf16.mxu0 0
    %983 = vmatpush1.bf16.xpose.msra.mxu0 0
    %984 = vmatprep.subr.bf16.mxu0 0
    %985 = vmatpush1.bf16.xpose.msra.mxu0 0
    %986 = vmatprep.subr.bf16.mxu0 0
    %987 = vmatpush1.bf16.xpose.msra.mxu0 0
    %988 = vmatprep.subr.bf16.mxu0 0
    %989 = vmatpush1.bf16.xpose.msra.mxu0 0
    %990 = vmatprep.subr.bf16.mxu0 0
    %991 = vmatpush1.bf16.xpose.msra.mxu0 0
    %992 = vmatprep.subr.bf16.mxu0 0
    %993 = vmatpush1.bf16.xpose.msra.mxu0 0
    %994 = vmatprep.subr.bf16.mxu0 0
    %995 = vmatpush1.bf16.xpose.msra.mxu0 0
    %996 = vmatprep.subr.bf16.mxu0 0
    %997 = vmatpush1.bf16.xpose.msra.mxu0 0
    %998 = vmatprep.subr.bf16.mxu0 0
    %999 = vmatpush1.bf16.xpose.msra.mxu0 0
    %1000 = vmatprep.subr.bf16.mxu0 0
    %1001 = vmatpush1.bf16.xpose.msra.mxu0 0
    %1002 = vmatprep.mubr.bf16.mxu0 0
    %1003 = vmatmul.mubr.bf16.gmra.mrb[0].mxu0 %v965
    %v1004 = vpop.f32.mrb[0].mxu0
    %v1005 = vadd.f32 0.0, %v1004
    %v1006 = vpop.f32.mrb[0].mxu0
    %v1007 = vpop.f32.mrb[0].mxu0
    %v1008 = vpop.f32.mrb[0].mxu0
    %1009 = vdwg.mxu0
    %1010 = vrot.lane.b32.xlu0 %v238, 120
    %v1011 = vpop.permute.xlu0 %1010
    %1013 = vxpose.xlu0.c.b16.start [1/8] %v1011, 128
    %1014 = vxpose.xlu0.c.b16.cont [2/8] 0, 128
    %1015 = vxpose.xlu0.c.b16.cont [3/8] 0, 128
    %1016 = vxpose.xlu0.c.b16.cont [4/8] 0, 128
    %1017 = vxpose.xlu0.c.b16.cont [5/8] 0, 128
    %1018 = vxpose.xlu0.c.b16.cont [6/8] 0, 128
    %1019 = vxpose.xlu0.c.b16.cont [7/8] 0, 128
    %1020 = vxpose.xlu0.c.b16.end [8/8] 0, 128
    %v1021 = vpop.trf.xlu0
    %v1022 = vpop.trf.xlu0
    %v1023 = vpop.trf.xlu0
    %v1024 = vpop.trf.xlu0
    %v1025 = vpop.trf.xlu0
    %v1026 = vpop.trf.xlu0
    %v1027 = vpop.trf.xlu0
    %v1028 = vpop.trf.xlu0
    %1029 = vrot.lane.b32.xlu0 %v240, 120
    %v1030 = vpop.permute.xlu0 %1029
    %v1032 = vsel %vm259, %v1021, 0
    %v1035 = vsel %vm263, %v1030, 0
    %1037 = vmatprep.subr.bf16.mxu0 0
    %1038 = vmatpush1.bf16.msra.mxu0 %v1035
    %1039 = vmatprep.subr.bf16.mxu0 0
    %1040 = vmatpush1.bf16.msra.mxu0 0
    %1041 = vmatprep.subr.bf16.mxu0 0
    %1042 = vmatpush1.bf16.msra.mxu0 0
    %1043 = vmatprep.subr.bf16.mxu0 0
    %1044 = vmatpush1.bf16.msra.mxu0 0
    %1045 = vmatprep.subr.bf16.mxu0 0
    %1046 = vmatpush1.bf16.msra.mxu0 0
    %1047 = vmatprep.subr.bf16.mxu0 0
    %1048 = vmatpush1.bf16.msra.mxu0 0
    %1049 = vmatprep.subr.bf16.mxu0 0
    %1050 = vmatpush1.bf16.msra.mxu0 0
    %1051 = vmatprep.subr.bf16.mxu0 0
    %1052 = vmatpush1.bf16.msra.mxu0 0
    %1053 = vmatprep.subr.bf16.mxu0 0
    %1054 = vmatpush1.bf16.msra.mxu0 0
    %1055 = vmatprep.subr.bf16.mxu0 0
    %1056 = vmatpush1.bf16.msra.mxu0 0
    %1057 = vmatprep.subr.bf16.mxu0 0
    %1058 = vmatpush1.bf16.msra.mxu0 0
    %1059 = vmatprep.subr.bf16.mxu0 0
    %1060 = vmatpush1.bf16.msra.mxu0 0
    %1061 = vmatprep.subr.bf16.mxu0 0
    %1062 = vmatpush1.bf16.msra.mxu0 0
    %1063 = vmatprep.subr.bf16.mxu0 0
    %1064 = vmatpush1.bf16.msra.mxu0 0
    %1065 = vmatprep.subr.bf16.mxu0 0
    %1066 = vmatpush1.bf16.msra.mxu0 0
    %1067 = vmatprep.subr.bf16.mxu0 0
    %1068 = vmatpush1.bf16.msra.mxu0 0
    %1069 = vmatprep.mubr.bf16.mxu0 0
    %1070 = vmatmul.mubr.bf16.gmra.mrb[0].mxu0 %v1032
    %v1071 = vpop.f32.mrb[0].mxu0
    %v1072 = vadd.f32 0.0, %v1071
    %v1073 = vpop.f32.mrb[0].mxu0
    %v1074 = vpop.f32.mrb[0].mxu0
    %v1075 = vpop.f32.mrb[0].mxu0
    %1076 = vdwg.mxu0
    %v1077 = vsel %vm259, %v1072, -inf
    %1078 = vmax.xlane.f32.xlu0 %v1077
    %v1079 = vpop.xlane.xlu0 %1078
    %v1080 = vsub.f32 %v1072, %v1079
    %v1081 = vmul.f32 %v1080, 1.442695
    %v1082 = vpow.pop %v1081
    %v1083 = vsel %vm259, %v1082, 0.0
    %1084 = vadd.xlane.f32.xlu0 %v1083
    %v1085 = vpop.xlane.xlu0 %1084
    %v1086 = vrcp.pop %v1085
    %v1087 = vmul.f32 %v1082, %v1086
    %v1088 = vpack.c.bf16 %v1087, %v1087
    %1089 = vrot.lane.b32.xlu0 %v242, 120
    %v1090 = vpop.permute.xlu0 %1089
    %v1092 = vsel %vm259, %v1088, 0
    %v1095 = vsel %vm259, %v1090, 0
    %1097 = vmatprep.subr.bf16.mxu0 0
    %1098 = vmatpush1.bf16.xpose.msra.mxu0 %v1095
    %1099 = vmatprep.subr.bf16.mxu0 0
    %1100 = vmatpush1.bf16.xpose.msra.mxu0 0
    %1101 = vmatprep.subr.bf16.mxu0 0
    %1102 = vmatpush1.bf16.xpose.msra.mxu0 0
    %1103 = vmatprep.subr.bf16.mxu0 0
    %1104 = vmatpush1.bf16.xpose.msra.mxu0 0
    %1105 = vmatprep.subr.bf16.mxu0 0
    %1106 = vmatpush1.bf16.xpose.msra.mxu0 0
    %1107 = vmatprep.subr.bf16.mxu0 0
    %1108 = vmatpush1.bf16.xpose.msra.mxu0 0
    %1109 = vmatprep.subr.bf16.mxu0 0
    %1110 = vmatpush1.bf16.xpose.msra.mxu0 0
    %1111 = vmatprep.subr.bf16.mxu0 0
    %1112 = vmatpush1.bf16.xpose.msra.mxu0 0
    %1113 = vmatprep.subr.bf16.mxu0 0
    %1114 = vmatpush1.bf16.xpose.msra.mxu0 0
    %1115 = vmatprep.subr.bf16.mxu0 0
    %1116 = vmatpush1.bf16.xpose.msra.mxu0 0
    %1117 = vmatprep.subr.bf16.mxu0 0
    %1118 = vmatpush1.bf16.xpose.msra.mxu0 0
    %1119 = vmatprep.subr.bf16.mxu0 0
    %1120 = vmatpush1.bf16.xpose.msra.mxu0 0
    %1121 = vmatprep.subr.bf16.mxu0 0
    %1122 = vmatpush1.bf16.xpose.msra.mxu0 0
    %1123 = vmatprep.subr.bf16.mxu0 0
    %1124 = vmatpush1.bf16.xpose.msra.mxu0 0
    %1125 = vmatprep.subr.bf16.mxu0 0
    %1126 = vmatpush1.bf16.xpose.msra.mxu0 0
    %1127 = vmatprep.subr.bf16.mxu0 0
    %1128 = vmatpush1.bf16.xpose.msra.mxu0 0
    %1129 = vmatprep.mubr.bf16.mxu0 0
    %1130 = vmatmul.mubr.bf16.gmra.mrb[0].mxu0 %v1092
    %v1131 = vpop.f32.mrb[0].mxu0
    %v1132 = vadd.f32 0.0, %v1131
    %v1133 = vpop.f32.mrb[0].mxu0
    %v1134 = vpop.f32.mrb[0].mxu0
    %v1135 = vpop.f32.mrb[0].mxu0
    %1136 = vdwg.mxu0
    %1137 = vrot.lane.b32.xlu0 %v613, 120
    %v1138 = vpop.permute.xlu0 %1137
    %1140 = vxpose.xlu0.c.b16.start [1/8] %v1138, 128
    %1141 = vxpose.xlu0.c.b16.cont [2/8] 0, 128
    %1142 = vxpose.xlu0.c.b16.cont [3/8] 0, 128
    %1143 = vxpose.xlu0.c.b16.cont [4/8] 0, 128
    %1144 = vxpose.xlu0.c.b16.cont [5/8] 0, 128
    %1145 = vxpose.xlu0.c.b16.cont [6/8] 0, 128
    %1146 = vxpose.xlu0.c.b16.cont [7/8] 0, 128
    %1147 = vxpose.xlu0.c.b16.end [8/8] 0, 128
    %v1148 = vpop.trf.xlu0
    %v1149 = vpop.trf.xlu0
    %v1150 = vpop.trf.xlu0
    %v1151 = vpop.trf.xlu0
    %v1152 = vpop.trf.xlu0
    %v1153 = vpop.trf.xlu0
    %v1154 = vpop.trf.xlu0
    %v1155 = vpop.trf.xlu0
    %1156 = vrot.lane.b32.xlu0 %v632, 120
    %v1157 = vpop.permute.xlu0 %1156
    %v1159 = vsel %vm259, %v1148, 0
    %v1162 = vsel %vm263, %v1157, 0
    %1164 = vmatprep.subr.bf16.mxu0 0
    %1165 = vmatpush1.bf16.msra.mxu0 %v1162
    %1166 = vmatprep.subr.bf16.mxu0 0
    %1167 = vmatpush1.bf16.msra.mxu0 0
    %1168 = vmatprep.subr.bf16.mxu0 0
    %1169 = vmatpush1.bf16.msra.mxu0 0
    %1170 = vmatprep.subr.bf16.mxu0 0
    %1171 = vmatpush1.bf16.msra.mxu0 0
    %1172 = vmatprep.subr.bf16.mxu0 0
    %1173 = vmatpush1.bf16.msra.mxu0 0
    %1174 = vmatprep.subr.bf16.mxu0 0
    %1175 = vmatpush1.bf16.msra.mxu0 0
    %1176 = vmatprep.subr.bf16.mxu0 0
    %1177 = vmatpush1.bf16.msra.mxu0 0
    %1178 = vmatprep.subr.bf16.mxu0 0
    %1179 = vmatpush1.bf16.msra.mxu0 0
    %1180 = vmatprep.subr.bf16.mxu0 0
    %1181 = vmatpush1.bf16.msra.mxu0 0
    %1182 = vmatprep.subr.bf16.mxu0 0
    %1183 = vmatpush1.bf16.msra.mxu0 0
    %1184 = vmatprep.subr.bf16.mxu0 0
    %1185 = vmatpush1.bf16.msra.mxu0 0
    %1186 = vmatprep.subr.bf16.mxu0 0
    %1187 = vmatpush1.bf16.msra.mxu0 0
    %1188 = vmatprep.subr.bf16.mxu0 0
    %1189 = vmatpush1.bf16.msra.mxu0 0
    %1190 = vmatprep.subr.bf16.mxu0 0
    %1191 = vmatpush1.bf16.msra.mxu0 0
    %1192 = vmatprep.subr.bf16.mxu0 0
    %1193 = vmatpush1.bf16.msra.mxu0 0
    %1194 = vmatprep.subr.bf16.mxu0 0
    %1195 = vmatpush1.bf16.msra.mxu0 0
    %1196 = vmatprep.mubr.bf16.mxu0 0
    %1197 = vmatmul.mubr.bf16.gmra.mrb[0].mxu0 %v1159
    %v1198 = vpop.f32.mrb[0].mxu0
    %v1199 = vadd.f32 0.0, %v1198
    %v1200 = vpop.f32.mrb[0].mxu0
    %v1201 = vpop.f32.mrb[0].mxu0
    %v1202 = vpop.f32.mrb[0].mxu0
    %1203 = vdwg.mxu0
    %v1204 = vsel %vm259, %v1199, -inf
    %1205 = vmax.xlane.f32.xlu0 %v1204
    %v1206 = vpop.xlane.xlu0 %1205
    %v1207 = vsub.f32 %v1199, %v1206
    %v1208 = vmul.f32 %v1207, 1.442695
    %v1209 = vpow.pop %v1208
    %v1210 = vsel %vm259, %v1209, 0.0
    %1211 = vadd.xlane.f32.xlu0 %v1210
    %v1212 = vpop.xlane.xlu0 %1211
    %v1213 = vrcp.pop %v1212
    %v1214 = vmul.f32 %v1209, %v1213
    %v1215 = vpack.c.bf16 %v1214, %v1214
    %1216 = vrot.lane.b32.xlu0 %v692, 120
    %v1217 = vpop.permute.xlu0 %1216
    %v1219 = vsel %vm259, %v1215, 0
    %v1222 = vsel %vm259, %v1217, 0
    %1224 = vmatprep.subr.bf16.mxu0 0
    %1225 = vmatpush1.bf16.xpose.msra.mxu0 %v1222
    %1226 = vmatprep.subr.bf16.mxu0 0
    %1227 = vmatpush1.bf16.xpose.msra.mxu0 0
    %1228 = vmatprep.subr.bf16.mxu0 0
    %1229 = vmatpush1.bf16.xpose.msra.mxu0 0
    %1230 = vmatprep.subr.bf16.mxu0 0
    %1231 = vmatpush1.bf16.xpose.msra.mxu0 0
    %1232 = vmatprep.subr.bf16.mxu0 0
    %1233 = vmatpush1.bf16.xpose.msra.mxu0 0
    %1234 = vmatprep.subr.bf16.mxu0 0
    %1235 = vmatpush1.bf16.xpose.msra.mxu0 0
    %1236 = vmatprep.subr.bf16.mxu0 0
    %1237 = vmatpush1.bf16.xpose.msra.mxu0 0
    %1238 = vmatprep.subr.bf16.mxu0 0
    %1239 = vmatpush1.bf16.xpose.msra.mxu0 0
    %1240 = vmatprep.subr.bf16.mxu0 0
    %1241 = vmatpush1.bf16.xpose.msra.mxu0 0
    %1242 = vmatprep.subr.bf16.mxu0 0
    %1243 = vmatpush1.bf16.xpose.msra.mxu0 0
    %1244 = vmatprep.subr.bf16.mxu0 0
    %1245 = vmatpush1.bf16.xpose.msra.mxu0 0
    %1246 = vmatprep.subr.bf16.mxu0 0
    %1247 = vmatpush1.bf16.xpose.msra.mxu0 0
    %1248 = vmatprep.subr.bf16.mxu0 0
    %1249 = vmatpush1.bf16.xpose.msra.mxu0 0
    %1250 = vmatprep.subr.bf16.mxu0 0
    %1251 = vmatpush1.bf16.xpose.msra.mxu0 0
    %1252 = vmatprep.subr.bf16.mxu0 0
    %1253 = vmatpush1.bf16.xpose.msra.mxu0 0
    %1254 = vmatprep.subr.bf16.mxu0 0
    %1255 = vmatpush1.bf16.xpose.msra.mxu0 0
    %1256 = vmatprep.mubr.bf16.mxu0 0
    %1257 = vmatmul.mubr.bf16.gmra.mrb[0].mxu0 %v1219
    %v1258 = vpop.f32.mrb[0].mxu0
    %v1259 = vadd.f32 0.0, %v1258
    %v1260 = vpop.f32.mrb[0].mxu0
    %v1261 = vpop.f32.mrb[0].mxu0
    %v1262 = vpop.f32.mrb[0].mxu0
    %1263 = vdwg.mxu0
    %1265 = vrot.lane.b32.xlu0 %v1005, 8
    %v1266 = vpop.permute.xlu0 %1265
    %1269 = vrot.lane.b32.xlu0 %v1132, 16
    %v1270 = vpop.permute.xlu0 %1269
    %1273 = vrot.lane.b32.xlu0 %v1259, 24
    %v1274 = vpop.permute.xlu0 %1273
    %v1276 = vsel %vm259, %v878, %v1266
    %v1277 = vsel %vm752, %v1276, %v1270
    %v1278 = vsel %vm754, %v1277, %v1274
    %v1279 = vpack.c.bf16 %v1278, %v755
    %v1280 = vlaneseq
    %v1281 = vshrl.u32 %v1280, 7
    %v1282 = vsub.s32 2, %v1281
    %v1283 = vrot.slane %v30, %v1282
    %v1288 = vunpack.c.l.b16 %v43
    %v1289 = vunpack.c.l.b16 %v44
    %v1290 = vunpack.c.l.b16 %v45
    %v1291 = vunpack.c.l.b16 %v46
    %v1292 = vpack.c.b16 %v1289, %v1288
    %v1293 = vpack.c.b16 %v1291, %v1290
    %v1297 = vsel %vm60, %v1279, 0
    %1299 = vmatprep.subr.bf16.mxu0 0
    %1300 = vmatpush1.bf16.msra.mxu0 %v1292
    %1301 = vmatprep.subr.bf16.mxu0 0
    %1302 = vmatpush1.bf16.msra.mxu0 %v1293
    %1303 = vmatprep.subr.bf16.mxu0 0
    %1304 = vmatpush1.bf16.msra.mxu0 0
    %1305 = vmatprep.subr.bf16.mxu0 0
    %1306 = vmatpush1.bf16.msra.mxu0 0
    %1307 = vmatprep.subr.bf16.mxu0 0
    %1308 = vmatpush1.bf16.msra.mxu0 0
    %1309 = vmatprep.subr.bf16.mxu0 0
    %1310 = vmatpush1.bf16.msra.mxu0 0
    %1311 = vmatprep.subr.bf16.mxu0 0
    %1312 = vmatpush1.bf16.msra.mxu0 0
    %1313 = vmatprep.subr.bf16.mxu0 0
    %1314 = vmatpush1.bf16.msra.mxu0 0
    %1315 = vmatprep.subr.bf16.mxu0 0
    %1316 = vmatpush1.bf16.msra.mxu0 0
    %1317 = vmatprep.subr.bf16.mxu0 0
    %1318 = vmatpush1.bf16.msra.mxu0 0
    %1319 = vmatprep.subr.bf16.mxu0 0
    %1320 = vmatpush1.bf16.msra.mxu0 0
    %1321 = vmatprep.subr.bf16.mxu0 0
    %1322 = vmatpush1.bf16.msra.mxu0 0
    %1323 = vmatprep.subr.bf16.mxu0 0
    %1324 = vmatpush1.bf16.msra.mxu0 0
    %1325 = vmatprep.subr.bf16.mxu0 0
    %1326 = vmatpush1.bf16.msra.mxu0 0
    %1327 = vmatprep.subr.bf16.mxu0 0
    %1328 = vmatpush1.bf16.msra.mxu0 0
    %1329 = vmatprep.subr.bf16.mxu0 0
    %1330 = vmatpush1.bf16.msra.mxu0 0
    %1331 = vmatprep.mubr.bf16.mxu0 0
    %1332 = vmatmul.mubr.bf16.gmra.mrb[0].mxu0 %v1297
    %v1333 = vpop.f32.mrb[0].mxu0
    %v1334 = vadd.f32 %v1283, %v1333
    %v1335 = vpop.f32.mrb[0].mxu0
    %v1336 = vpop.f32.mrb[0].mxu0
    %v1337 = vadd.f32 %v1283, %v1336
    %v1338 = vpop.f32.mrb[0].mxu0
    %1339 = vdwg.mxu0
    %v1340 = vadd.f32 %v28, %v1334
    %v1341 = vadd.f32 %v29, %v1337
    %v1342 = vsel %vm60, %v1340, 0.0
    %1343 = vadd.xlane.f32.xlu0 %v1342
    %v1344 = vpop.xlane.xlu0 %1343
    %v1345 = vsel %vm60, %v1341, 0.0
    %1346 = vadd.xlane.f32.xlu0 %v1345
    %v1347 = vpop.xlane.xlu0 %1346
    %v1348 = vmul.f32 %v1344, %v67
    %v1349 = vmul.f32 %v1347, %v67
    %v1350 = vsub.f32 %v1340, %v1348
    %v1351 = vsub.f32 %v1341, %v1349
    %v1352 = vmul.f32 %v1350, %v1350
    %v1353 = vmul.f32 %v1351, %v1351
    %v1354 = vsel %vm60, %v1352, 0.0
    %1355 = vadd.xlane.f32.xlu0 %v1354
    %v1356 = vpop.xlane.xlu0 %1355
    %v1357 = vsel %vm60, %v1353, 0.0
    %1358 = vadd.xlane.f32.xlu0 %v1357
    %v1359 = vpop.xlane.xlu0 %1358
    %v1360 = vmul.f32 %v1356, %v67
    %v1361 = vmul.f32 %v1359, %v67
    %v1362 = vadd.f32 %v1360, 1e-05
    %v1363 = vadd.f32 %v1361, 1e-05
    %v1364 = vrsqrt.pop %v1362
    %v1365 = vrsqrt.pop %v1363
    %v1366 = vmul.f32 %v1350, %v1364
    %v1367 = vmul.f32 %v1351, %v1365
    %v1368 = vlaneseq
    %v1369 = vshrl.u32 %v1368, 7
    %v1370 = vsub.s32 3, %v1369
    %v1371 = vrot.slane %v30, %v1370
    %v1372 = vmul.f32 %v1366, %v1371
    %v1373 = vmul.f32 %v1367, %v1371
    %v1374 = vlaneseq
    %v1375 = vshrl.u32 %v1374, 7
    %v1376 = vsub.s32 4, %v1375
    %v1377 = vrot.slane %v30, %v1376
    %v1378 = vadd.f32 %v1372, %v1377
    %v1379 = vadd.f32 %v1373, %v1377
    %v1380 = vpack.c.bf16 %v1379, %v1378
    %v1382 = vlaneseq
    %v1383 = vshrl.u32 %v1382, 7
    %v1384 = vsub.s32 0, %v1383
    %v1385 = vrot.slane %v51, %v1384
    %v1391 = vunpack.c.l.b16 %v47
    %v1392 = vunpack.c.l.b16 %v48
    %v1393 = vunpack.c.l.b16 %v49
    %v1394 = vunpack.c.l.b16 %v50
    %v1395 = vpack.c.b16 %v1392, %v1391
    %v1396 = vpack.c.b16 %v1394, %v1393
    %v1400 = vsel %vm60, %v1380, 0
    %1402 = vmatprep.subr.bf16.mxu0 0
    %1403 = vmatpush1.bf16.msra.mxu0 %v1395
    %1404 = vmatprep.subr.bf16.mxu0 0
    %1405 = vmatpush1.bf16.msra.mxu0 %v1396
    %1406 = vmatprep.subr.bf16.mxu0 0
    %1407 = vmatpush1.bf16.msra.mxu0 0
    %1408 = vmatprep.subr.bf16.mxu0 0
    %1409 = vmatpush1.bf16.msra.mxu0 0
    %1410 = vmatprep.subr.bf16.mxu0 0
    %1411 = vmatpush1.bf16.msra.mxu0 0
    %1412 = vmatprep.subr.bf16.mxu0 0
    %1413 = vmatpush1.bf16.msra.mxu0 0
    %1414 = vmatprep.subr.bf16.mxu0 0
    %1415 = vmatpush1.bf16.msra.mxu0 0
    %1416 = vmatprep.subr.bf16.mxu0 0
    %1417 = vmatpush1.bf16.msra.mxu0 0
    %1418 = vmatprep.subr.bf16.mxu0 0
    %1419 = vmatpush1.bf16.msra.mxu0 0
    %1420 = vmatprep.subr.bf16.mxu0 0
    %1421 = vmatpush1.bf16.msra.mxu0 0
    %1422 = vmatprep.subr.bf16.mxu0 0
    %1423 = vmatpush1.bf16.msra.mxu0 0
    %1424 = vmatprep.subr.bf16.mxu0 0
    %1425 = vmatpush1.bf16.msra.mxu0 0
    %1426 = vmatprep.subr.bf16.mxu0 0
    %1427 = vmatpush1.bf16.msra.mxu0 0
    %1428 = vmatprep.subr.bf16.mxu0 0
    %1429 = vmatpush1.bf16.msra.mxu0 0
    %1430 = vmatprep.subr.bf16.mxu0 0
    %1431 = vmatpush1.bf16.msra.mxu0 0
    %1432 = vmatprep.subr.bf16.mxu0 0
    %1433 = vmatpush1.bf16.msra.mxu0 0
    %1434 = vmatprep.mubr.bf16.mxu0 0
    %1435 = vmatmul.mubr.bf16.gmra.mrb[0].mxu0 %v1400
    %v1436 = vpop.f32.mrb[0].mxu0
    %v1437 = vadd.f32 %v1385, %v1436
    %v1438 = vpop.f32.mrb[0].mxu0
    %v1439 = vpop.f32.mrb[0].mxu0
    %v1440 = vadd.f32 %v1385, %v1439
    %v1441 = vpop.f32.mrb[0].mxu0
    %1442 = vdwg.mxu0
    %v1443 = vmul.f32 %v1437, 0.5
    %v1444 = vmul.f32 %v1440, 0.5
    %v1445 = vmul.f32 %v1437, 0.044715
    %v1446 = vmul.f32 %v1440, 0.044715
    %v1447 = vmul.f32 %v1445, %v1437
    %v1448 = vmul.f32 %v1446, %v1440
    %v1449 = vmul.f32 %v1447, %v1437
    %v1450 = vmul.f32 %v1448, %v1440
    %v1451 = vadd.f32 %v1437, %v1449
    %v1452 = vadd.f32 %v1440, %v1450
    %v1453 = vmul.f32 %v1451, 0.7978846
    %v1454 = vmul.f32 %v1452, 0.7978846
    %v1455 = vtanh.pop %v1453
    %v1456 = vtanh.pop %v1454
    %v1457 = vadd.f32 %v1455, 1.0
    %v1458 = vadd.f32 %v1456, 1.0
    %v1459 = vmul.f32 %v1443, %v1457
    %v1460 = vmul.f32 %v1444, %v1458
    %v1461 = vpack.c.bf16 %v1460, %v1459
    %v1462 = vlaneseq
    %v1463 = vshrl.u32 %v1462, 7
    %v1464 = vsub.s32 5, %v1463
    %v1465 = vrot.slane %v30, %v1464
    %v1474 = vunpack.c.l.b16 %v52
    %v1475 = vunpack.c.l.b16 %v53
    %v1476 = vunpack.c.l.b16 %v54
    %v1477 = vunpack.c.l.b16 %v55
    %v1478 = vunpack.c.l.b16 %v56
    %v1479 = vunpack.c.l.b16 %v57
    %v1480 = vunpack.c.l.b16 %v58
    %v1481 = vunpack.c.l.b16 %v59
    %v1482 = vpack.c.b16 %v1475, %v1474
    %v1483 = vpack.c.b16 %v1477, %v1476
    %v1484 = vpack.c.b16 %v1479, %v1478
    %v1485 = vpack.c.b16 %v1481, %v1480
    %vm1490 = vcmask 523264
    %v1492 = vsel %vm1490, %v1461, 0
    %1494 = vmatprep.subr.bf16.mxu0 0
    %1495 = vmatpush1.bf16.msra.mxu0 %v1482
    %1496 = vmatprep.subr.bf16.mxu0 0
    %1497 = vmatpush1.bf16.msra.mxu0 %v1483
    %1498 = vmatprep.subr.bf16.mxu0 0
    %1499 = vmatpush1.bf16.msra.mxu0 %v1484
    %1500 = vmatprep.subr.bf16.mxu0 0
    %1501 = vmatpush1.bf16.msra.mxu0 %v1485
    %1502 = vmatprep.subr.bf16.mxu0 0
    %1503 = vmatpush1.bf16.msra.mxu0 0
    %1504 = vmatprep.subr.bf16.mxu0 0
    %1505 = vmatpush1.bf16.msra.mxu0 0
    %1506 = vmatprep.subr.bf16.mxu0 0
    %1507 = vmatpush1.bf16.msra.mxu0 0
    %1508 = vmatprep.subr.bf16.mxu0 0
    %1509 = vmatpush1.bf16.msra.mxu0 0
    %1510 = vmatprep.subr.bf16.mxu0 0
    %1511 = vmatpush1.bf16.msra.mxu0 0
    %1512 = vmatprep.subr.bf16.mxu0 0
    %1513 = vmatpush1.bf16.msra.mxu0 0
    %1514 = vmatprep.subr.bf16.mxu0 0
    %1515 = vmatpush1.bf16.msra.mxu0 0
    %1516 = vmatprep.subr.bf16.mxu0 0
    %1517 = vmatpush1.bf16.msra.mxu0 0
    %1518 = vmatprep.subr.bf16.mxu0 0
    %1519 = vmatpush1.bf16.msra.mxu0 0
    %1520 = vmatprep.subr.bf16.mxu0 0
    %1521 = vmatpush1.bf16.msra.mxu0 0
    %1522 = vmatprep.subr.bf16.mxu0 0
    %1523 = vmatpush1.bf16.msra.mxu0 0
    %1524 = vmatprep.subr.bf16.mxu0 0
    %1525 = vmatpush1.bf16.msra.mxu0 0
    %1526 = vmatprep.mubr.bf16.mxu0 0
    %1527 = vmatmul.mubr.bf16.gmra.mrb[0].mxu0 %v1492
    %v1528 = vpop.f32.mrb[0].mxu0
    %v1529 = vadd.f32 %v1465, %v1528
    %v1530 = vpop.f32.mrb[0].mxu0
    %v1531 = vpop.f32.mrb[0].mxu0
    %v1532 = vadd.f32 %v1465, %v1531
    %v1533 = vpop.f32.mrb[0].mxu0
    %1534 = vdwg.mxu0
    %v1535 = vadd.f32 %v1340, %v1529
    %v1536 = vadd.f32 %v1341, %v1532
    %1537 = vst.msk [vmem:[#allocation2] sm:$0xff] %vm60, %v1535
    %1538 = vst.msk [vmem:[#allocation2 + $0x8] sm:$0xff] %vm60, %v1536
    // Predicated region
    $region30: #{tpu_custom_call.1} parent=1 // pred_check
      _
    $region31: #{tpu_custom_call.1} parent=1 // pred_check_branch
      %1540 = sbr.rel (0) target = $region33
    $region32: #{tpu_custom_call.1} parent=1 // pred_region
      %s1542 = ssub.s32 256, 256
      %1543 = vsyncadd [#allocation3], %s1542
      %s1544 = sshll.u32 [#allocation2], 4
      %s1545 = int_to_ptr.vmem [resolvable:$true] %s1544
      %1550 = dma.vmem_to_hbm [thread:$0]  %s1545, 256, %s7, [#allocation3], 128, 128, 8
    $region33: #{tpu_custom_call.1} parent=1 // pred_fallthru
      _
    // Predicated region
    $region34: #{tpu_custom_call.1} parent=1 // pred_check
      _
    $region35: #{tpu_custom_call.1} parent=1 // pred_check_branch
      %1552 = sbr.rel (0) target = $region37
    $region36: #{tpu_custom_call.1} parent=1 // pred_region
      %1553 = dma.done [#allocation3], 256
    $region37: #{tpu_custom_call.1} parent=1 // pred_fallthru
      _
    %1554 = vsyncpa [#allocation3], 1

// kernel: tpu_custom_call.1
$region0: #{tpu_custom_call.1}
  #allocation0 [shape = 'u32[]', space=smem, size = 0x4, offset = 0x4, fixed_abs, tag = 'smem constant byte address 0x4 - core index']
  #allocation1 [shape = 'u32[144,128]{1,0:T(1,128)}', space=vmem, size = 0x12000, scoped, tag = 'internal scratch']
  %s0 = inlined_call_operand.vmem [shape: f32[2,8,32], index: 0, kind: input, shape index: {}]
  %s1 = inlined_call_operand.vmem [shape: f32[6,32], index: 1, kind: input, shape index: {}]
  %s2 = inlined_call_operand.vmem [shape: bf16[96,32], index: 2, kind: input, shape index: {}]
  %s3 = inlined_call_operand.vmem [shape: bf16[32,32], index: 3, kind: input, shape index: {}]
  %s4 = inlined_call_operand.vmem [shape: bf16[32,64], index: 4, kind: input, shape index: {}]
  %s5 = inlined_call_operand.vmem [shape: f32[1,64], index: 5, kind: input, shape index: {}]
  %s6 = inlined_call_operand.vmem [shape: bf16[64,32], index: 6, kind: input, shape index: {}]
  %s7 = inlined_call_operand.hbm [shape: f32[2,8,32], index: 7, kind: output, shape index: {}]
  %s8 = sld [smem:[#allocation0]]
  $region38: #{tpu_custom_call.1} parent=0
    _
  %s10 = ssub.s32 1, %s8
  %s11 = scalar_select 0, %s10, %s8
  $region1: #{tpu_custom_call.1} parent=0
    #allocation2 [shape = 'u8[8192]{0}', space=vmem, size = 0x2000, scoped, tag = 'output window, operand 0, single buffered']
    #allocation3 [shape = 's32[1]{0}', space=sflag, size = 0x4, scoped, tag = 'scoped memory for tpu_custom_call.1']
    %12 = vsyncpa [#allocation3], 0
    // Predicated region
    $region2: #{tpu_custom_call.1} parent=1 // pred_check
      _
    $region3: #{tpu_custom_call.1} parent=1 // pred_check_branch
      %14 = sbr.rel (0) target = $region5
    $region4: #{tpu_custom_call.1} parent=1 // pred_region
      _
    $region5: #{tpu_custom_call.1} parent=1 // pred_fallthru
      _
    // Predicated region
    $region6: #{tpu_custom_call.1} parent=1 // pred_check
      _
    $region7: #{tpu_custom_call.1} parent=1 // pred_check_branch
      %16 = sbr.rel (0) target = $region9
    $region8: #{tpu_custom_call.1} parent=1 // pred_region
      _
    $region9: #{tpu_custom_call.1} parent=1 // pred_fallthru
      _
    // Predicated region
    $region10: #{tpu_custom_call.1} parent=1 // pred_check
      _
    $region11: #{tpu_custom_call.1} parent=1 // pred_check_branch
      %18 = sbr.rel (0) target = $region13
    $region12: #{tpu_custom_call.1} parent=1 // pred_region
      _
    $region13: #{tpu_custom_call.1} parent=1 // pred_fallthru
      _
    // Predicated region
    $region14: #{tpu_custom_call.1} parent=1 // pred_check
      _
    $region15: #{tpu_custom_call.1} parent=1 // pred_check_branch
      %20 = sbr.rel (0) target = $region17
    $region16: #{tpu_custom_call.1} parent=1 // pred_region
      _
    $region17: #{tpu_custom_call.1} parent=1 // pred_fallthru
      _
    // Predicated region
    $region18: #{tpu_custom_call.1} parent=1 // pred_check
      _
    $region19: #{tpu_custom_call.1} parent=1 // pred_check_branch
      %22 = sbr.rel (0) target = $region21
    $region20: #{tpu_custom_call.1} parent=1 // pred_region
      _
    $region21: #{tpu_custom_call.1} parent=1 // pred_fallthru
      _
    // Predicated region
    $region22: #{tpu_custom_call.1} parent=1 // pred_check
      _
    $region23: #{tpu_custom_call.1} parent=1 // pred_check_branch
      %24 = sbr.rel (0) target = $region25
    $region24: #{tpu_custom_call.1} parent=1 // pred_region
      _
    $region25: #{tpu_custom_call.1} parent=1 // pred_fallthru
      _
    // Predicated region
    $region26: #{tpu_custom_call.1} parent=1 // pred_check
      _
    $region27: #{tpu_custom_call.1} parent=1 // pred_check_branch
      %26 = sbr.rel (0) target = $region29
    $region28: #{tpu_custom_call.1} parent=1 // pred_region
      _
    $region29: #{tpu_custom_call.1} parent=1 // pred_fallthru
      _
    %v28 = vld [vmem:[%s0] sm:$0xff]
    %v29 = vld [vmem:[%s0 + $0x8] sm:$0xff]
    %v30 = vld [vmem:[%s1] sm:$0x3f]
    %v31 = vld [vmem:[%s2] sm:$0xf]
    %v32 = vld [vmem:[%s2 + $0x4] sm:$0xf]
    %v33 = vld [vmem:[%s2 + $0x8] sm:$0xf]
    %v34 = vld [vmem:[%s2 + $0xc] sm:$0xf]
    %v35 = vld [vmem:[%s2 + $0x10] sm:$0xf]
    %v36 = vld [vmem:[%s2 + $0x14] sm:$0xf]
    %v37 = vld [vmem:[%s2 + $0x18] sm:$0xf]
    %v38 = vld [vmem:[%s2 + $0x1c] sm:$0xf]
    %v39 = vld [vmem:[%s2 + $0x20] sm:$0xf]
    %v40 = vld [vmem:[%s2 + $0x24] sm:$0xf]
    %v41 = vld [vmem:[%s2 + $0x28] sm:$0xf]
    %v42 = vld [vmem:[%s2 + $0x2c] sm:$0xf]
    %v43 = vld [vmem:[%s3] sm:$0xf]
    %v44 = vld [vmem:[%s3 + $0x4] sm:$0xf]
    %v45 = vld [vmem:[%s3 + $0x8] sm:$0xf]
    %v46 = vld [vmem:[%s3 + $0xc] sm:$0xf]
    %v47 = vld [vmem:[%s4] sm:$0xf]
    %v48 = vld [vmem:[%s4 + $0x4] sm:$0xf]
    %v49 = vld [vmem:[%s4 + $0x8] sm:$0xf]
    %v50 = vld [vmem:[%s4 + $0xc] sm:$0xf]
    %v51 = vld [vmem:[%s5] sm:$0x1]
    %v52 = vld [vmem:[%s6] sm:$0xf]
    %v53 = vld [vmem:[%s6 + $0x4] sm:$0xf]
    %v54 = vld [vmem:[%s6 + $0x8] sm:$0xf]
    %v55 = vld [vmem:[%s6 + $0xc] sm:$0xf]
    %v56 = vld [vmem:[%s6 + $0x10] sm:$0xf]
    %v57 = vld [vmem:[%s6 + $0x14] sm:$0xf]
    %v58 = vld [vmem:[%s6 + $0x18] sm:$0xf]
    %v59 = vld [vmem:[%s6 + $0x1c] sm:$0xf]
    %vm60 = vcmask 261120
    %v61 = vsel %vm60, %v28, 0.0
    %62 = vadd.xlane.f32.xlu0 %v61
    %v63 = vpop.xlane.xlu0 %62
    %v64 = vsel %vm60, %v29, 0.0
    %65 = vadd.xlane.f32.xlu0 %v64
    %v66 = vpop.xlane.xlu0 %65
    %v67 = vrcp.pop 32.0
    %v68 = vmul.f32 %v63, %v67
    %v69 = vmul.f32 %v66, %v67
    %v70 = vsub.f32 %v28, %v68
    %v71 = vsub.f32 %v29, %v69
    %v72 = vmul.f32 %v70, %v70
    %v73 = vmul.f32 %v71, %v71
    %v74 = vsel %vm60, %v72, 0.0
    %75 = vadd.xlane.f32.xlu0 %v74
    %v76 = vpop.xlane.xlu0 %75
    %v77 = vsel %vm60, %v73, 0.0
    %78 = vadd.xlane.f32.xlu0 %v77
    %v79 = vpop.xlane.xlu0 %78
    %v80 = vmul.f32 %v76, %v67
    %v81 = vmul.f32 %v79, %v67
    %v82 = vadd.f32 %v80, 1e-05
    %v83 = vadd.f32 %v81, 1e-05
    %v84 = vrsqrt.pop %v82
    %v85 = vrsqrt.pop %v83
    %v86 = vmul.f32 %v70, %v84
    %v87 = vmul.f32 %v71, %v85
    %v88 = vlaneseq
    %v89 = vshrl.u32 %v88, 7
    %v90 = vsub.s32 0, %v89
    %v91 = vrot.slane %v30, %v90
    %v92 = vmul.f32 %v86, %v91
    %v93 = vmul.f32 %v87, %v91
    %v94 = vlaneseq
    %v95 = vshrl.u32 %v94, 7
    %v96 = vsub.s32 1, %v95
    %v97 = vrot.slane %v30, %v96
    %v98 = vadd.f32 %v92, %v97
    %v99 = vadd.f32 %v93, %v97
    %v100 = vpack.c.bf16 %v99, %v98
    %v113 = vunpack.c.l.b16 %v31
    %v114 = vunpack.c.l.b16 %v32
    %v115 = vunpack.c.l.b16 %v33
    %v116 = vunpack.c.l.b16 %v34
    %v117 = vunpack.c.l.b16 %v35
    %v118 = vunpack.c.l.b16 %v36
    %v119 = vunpack.c.l.b16 %v37
    %v120 = vunpack.c.l.b16 %v38
    %v121 = vunpack.c.l.b16 %v39
    %v122 = vunpack.c.l.b16 %v40
    %v123 = vunpack.c.l.b16 %v41
    %v124 = vunpack.c.l.b16 %v42
    %v125 = vpack.c.b16 %v114, %v113
    %v126 = vpack.c.b16 %v116, %v115
    %v127 = vpack.c.b16 %v118, %v117
    %v128 = vpack.c.b16 %v120, %v119
    %v129 = vpack.c.b16 %v122, %v121
    %v130 = vpack.c.b16 %v124, %v123
    %v132 = vsel %vm60, %v125, 0
    %v135 = vsel %vm60, %v126, 0
    %v138 = vsel %vm60, %v127, 0
    %v141 = vsel %vm60, %v128, 0
    %v144 = vsel %vm60, %v129, 0
    %v147 = vsel %vm60, %v130, 0
    %v150 = vsel %vm60, %v100, 0
    %152 = vmatprep.subr.bf16.mxu0 0
    %153 = vmatpush1.bf16.xpose.msra.mxu0 %v150
    %154 = vmatprep.subr.bf16.mxu0 0
    %155 = vmatpush1.bf16.xpose.msra.mxu0 0
    %156 = vmatprep.subr.bf16.mxu0 0
    %157 = vmatpush1.bf16.xpose.msra.mxu0 0
    %158 = vmatprep.subr.bf16.mxu0 0
    %159 = vmatpush1.bf16.xpose.msra.mxu0 0
    %160 = vmatprep.subr.bf16.mxu0 0
    %161 = vmatpush1.bf16.xpose.msra.mxu0 0
    %162 = vmatprep.subr.bf16.mxu0 0
    %163 = vmatpush1.bf16.xpose.msra.mxu0 0
    %164 = vmatprep.subr.bf16.mxu0 0
    %165 = vmatpush1.bf16.xpose.msra.mxu0 0
    %166 = vmatprep.subr.bf16.mxu0 0
    %167 = vmatpush1.bf16.xpose.msra.mxu0 0
    %168 = vmatprep.subr.bf16.mxu0 0
    %169 = vmatpush1.bf16.xpose.msra.mxu0 0
    %170 = vmatprep.subr.bf16.mxu0 0
    %171 = vmatpush1.bf16.xpose.msra.mxu0 0
    %172 = vmatprep.subr.bf16.mxu0 0
    %173 = vmatpush1.bf16.xpose.msra.mxu0 0
    %174 = vmatprep.subr.bf16.mxu0 0
    %175 = vmatpush1.bf16.xpose.msra.mxu0 0
    %176 = vmatprep.subr.bf16.mxu0 0
    %177 = vmatpush1.bf16.xpose.msra.mxu0 0
    %178 = vmatprep.subr.bf16.mxu0 0
    %179 = vmatpush1.bf16.xpose.msra.mxu0 0
    %180 = vmatprep.subr.bf16.mxu0 0
    %181 = vmatpush1.bf16.xpose.msra.mxu0 0
    %182 = vmatprep.subr.bf16.mxu0 0
    %183 = vmatpush1.bf16.xpose.msra.mxu0 0
    %184 = vmatprep.mubr.bf16.mxu0 0
    %185 = vmatmul.mubr.bf16.gmra.mrb[0].mxu0 %v132
    %v186 = vpop.f32.mrb[0].mxu0
    %v187 = vadd.f32 0.0, %v186
    %v188 = vpop.f32.mrb[0].mxu0
    %v189 = vpop.f32.mrb[0].mxu0
    %v190 = vadd.f32 0.0, %v189
    %v191 = vpop.f32.mrb[0].mxu0
    %192 = vmatprep.mubr.bf16.mxu0 0
    %193 = vmatmul.mubr.bf16.gmra.mrb[0].mxu0 %v135
    %v194 = vpop.f32.mrb[0].mxu0
    %v195 = vadd.f32 0.0, %v194
    %v196 = vpop.f32.mrb[0].mxu0
    %v197 = vpop.f32.mrb[0].mxu0
    %v198 = vadd.f32 0.0, %v197
    %v199 = vpop.f32.mrb[0].mxu0
    %200 = vmatprep.mubr.bf16.mxu0 0
    %201 = vmatmul.mubr.bf16.gmra.mrb[0].mxu0 %v138
    %v202 = vpop.f32.mrb[0].mxu0
    %v203 = vadd.f32 0.0, %v202
    %v204 = vpop.f32.mrb[0].mxu0
    %v205 = vpop.f32.mrb[0].mxu0
    %v206 = vadd.f32 0.0, %v205
    %v207 = vpop.f32.mrb[0].mxu0
    %208 = vmatprep.mubr.bf16.mxu0 0
    %209 = vmatmul.mubr.bf16.gmra.mrb[0].mxu0 %v141
    %v210 = vpop.f32.mrb[0].mxu0
    %v211 = vadd.f32 0.0, %v210
    %v212 = vpop.f32.mrb[0].mxu0
    %v213 = vpop.f32.mrb[0].mxu0
    %v214 = vadd.f32 0.0, %v213
    %v215 = vpop.f32.mrb[0].mxu0
    %216 = vmatprep.mubr.bf16.mxu0 0
    %217 = vmatmul.mubr.bf16.gmra.mrb[0].mxu0 %v144
    %v218 = vpop.f32.mrb[0].mxu0
    %v219 = vadd.f32 0.0, %v218
    %v220 = vpop.f32.mrb[0].mxu0
    %v221 = vpop.f32.mrb[0].mxu0
    %v222 = vadd.f32 0.0, %v221
    %v223 = vpop.f32.mrb[0].mxu0
    %224 = vmatprep.mubr.bf16.mxu0 0
    %225 = vmatmul.mubr.bf16.gmra.mrb[0].mxu0 %v147
    %v226 = vpop.f32.mrb[0].mxu0
    %v227 = vadd.f32 0.0, %v226
    %v228 = vpop.f32.mrb[0].mxu0
    %v229 = vpop.f32.mrb[0].mxu0
    %v230 = vadd.f32 0.0, %v229
    %v231 = vpop.f32.mrb[0].mxu0
    %232 = vdwg.mxu0
    %v233 = vmul.f32 %v187, 0.35355338
    %v234 = vmul.f32 %v190, 0.35355338
    %v235 = vmul.f32 %v195, 0.35355338
    %v236 = vmul.f32 %v198, 0.35355338
    %v237 = vpack.c.bf16 %v234, %v233
    %v238 = vpack.c.bf16 %v236, %v235
    %v239 = vpack.c.bf16 %v206, %v203
    %v240 = vpack.c.bf16 %v214, %v211
    %v241 = vpack.c.bf16 %v222, %v219
    %v242 = vpack.c.bf16 %v230, %v227
    %243 = vxpose.xlu0.c.b16.start [1/8] %v237, 128
    %244 = vxpose.xlu0.c.b16.cont [2/8] 0, 128
    %245 = vxpose.xlu0.c.b16.cont [3/8] 0, 128
    %246 = vxpose.xlu0.c.b16.cont [4/8] 0, 128
    %247 = vxpose.xlu0.c.b16.cont [5/8] 0, 128
    %248 = vxpose.xlu0.c.b16.cont [6/8] 0, 128
    %249 = vxpose.xlu0.c.b16.cont [7/8] 0, 128
    %250 = vxpose.xlu0.c.b16.end [8/8] 0, 128
    %v251 = vpop.trf.xlu0
    %v252 = vpop.trf.xlu0
    %v253 = vpop.trf.xlu0
    %v254 = vpop.trf.xlu0
    %v255 = vpop.trf.xlu0
    %v256 = vpop.trf.xlu0
    %v257 = vpop.trf.xlu0
    %v258 = vpop.trf.xlu0
    %vm259 = vcmask 64512
    %v261 = vsel %vm259, %v251, 0
    %vm263 = vcmask 1043456
    %v265 = vsel %vm263, %v239, 0
    %267 = vmatprep.subr.bf16.mxu0 0
    %268 = vmatpush1.bf16.msra.mxu0 %v265
    %269 = vmatprep.subr.bf16.mxu0 0
    %270 = vmatpush1.bf16.msra.mxu0 0
    %271 = vmatprep.subr.bf16.mxu0 0
    %272 = vmatpush1.bf16.msra.mxu0 0
    %273 = vmatprep.subr.bf16.mxu0 0
    %274 = vmatpush1.bf16.msra.mxu0 0
    %275 = vmatprep.subr.bf16.mxu0 0
    %276 = vmatpush1.bf16.msra.mxu0 0
    %277 = vmatprep.subr.bf16.mxu0 0
    %278 = vmatpush1.bf16.msra.mxu0 0
    %279 = vmatprep.subr.bf16.mxu0 0
    %280 = vmatpush1.bf16.msra.mxu0 0
    %281 = vmatprep.subr.bf16.mxu0 0
    %282 = vmatpush1.bf16.msra.mxu0 0
    %283 = vmatprep.subr.bf16.mxu0 0
    %284 = vmatpush1.bf16.msra.mxu0 0
    %285 = vmatprep.subr.bf16.mxu0 0
    %286 = vmatpush1.bf16.msra.mxu0 0
    %287 = vmatprep.subr.bf16.mxu0 0
    %288 = vmatpush1.bf16.msra.mxu0 0
    %289 = vmatprep.subr.bf16.mxu0 0
    %290 = vmatpush1.bf16.msra.mxu0 0
    %291 = vmatprep.subr.bf16.mxu0 0
    %292 = vmatpush1.bf16.msra.mxu0 0
    %293 = vmatprep.subr.bf16.mxu0 0
    %294 = vmatpush1.bf16.msra.mxu0 0
    %295 = vmatprep.subr.bf16.mxu0 0
    %296 = vmatpush1.bf16.msra.mxu0 0
    %297 = vmatprep.subr.bf16.mxu0 0
    %298 = vmatpush1.bf16.msra.mxu0 0
    %299 = vmatprep.mubr.bf16.mxu0 0
    %300 = vmatmul.mubr.bf16.gmra.mrb[0].mxu0 %v261
    %v301 = vpop.f32.mrb[0].mxu0
    %v302 = vadd.f32 0.0, %v301
    %v303 = vpop.f32.mrb[0].mxu0
    %v304 = vpop.f32.mrb[0].mxu0
    %v305 = vpop.f32.mrb[0].mxu0
    %306 = vdwg.mxu0
    %v307 = vsel %vm259, %v302, -inf
    %308 = vmax.xlane.f32.xlu0 %v307
    %v309 = vpop.xlane.xlu0 %308
    %v310 = vsub.f32 %v302, %v309
    %v311 = vmul.f32 %v310, 1.442695
    %v312 = vpow.pop %v311
    %v313 = vsel %vm259, %v312, 0.0
    %314 = vadd.xlane.f32.xlu0 %v313
    %v315 = vpop.xlane.xlu0 %314
    %v316 = vrcp.pop %v315
    %v317 = vmul.f32 %v312, %v316
    %v318 = vpack.c.bf16 %v317, %v317
    %v320 = vsel %vm259, %v318, 0
    %v323 = vsel %vm259, %v241, 0
    %325 = vmatprep.subr.bf16.mxu0 0
    %326 = vmatpush1.bf16.xpose.msra.mxu0 %v323
    %327 = vmatprep.subr.bf16.mxu0 0
    %328 = vmatpush1.bf16.xpose.msra.mxu0 0
    %329 = vmatprep.subr.bf16.mxu0 0
    %330 = vmatpush1.bf16.xpose.msra.mxu0 0
    %331 = vmatprep.subr.bf16.mxu0 0
    %332 = vmatpush1.bf16.xpose.msra.mxu0 0
    %333 = vmatprep.subr.bf16.mxu0 0
    %334 = vmatpush1.bf16.xpose.msra.mxu0 0
    %335 = vmatprep.subr.bf16.mxu0 0
    %336 = vmatpush1.bf16.xpose.msra.mxu0 0
    %337 = vmatprep.subr.bf16.mxu0 0
    %338 = vmatpush1.bf16.xpose.msra.mxu0 0
    %339 = vmatprep.subr.bf16.mxu0 0
    %340 = vmatpush1.bf16.xpose.msra.mxu0 0
    %341 = vmatprep.subr.bf16.mxu0 0
    %342 = vmatpush1.bf16.xpose.msra.mxu0 0
    %343 = vmatprep.subr.bf16.mxu0 0
    %344 = vmatpush1.bf16.xpose.msra.mxu0 0
    %345 = vmatprep.subr.bf16.mxu0 0
    %346 = vmatpush1.bf16.xpose.msra.mxu0 0
    %347 = vmatprep.subr.bf16.mxu0 0
    %348 = vmatpush1.bf16.xpose.msra.mxu0 0
    %349 = vmatprep.subr.bf16.mxu0 0
    %350 = vmatpush1.bf16.xpose.msra.mxu0 0
    %351 = vmatprep.subr.bf16.mxu0 0
    %352 = vmatpush1.bf16.xpose.msra.mxu0 0
    %353 = vmatprep.subr.bf16.mxu0 0
    %354 = vmatpush1.bf16.xpose.msra.mxu0 0
    %355 = vmatprep.subr.bf16.mxu0 0
    %356 = vmatpush1.bf16.xpose.msra.mxu0 0
    %357 = vmatprep.mubr.bf16.mxu0 0
    %358 = vmatmul.mubr.bf16.gmra.mrb[0].mxu0 %v320
    %v359 = vpop.f32.mrb[0].mxu0
    %v360 = vadd.f32 0.0, %v359
    %v361 = vpop.f32.mrb[0].mxu0
    %v362 = vpop.f32.mrb[0].mxu0
    %v363 = vpop.f32.mrb[0].mxu0
    %364 = vdwg.mxu0
    %v366 = vrot.slane %v237, 4
    %368 = vxpose.xlu0.c.b16.start [1/8] %v366, 128
    %369 = vxpose.xlu0.c.b16.cont [2/8] 0, 128
    %370 = vxpose.xlu0.c.b16.cont [3/8] 0, 128
    %371 = vxpose.xlu0.c.b16.cont [4/8] 0, 128
    %372 = vxpose.xlu0.c.b16.cont [5/8] 0, 128
    %373 = vxpose.xlu0.c.b16.cont [6/8] 0, 128
    %374 = vxpose.xlu0.c.b16.cont [7/8] 0, 128
    %375 = vxpose.xlu0.c.b16.end [8/8] 0, 128
    %v376 = vpop.trf.xlu0
    %v377 = vpop.trf.xlu0
    %v378 = vpop.trf.xlu0
    %v379 = vpop.trf.xlu0
    %v380 = vpop.trf.xlu0
    %v381 = vpop.trf.xlu0
    %v382 = vpop.trf.xlu0
    %v383 = vpop.trf.xlu0
    %v385 = vrot.slane %v239, 4
    %v387 = vsel %vm259, %v376, 0
    %v390 = vsel %vm263, %v385, 0
    %392 = vmatprep.subr.bf16.mxu0 0
    %393 = vmatpush1.bf16.msra.mxu0 %v390
    %394 = vmatprep.subr.bf16.mxu0 0
    %395 = vmatpush1.bf16.msra.mxu0 0
    %396 = vmatprep.subr.bf16.mxu0 0
    %397 = vmatpush1.bf16.msra.mxu0 0
    %398 = vmatprep.subr.bf16.mxu0 0
    %399 = vmatpush1.bf16.msra.mxu0 0
    %400 = vmatprep.subr.bf16.mxu0 0
    %401 = vmatpush1.bf16.msra.mxu0 0
    %402 = vmatprep.subr.bf16.mxu0 0
    %403 = vmatpush1.bf16.msra.mxu0 0
    %404 = vmatprep.subr.bf16.mxu0 0
    %405 = vmatpush1.bf16.msra.mxu0 0
    %406 = vmatprep.subr.bf16.mxu0 0
    %407 = vmatpush1.bf16.msra.mxu0 0
    %408 = vmatprep.subr.bf16.mxu0 0
    %409 = vmatpush1.bf16.msra.mxu0 0
    %410 = vmatprep.subr.bf16.mxu0 0
    %411 = vmatpush1.bf16.msra.mxu0 0
    %412 = vmatprep.subr.bf16.mxu0 0
    %413 = vmatpush1.bf16.msra.mxu0 0
    %414 = vmatprep.subr.bf16.mxu0 0
    %415 = vmatpush1.bf16.msra.mxu0 0
    %416 = vmatprep.subr.bf16.mxu0 0
    %417 = vmatpush1.bf16.msra.mxu0 0
    %418 = vmatprep.subr.bf16.mxu0 0
    %419 = vmatpush1.bf16.msra.mxu0 0
    %420 = vmatprep.subr.bf16.mxu0 0
    %421 = vmatpush1.bf16.msra.mxu0 0
    %422 = vmatprep.subr.bf16.mxu0 0
    %423 = vmatpush1.bf16.msra.mxu0 0
    %424 = vmatprep.mubr.bf16.mxu0 0
    %425 = vmatmul.mubr.bf16.gmra.mrb[0].mxu0 %v387
    %v426 = vpop.f32.mrb[0].mxu0
    %v427 = vadd.f32 0.0, %v426
    %v428 = vpop.f32.mrb[0].mxu0
    %v429 = vpop.f32.mrb[0].mxu0
    %v430 = vpop.f32.mrb[0].mxu0
    %431 = vdwg.mxu0
    %v432 = vsel %vm259, %v427, -inf
    %433 = vmax.xlane.f32.xlu0 %v432
    %v434 = vpop.xlane.xlu0 %433
    %v435 = vsub.f32 %v427, %v434
    %v436 = vmul.f32 %v435, 1.442695
    %v437 = vpow.pop %v436
    %v438 = vsel %vm259, %v437, 0.0
    %439 = vadd.xlane.f32.xlu0 %v438
    %v440 = vpop.xlane.xlu0 %439
    %v441 = vrcp.pop %v440
    %v442 = vmul.f32 %v437, %v441
    %v443 = vpack.c.bf16 %v442, %v442
    %v445 = vrot.slane %v241, 4
    %v447 = vsel %vm259, %v443, 0
    %v450 = vsel %vm259, %v445, 0
    %452 = vmatprep.subr.bf16.mxu0 0
    %453 = vmatpush1.bf16.xpose.msra.mxu0 %v450
    %454 = vmatprep.subr.bf16.mxu0 0
    %455 = vmatpush1.bf16.xpose.msra.mxu0 0
    %456 = vmatprep.subr.bf16.mxu0 0
    %457 = vmatpush1.bf16.xpose.msra.mxu0 0
    %458 = vmatprep.subr.bf16.mxu0 0
    %459 = vmatpush1.bf16.xpose.msra.mxu0 0
    %460 = vmatprep.subr.bf16.mxu0 0
    %461 = vmatpush1.bf16.xpose.msra.mxu0 0
    %462 = vmatprep.subr.bf16.mxu0 0
    %463 = vmatpush1.bf16.xpose.msra.mxu0 0
    %464 = vmatprep.subr.bf16.mxu0 0
    %465 = vmatpush1.bf16.xpose.msra.mxu0 0
    %466 = vmatprep.subr.bf16.mxu0 0
    %467 = vmatpush1.bf16.xpose.msra.mxu0 0
    %468 = vmatprep.subr.bf16.mxu0 0
    %469 = vmatpush1.bf16.xpose.msra.mxu0 0
    %470 = vmatprep.subr.bf16.mxu0 0
    %471 = vmatpush1.bf16.xpose.msra.mxu0 0
    %472 = vmatprep.subr.bf16.mxu0 0
    %473 = vmatpush1.bf16.xpose.msra.mxu0 0
    %474 = vmatprep.subr.bf16.mxu0 0
    %475 = vmatpush1.bf16.xpose.msra.mxu0 0
    %476 = vmatprep.subr.bf16.mxu0 0
    %477 = vmatpush1.bf16.xpose.msra.mxu0 0
    %478 = vmatprep.subr.bf16.mxu0 0
    %479 = vmatpush1.bf16.xpose.msra.mxu0 0
    %480 = vmatprep.subr.bf16.mxu0 0
    %481 = vmatpush1.bf16.xpose.msra.mxu0 0
    %482 = vmatprep.subr.bf16.mxu0 0
    %483 = vmatpush1.bf16.xpose.msra.mxu0 0
    %484 = vmatprep.mubr.bf16.mxu0 0
    %485 = vmatmul.mubr.bf16.gmra.mrb[0].mxu0 %v447
    %v486 = vpop.f32.mrb[0].mxu0
    %v487 = vadd.f32 0.0, %v486
    %v488 = vpop.f32.mrb[0].mxu0
    %v489 = vpop.f32.mrb[0].mxu0
    %v490 = vpop.f32.mrb[0].mxu0
    %491 = vdwg.mxu0
    %492 = vxpose.xlu0.c.b16.start [1/8] %v238, 128
    %493 = vxpose.xlu0.c.b16.cont [2/8] 0, 128
    %494 = vxpose.xlu0.c.b16.cont [3/8] 0, 128
    %495 = vxpose.xlu0.c.b16.cont [4/8] 0, 128
    %496 = vxpose.xlu0.c.b16.cont [5/8] 0, 128
    %497 = vxpose.xlu0.c.b16.cont [6/8] 0, 128
    %498 = vxpose.xlu0.c.b16.cont [7/8] 0, 128
    %499 = vxpose.xlu0.c.b16.end [8/8] 0, 128
    %v500 = vpop.trf.xlu0
    %v501 = vpop.trf.xlu0
    %v502 = vpop.trf.xlu0
    %v503 = vpop.trf.xlu0
    %v504 = vpop.trf.xlu0
    %v505 = vpop.trf.xlu0
    %v506 = vpop.trf.xlu0
    %v507 = vpop.trf.xlu0
    %v509 = vsel %vm259, %v500, 0
    %v512 = vsel %vm263, %v240, 0
    %514 = vmatprep.subr.bf16.mxu0 0
    %515 = vmatpush1.bf16.msra.mxu0 %v512
    %516 = vmatprep.subr.bf16.mxu0 0
    %517 = vmatpush1.bf16.msra.mxu0 0
    %518 = vmatprep.subr.bf16.mxu0 0
    %519 = vmatpush1.bf16.msra.mxu0 0
    %520 = vmatprep.subr.bf16.mxu0 0
    %521 = vmatpush1.bf16.msra.mxu0 0
    %522 = vmatprep.subr.bf16.mxu0 0
    %523 = vmatpush1.bf16.msra.mxu0 0
    %524 = vmatprep.subr.bf16.mxu0 0
    %525 = vmatpush1.bf16.msra.mxu0 0
    %526 = vmatprep.subr.bf16.mxu0 0
    %527 = vmatpush1.bf16.msra.mxu0 0
    %528 = vmatprep.subr.bf16.mxu0 0
    %529 = vmatpush1.bf16.msra.mxu0 0
    %530 = vmatprep.subr.bf16.mxu0 0
    %531 = vmatpush1.bf16.msra.mxu0 0
    %532 = vmatprep.subr.bf16.mxu0 0
    %533 = vmatpush1.bf16.msra.mxu0 0
    %534 = vmatprep.subr.bf16.mxu0 0
    %535 = vmatpush1.bf16.msra.mxu0 0
    %536 = vmatprep.subr.bf16.mxu0 0
    %537 = vmatpush1.bf16.msra.mxu0 0
    %538 = vmatprep.subr.bf16.mxu0 0
    %539 = vmatpush1.bf16.msra.mxu0 0
    %540 = vmatprep.subr.bf16.mxu0 0
    %541 = vmatpush1.bf16.msra.mxu0 0
    %542 = vmatprep.subr.bf16.mxu0 0
    %543 = vmatpush1.bf16.msra.mxu0 0
    %544 = vmatprep.subr.bf16.mxu0 0
    %545 = vmatpush1.bf16.msra.mxu0 0
    %546 = vmatprep.mubr.bf16.mxu0 0
    %547 = vmatmul.mubr.bf16.gmra.mrb[0].mxu0 %v509
    %v548 = vpop.f32.mrb[0].mxu0
    %v549 = vadd.f32 0.0, %v548
    %v550 = vpop.f32.mrb[0].mxu0
    %v551 = vpop.f32.mrb[0].mxu0
    %v552 = vpop.f32.mrb[0].mxu0
    %553 = vdwg.mxu0
    %v554 = vsel %vm259, %v549, -inf
    %555 = vmax.xlane.f32.xlu0 %v554
    %v556 = vpop.xlane.xlu0 %555
    %v557 = vsub.f32 %v549, %v556
    %v558 = vmul.f32 %v557, 1.442695
    %v559 = vpow.pop %v558
    %v560 = vsel %vm259, %v559, 0.0
    %561 = vadd.xlane.f32.xlu0 %v560
    %v562 = vpop.xlane.xlu0 %561
    %v563 = vrcp.pop %v562
    %v564 = vmul.f32 %v559, %v563
    %v565 = vpack.c.bf16 %v564, %v564
    %v567 = vsel %vm259, %v565, 0
    %v570 = vsel %vm259, %v242, 0
    %572 = vmatprep.subr.bf16.mxu0 0
    %573 = vmatpush1.bf16.xpose.msra.mxu0 %v570
    %574 = vmatprep.subr.bf16.mxu0 0
    %575 = vmatpush1.bf16.xpose.msra.mxu0 0
    %576 = vmatprep.subr.bf16.mxu0 0
    %577 = vmatpush1.bf16.xpose.msra.mxu0 0
    %578 = vmatprep.subr.bf16.mxu0 0
    %579 = vmatpush1.bf16.xpose.msra.mxu0 0
    %580 = vmatprep.subr.bf16.mxu0 0
    %581 = vmatpush1.bf16.xpose.msra.mxu0 0
    %582 = vmatprep.subr.bf16.mxu0 0
    %583 = vmatpush1.bf16.xpose.msra.mxu0 0
    %584 = vmatprep.subr.bf16.mxu0 0
    %585 = vmatpush1.bf16.xpose.msra.mxu0 0
    %586 = vmatprep.subr.bf16.mxu0 0
    %587 = vmatpush1.bf16.xpose.msra.mxu0 0
    %588 = vmatprep.subr.bf16.mxu0 0
    %589 = vmatpush1.bf16.xpose.msra.mxu0 0
    %590 = vmatprep.subr.bf16.mxu0 0
    %591 = vmatpush1.bf16.xpose.msra.mxu0 0
    %592 = vmatprep.subr.bf16.mxu0 0
    %593 = vmatpush1.bf16.xpose.msra.mxu0 0
    %594 = vmatprep.subr.bf16.mxu0 0
    %595 = vmatpush1.bf16.xpose.msra.mxu0 0
    %596 = vmatprep.subr.bf16.mxu0 0
    %597 = vmatpush1.bf16.xpose.msra.mxu0 0
    %598 = vmatprep.subr.bf16.mxu0 0
    %599 = vmatpush1.bf16.xpose.msra.mxu0 0
    %600 = vmatprep.subr.bf16.mxu0 0
    %601 = vmatpush1.bf16.xpose.msra.mxu0 0
    %602 = vmatprep.subr.bf16.mxu0 0
    %603 = vmatpush1.bf16.xpose.msra.mxu0 0
    %604 = vmatprep.mubr.bf16.mxu0 0
    %605 = vmatmul.mubr.bf16.gmra.mrb[0].mxu0 %v567
    %v606 = vpop.f32.mrb[0].mxu0
    %v607 = vadd.f32 0.0, %v606
    %v608 = vpop.f32.mrb[0].mxu0
    %v609 = vpop.f32.mrb[0].mxu0
    %v610 = vpop.f32.mrb[0].mxu0
    %611 = vdwg.mxu0
    %v613 = vrot.slane %v238, 4
    %615 = vxpose.xlu0.c.b16.start [1/8] %v613, 128
    %616 = vxpose.xlu0.c.b16.cont [2/8] 0, 128
    %617 = vxpose.xlu0.c.b16.cont [3/8] 0, 128
    %618 = vxpose.xlu0.c.b16.cont [4/8] 0, 128
    %619 = vxpose.xlu0.c.b16.cont [5/8] 0, 128
    %620 = vxpose.xlu0.c.b16.cont [6/8] 0, 128
    %621 = vxpose.xlu0.c.b16.cont [7/8] 0, 128
    %622 = vxpose.xlu0.c.b16.end [8/8] 0, 128
    %v623 = vpop.trf.xlu0
    %v624 = vpop.trf.xlu0
    %v625 = vpop.trf.xlu0
    %v626 = vpop.trf.xlu0
    %v627 = vpop.trf.xlu0
    %v628 = vpop.trf.xlu0
    %v629 = vpop.trf.xlu0
    %v630 = vpop.trf.xlu0
    %v632 = vrot.slane %v240, 4
    %v634 = vsel %vm259, %v623, 0
    %v637 = vsel %vm263, %v632, 0
    %639 = vmatprep.subr.bf16.mxu0 0
    %640 = vmatpush1.bf16.msra.mxu0 %v637
    %641 = vmatprep.subr.bf16.mxu0 0
    %642 = vmatpush1.bf16.msra.mxu0 0
    %643 = vmatprep.subr.bf16.mxu0 0
    %644 = vmatpush1.bf16.msra.mxu0 0
    %645 = vmatprep.subr.bf16.mxu0 0
    %646 = vmatpush1.bf16.msra.mxu0 0
    %647 = vmatprep.subr.bf16.mxu0 0
    %648 = vmatpush1.bf16.msra.mxu0 0
    %649 = vmatprep.subr.bf16.mxu0 0
    %650 = vmatpush1.bf16.msra.mxu0 0
    %651 = vmatprep.subr.bf16.mxu0 0
    %652 = vmatpush1.bf16.msra.mxu0 0
    %653 = vmatprep.subr.bf16.mxu0 0
    %654 = vmatpush1.bf16.msra.mxu0 0
    %655 = vmatprep.subr.bf16.mxu0 0
    %656 = vmatpush1.bf16.msra.mxu0 0
    %657 = vmatprep.subr.bf16.mxu0 0
    %658 = vmatpush1.bf16.msra.mxu0 0
    %659 = vmatprep.subr.bf16.mxu0 0
    %660 = vmatpush1.bf16.msra.mxu0 0
    %661 = vmatprep.subr.bf16.mxu0 0
    %662 = vmatpush1.bf16.msra.mxu0 0
    %663 = vmatprep.subr.bf16.mxu0 0
    %664 = vmatpush1.bf16.msra.mxu0 0
    %665 = vmatprep.subr.bf16.mxu0 0
    %666 = vmatpush1.bf16.msra.mxu0 0
    %667 = vmatprep.subr.bf16.mxu0 0
    %668 = vmatpush1.bf16.msra.mxu0 0
    %669 = vmatprep.subr.bf16.mxu0 0
    %670 = vmatpush1.bf16.msra.mxu0 0
    %671 = vmatprep.mubr.bf16.mxu0 0
    %672 = vmatmul.mubr.bf16.gmra.mrb[0].mxu0 %v634
    %v673 = vpop.f32.mrb[0].mxu0
    %v674 = vadd.f32 0.0, %v673
    %v675 = vpop.f32.mrb[0].mxu0
    %v676 = vpop.f32.mrb[0].mxu0
    %v677 = vpop.f32.mrb[0].mxu0
    %678 = vdwg.mxu0
    %v679 = vsel %vm259, %v674, -inf
    %680 = vmax.xlane.f32.xlu0 %v679
    %v681 = vpop.xlane.xlu0 %680
    %v682 = vsub.f32 %v674, %v681
    %v683 = vmul.f32 %v682, 1.442695
    %v684 = vpow.pop %v683
    %v685 = vsel %vm259, %v684, 0.0
    %686 = vadd.xlane.f32.xlu0 %v685
    %v687 = vpop.xlane.xlu0 %686
    %v688 = vrcp.pop %v687
    %v689 = vmul.f32 %v684, %v688
    %v690 = vpack.c.bf16 %v689, %v689
    %v692 = vrot.slane %v242, 4
    %v694 = vsel %vm259, %v690, 0
    %v697 = vsel %vm259, %v692, 0
    %699 = vmatprep.subr.bf16.mxu0 0
    %700 = vmatpush1.bf16.xpose.msra.mxu0 %v697
    %701 = vmatprep.subr.bf16.mxu0 0
    %702 = vmatpush1.bf16.xpose.msra.mxu0 0
    %703 = vmatprep.subr.bf16.mxu0 0
    %704 = vmatpush1.bf16.xpose.msra.mxu0 0
    %705 = vmatprep.subr.bf16.mxu0 0
    %706 = vmatpush1.bf16.xpose.msra.mxu0 0
    %707 = vmatprep.subr.bf16.mxu0 0
    %708 = vmatpush1.bf16.xpose.msra.mxu0 0
    %709 = vmatprep.subr.bf16.mxu0 0
    %710 = vmatpush1.bf16.xpose.msra.mxu0 0
    %711 = vmatprep.subr.bf16.mxu0 0
    %712 = vmatpush1.bf16.xpose.msra.mxu0 0
    %713 = vmatprep.subr.bf16.mxu0 0
    %714 = vmatpush1.bf16.xpose.msra.mxu0 0
    %715 = vmatprep.subr.bf16.mxu0 0
    %716 = vmatpush1.bf16.xpose.msra.mxu0 0
    %717 = vmatprep.subr.bf16.mxu0 0
    %718 = vmatpush1.bf16.xpose.msra.mxu0 0
    %719 = vmatprep.subr.bf16.mxu0 0
    %720 = vmatpush1.bf16.xpose.msra.mxu0 0
    %721 = vmatprep.subr.bf16.mxu0 0
    %722 = vmatpush1.bf16.xpose.msra.mxu0 0
    %723 = vmatprep.subr.bf16.mxu0 0
    %724 = vmatpush1.bf16.xpose.msra.mxu0 0
    %725 = vmatprep.subr.bf16.mxu0 0
    %726 = vmatpush1.bf16.xpose.msra.mxu0 0
    %727 = vmatprep.subr.bf16.mxu0 0
    %728 = vmatpush1.bf16.xpose.msra.mxu0 0
    %729 = vmatprep.subr.bf16.mxu0 0
    %730 = vmatpush1.bf16.xpose.msra.mxu0 0
    %731 = vmatprep.mubr.bf16.mxu0 0
    %732 = vmatmul.mubr.bf16.gmra.mrb[0].mxu0 %v694
    %v733 = vpop.f32.mrb[0].mxu0
    %v734 = vadd.f32 0.0, %v733
    %v735 = vpop.f32.mrb[0].mxu0
    %v736 = vpop.f32.mrb[0].mxu0
    %v737 = vpop.f32.mrb[0].mxu0
    %738 = vdwg.mxu0
    %740 = vrot.lane.b32.xlu0 %v487, 8
    %v741 = vpop.permute.xlu0 %740
    %744 = vrot.lane.b32.xlu0 %v607, 16
    %v745 = vpop.permute.xlu0 %744
    %748 = vrot.lane.b32.xlu0 %v734, 24
    %v749 = vpop.permute.xlu0 %748
    %v751 = vsel %vm259, %v360, %v741
    %vm752 = vcmask 130048
    %v753 = vsel %vm752, %v751, %v745
    %vm754 = vcmask 195584
    %v755 = vsel %vm754, %v753, %v749
    %756 = vrot.lane.b32.xlu0 %v237, 120
    %v757 = vpop.permute.xlu0 %756
    %759 = vxpose.xlu0.c.b16.start [1/8] %v757, 128
    %760 = vxpose.xlu0.c.b16.cont [2/8] 0, 128
    %761 = vxpose.xlu0.c.b16.cont [3/8] 0, 128
    %762 = vxpose.xlu0.c.b16.cont [4/8] 0, 128
    %763 = vxpose.xlu0.c.b16.cont [5/8] 0, 128
    %764 = vxpose.xlu0.c.b16.cont [6/8] 0, 128
    %765 = vxpose.xlu0.c.b16.cont [7/8] 0, 128
    %766 = vxpose.xlu0.c.b16.end [8/8] 0, 128
    %v767 = vpop.trf.xlu0
    %v768 = vpop.trf.xlu0
    %v769 = vpop.trf.xlu0
    %v770 = vpop.trf.xlu0
    %v771 = vpop.trf.xlu0
    %v772 = vpop.trf.xlu0
    %v773 = vpop.trf.xlu0
    %v774 = vpop.trf.xlu0
    %775 = vrot.lane.b32.xlu0 %v239, 120
    %v776 = vpop.permute.xlu0 %775
    %v778 = vsel %vm259, %v767, 0
    %v781 = vsel %vm263, %v776, 0
    %783 = vmatprep.subr.bf16.mxu0 0
    %784 = vmatpush1.bf16.msra.mxu0 %v781
    %785 = vmatprep.subr.bf16.mxu0 0
    %786 = vmatpush1.bf16.msra.mxu0 0
    %787 = vmatprep.subr.bf16.mxu0 0
    %788 = vmatpush1.bf16.msra.mxu0 0
    %789 = vmatprep.subr.bf16.mxu0 0
    %790 = vmatpush1.bf16.msra.mxu0 0
    %791 = vmatprep.subr.bf16.mxu0 0
    %792 = vmatpush1.bf16.msra.mxu0 0
    %793 = vmatprep.subr.bf16.mxu0 0
    %794 = vmatpush1.bf16.msra.mxu0 0
    %795 = vmatprep.subr.bf16.mxu0 0
    %796 = vmatpush1.bf16.msra.mxu0 0
    %797 = vmatprep.subr.bf16.mxu0 0
    %798 = vmatpush1.bf16.msra.mxu0 0
    %799 = vmatprep.subr.bf16.mxu0 0
    %800 = vmatpush1.bf16.msra.mxu0 0
    %801 = vmatprep.subr.bf16.mxu0 0
    %802 = vmatpush1.bf16.msra.mxu0 0
    %803 = vmatprep.subr.bf16.mxu0 0
    %804 = vmatpush1.bf16.msra.mxu0 0
    %805 = vmatprep.subr.bf16.mxu0 0
    %806 = vmatpush1.bf16.msra.mxu0 0
    %807 = vmatprep.subr.bf16.mxu0 0
    %808 = vmatpush1.bf16.msra.mxu0 0
    %809 = vmatprep.subr.bf16.mxu0 0
    %810 = vmatpush1.bf16.msra.mxu0 0
    %811 = vmatprep.subr.bf16.mxu0 0
    %812 = vmatpush1.bf16.msra.mxu0 0
    %813 = vmatprep.subr.bf16.mxu0 0
    %814 = vmatpush1.bf16.msra.mxu0 0
    %815 = vmatprep.mubr.bf16.mxu0 0
    %816 = vmatmul.mubr.bf16.gmra.mrb[0].mxu0 %v778
    %v817 = vpop.f32.mrb[0].mxu0
    %v818 = vadd.f32 0.0, %v817
    %v819 = vpop.f32.mrb[0].mxu0
    %v820 = vpop.f32.mrb[0].mxu0
    %v821 = vpop.f32.mrb[0].mxu0
    %822 = vdwg.mxu0
    %v823 = vsel %vm259, %v818, -inf
    %824 = vmax.xlane.f32.xlu0 %v823
    %v825 = vpop.xlane.xlu0 %824
    %v826 = vsub.f32 %v818, %v825
    %v827 = vmul.f32 %v826, 1.442695
    %v828 = vpow.pop %v827
    %v829 = vsel %vm259, %v828, 0.0
    %830 = vadd.xlane.f32.xlu0 %v829
    %v831 = vpop.xlane.xlu0 %830
    %v832 = vrcp.pop %v831
    %v833 = vmul.f32 %v828, %v832
    %v834 = vpack.c.bf16 %v833, %v833
    %835 = vrot.lane.b32.xlu0 %v241, 120
    %v836 = vpop.permute.xlu0 %835
    %v838 = vsel %vm259, %v834, 0
    %v841 = vsel %vm259, %v836, 0
    %843 = vmatprep.subr.bf16.mxu0 0
    %844 = vmatpush1.bf16.xpose.msra.mxu0 %v841
    %845 = vmatprep.subr.bf16.mxu0 0
    %846 = vmatpush1.bf16.xpose.msra.mxu0 0
    %847 = vmatprep.subr.bf16.mxu0 0
    %848 = vmatpush1.bf16.xpose.msra.mxu0 0
    %849 = vmatprep.subr.bf16.mxu0 0
    %850 = vmatpush1.bf16.xpose.msra.mxu0 0
    %851 = vmatprep.subr.bf16.mxu0 0
    %852 = vmatpush1.bf16.xpose.msra.mxu0 0
    %853 = vmatprep.subr.bf16.mxu0 0
    %854 = vmatpush1.bf16.xpose.msra.mxu0 0
    %855 = vmatprep.subr.bf16.mxu0 0
    %856 = vmatpush1.bf16.xpose.msra.mxu0 0
    %857 = vmatprep.subr.bf16.mxu0 0
    %858 = vmatpush1.bf16.xpose.msra.mxu0 0
    %859 = vmatprep.subr.bf16.mxu0 0
    %860 = vmatpush1.bf16.xpose.msra.mxu0 0
    %861 = vmatprep.subr.bf16.mxu0 0
    %862 = vmatpush1.bf16.xpose.msra.mxu0 0
    %863 = vmatprep.subr.bf16.mxu0 0
    %864 = vmatpush1.bf16.xpose.msra.mxu0 0
    %865 = vmatprep.subr.bf16.mxu0 0
    %866 = vmatpush1.bf16.xpose.msra.mxu0 0
    %867 = vmatprep.subr.bf16.mxu0 0
    %868 = vmatpush1.bf16.xpose.msra.mxu0 0
    %869 = vmatprep.subr.bf16.mxu0 0
    %870 = vmatpush1.bf16.xpose.msra.mxu0 0
    %871 = vmatprep.subr.bf16.mxu0 0
    %872 = vmatpush1.bf16.xpose.msra.mxu0 0
    %873 = vmatprep.subr.bf16.mxu0 0
    %874 = vmatpush1.bf16.xpose.msra.mxu0 0
    %875 = vmatprep.mubr.bf16.mxu0 0
    %876 = vmatmul.mubr.bf16.gmra.mrb[0].mxu0 %v838
    %v877 = vpop.f32.mrb[0].mxu0
    %v878 = vadd.f32 0.0, %v877
    %v879 = vpop.f32.mrb[0].mxu0
    %v880 = vpop.f32.mrb[0].mxu0
    %v881 = vpop.f32.mrb[0].mxu0
    %882 = vdwg.mxu0
    %883 = vrot.lane.b32.xlu0 %v366, 120
    %v884 = vpop.permute.xlu0 %883
    %886 = vxpose.xlu0.c.b16.start [1/8] %v884, 128
    %887 = vxpose.xlu0.c.b16.cont [2/8] 0, 128
    %888 = vxpose.xlu0.c.b16.cont [3/8] 0, 128
    %889 = vxpose.xlu0.c.b16.cont [4/8] 0, 128
    %890 = vxpose.xlu0.c.b16.cont [5/8] 0, 128
    %891 = vxpose.xlu0.c.b16.cont [6/8] 0, 128
    %892 = vxpose.xlu0.c.b16.cont [7/8] 0, 128
    %893 = vxpose.xlu0.c.b16.end [8/8] 0, 128
    %v894 = vpop.trf.xlu0
    %v895 = vpop.trf.xlu0
    %v896 = vpop.trf.xlu0
    %v897 = vpop.trf.xlu0
    %v898 = vpop.trf.xlu0
    %v899 = vpop.trf.xlu0
    %v900 = vpop.trf.xlu0
    %v901 = vpop.trf.xlu0
    %902 = vrot.lane.b32.xlu0 %v385, 120
    %v903 = vpop.permute.xlu0 %902
    %v905 = vsel %vm259, %v894, 0
    %v908 = vsel %vm263, %v903, 0
    %910 = vmatprep.subr.bf16.mxu0 0
    %911 = vmatpush1.bf16.msra.mxu0 %v908
    %912 = vmatprep.subr.bf16.mxu0 0
    %913 = vmatpush1.bf16.msra.mxu0 0
    %914 = vmatprep.subr.bf16.mxu0 0
    %915 = vmatpush1.bf16.msra.mxu0 0
    %916 = vmatprep.subr.bf16.mxu0 0
    %917 = vmatpush1.bf16.msra.mxu0 0
    %918 = vmatprep.subr.bf16.mxu0 0
    %919 = vmatpush1.bf16.msra.mxu0 0
    %920 = vmatprep.subr.bf16.mxu0 0
    %921 = vmatpush1.bf16.msra.mxu0 0
    %922 = vmatprep.subr.bf16.mxu0 0
    %923 = vmatpush1.bf16.msra.mxu0 0
    %924 = vmatprep.subr.bf16.mxu0 0
    %925 = vmatpush1.bf16.msra.mxu0 0
    %926 = vmatprep.subr.bf16.mxu0 0
    %927 = vmatpush1.bf16.msra.mxu0 0
    %928 = vmatprep.subr.bf16.mxu0 0
    %929 = vmatpush1.bf16.msra.mxu0 0
    %930 = vmatprep.subr.bf16.mxu0 0
    %931 = vmatpush1.bf16.msra.mxu0 0
    %932 = vmatprep.subr.bf16.mxu0 0
    %933 = vmatpush1.bf16.msra.mxu0 0
    %934 = vmatprep.subr.bf16.mxu0 0
    %935 = vmatpush1.bf16.msra.mxu0 0
    %936 = vmatprep.subr.bf16.mxu0 0
    %937 = vmatpush1.bf16.msra.mxu0 0
    %938 = vmatprep.subr.bf16.mxu0 0
    %939 = vmatpush1.bf16.msra.mxu0 0
    %940 = vmatprep.subr.bf16.mxu0 0
    %941 = vmatpush1.bf16.msra.mxu0 0
    %942 = vmatprep.mubr.bf16.mxu0 0
    %943 = vmatmul.mubr.bf16.gmra.mrb[0].mxu0 %v905
    %v944 = vpop.f32.mrb[0].mxu0
    %v945 = vadd.f32 0.0, %v944
    %v946 = vpop.f32.mrb[0].mxu0
    %v947 = vpop.f32.mrb[0].mxu0
    %v948 = vpop.f32.mrb[0].mxu0
    %949 = vdwg.mxu0
    %v950 = vsel %vm259, %v945, -inf
    %951 = vmax.xlane.f32.xlu0 %v950
    %v952 = vpop.xlane.xlu0 %951
    %v953 = vsub.f32 %v945, %v952
    %v954 = vmul.f32 %v953, 1.442695
    %v955 = vpow.pop %v954
    %v956 = vsel %vm259, %v955, 0.0
    %957 = vadd.xlane.f32.xlu0 %v956
    %v958 = vpop.xlane.xlu0 %957
    %v959 = vrcp.pop %v958
    %v960 = vmul.f32 %v955, %v959
    %v961 = vpack.c.bf16 %v960, %v960
    %962 = vrot.lane.b32.xlu0 %v445, 120
    %v963 = vpop.permute.xlu0 %962
    %v965 = vsel %vm259, %v961, 0
    %v968 = vsel %vm259, %v963, 0
    %970 = vmatprep.subr.bf16.mxu0 0
    %971 = vmatpush1.bf16.xpose.msra.mxu0 %v968
    %972 = vmatprep.subr.bf16.mxu0 0
    %973 = vmatpush1.bf16.xpose.msra.mxu0 0
    %974 = vmatprep.subr.bf16.mxu0 0
    %975 = vmatpush1.bf16.xpose.msra.mxu0 0
    %976 = vmatprep.subr.bf16.mxu0 0
    %977 = vmatpush1.bf16.xpose.msra.mxu0 0
    %978 = vmatprep.subr.bf16.mxu0 0
    %979 = vmatpush1.bf16.xpose.msra.mxu0 0
    %980 = vmatprep.subr.bf16.mxu0 0
    %981 = vmatpush1.bf16.xpose.msra.mxu0 0
    %982 = vmatprep.subr.bf16.mxu0 0
    %983 = vmatpush1.bf16.xpose.msra.mxu0 0
    %984 = vmatprep.subr.bf16.mxu0 0
    %985 = vmatpush1.bf16.xpose.msra.mxu0 0
    %986 = vmatprep.subr.bf16.mxu0 0
    %987 = vmatpush1.bf16.xpose.msra.mxu0 0
    %988 = vmatprep.subr.bf16.mxu0 0
    %989 = vmatpush1.bf16.xpose.msra.mxu0 0
    %990 = vmatprep.subr.bf16.mxu0 0
    %991 = vmatpush1.bf16.xpose.msra.mxu0 0
    %992 = vmatprep.subr.bf16.mxu0 0
    %993 = vmatpush1.bf16.xpose.msra.mxu0 0
    %994 = vmatprep.subr.bf16.mxu0 0
    %995 = vmatpush1.bf16.xpose.msra.mxu0 0
    %996 = vmatprep.subr.bf16.mxu0 0
    %997 = vmatpush1.bf16.xpose.msra.mxu0 0
    %998 = vmatprep.subr.bf16.mxu0 0
    %999 = vmatpush1.bf16.xpose.msra.mxu0 0
    %1000 = vmatprep.subr.bf16.mxu0 0
    %1001 = vmatpush1.bf16.xpose.msra.mxu0 0
    %1002 = vmatprep.mubr.bf16.mxu0 0
    %1003 = vmatmul.mubr.bf16.gmra.mrb[0].mxu0 %v965
    %v1004 = vpop.f32.mrb[0].mxu0
    %v1005 = vadd.f32 0.0, %v1004
    %v1006 = vpop.f32.mrb[0].mxu0
    %v1007 = vpop.f32.mrb[0].mxu0
    %v1008 = vpop.f32.mrb[0].mxu0
    %1009 = vdwg.mxu0
    %1010 = vrot.lane.b32.xlu0 %v238, 120
    %v1011 = vpop.permute.xlu0 %1010
    %1013 = vxpose.xlu0.c.b16.start [1/8] %v1011, 128
    %1014 = vxpose.xlu0.c.b16.cont [2/8] 0, 128
    %1015 = vxpose.xlu0.c.b16.cont [3/8] 0, 128
    %1016 = vxpose.xlu0.c.b16.cont [4/8] 0, 128
    %1017 = vxpose.xlu0.c.b16.cont [5/8] 0, 128
    %1018 = vxpose.xlu0.c.b16.cont [6/8] 0, 128
    %1019 = vxpose.xlu0.c.b16.cont [7/8] 0, 128
    %1020 = vxpose.xlu0.c.b16.end [8/8] 0, 128
    %v1021 = vpop.trf.xlu0
    %v1022 = vpop.trf.xlu0
    %v1023 = vpop.trf.xlu0
    %v1024 = vpop.trf.xlu0
    %v1025 = vpop.trf.xlu0
    %v1026 = vpop.trf.xlu0
    %v1027 = vpop.trf.xlu0
    %v1028 = vpop.trf.xlu0
    %1029 = vrot.lane.b32.xlu0 %v240, 120
    %v1030 = vpop.permute.xlu0 %1029
    %v1032 = vsel %vm259, %v1021, 0
    %v1035 = vsel %vm263, %v1030, 0
    %1037 = vmatprep.subr.bf16.mxu0 0
    %1038 = vmatpush1.bf16.msra.mxu0 %v1035
    %1039 = vmatprep.subr.bf16.mxu0 0
    %1040 = vmatpush1.bf16.msra.mxu0 0
    %1041 = vmatprep.subr.bf16.mxu0 0
    %1042 = vmatpush1.bf16.msra.mxu0 0
    %1043 = vmatprep.subr.bf16.mxu0 0
    %1044 = vmatpush1.bf16.msra.mxu0 0
    %1045 = vmatprep.subr.bf16.mxu0 0
    %1046 = vmatpush1.bf16.msra.mxu0 0
    %1047 = vmatprep.subr.bf16.mxu0 0
    %1048 = vmatpush1.bf16.msra.mxu0 0
    %1049 = vmatprep.subr.bf16.mxu0 0
    %1050 = vmatpush1.bf16.msra.mxu0 0
    %1051 = vmatprep.subr.bf16.mxu0 0
    %1052 = vmatpush1.bf16.msra.mxu0 0
    %1053 = vmatprep.subr.bf16.mxu0 0
    %1054 = vmatpush1.bf16.msra.mxu0 0
    %1055 = vmatprep.subr.bf16.mxu0 0
    %1056 = vmatpush1.bf16.msra.mxu0 0
    %1057 = vmatprep.subr.bf16.mxu0 0
    %1058 = vmatpush1.bf16.msra.mxu0 0
    %1059 = vmatprep.subr.bf16.mxu0 0
    %1060 = vmatpush1.bf16.msra.mxu0 0
    %1061 = vmatprep.subr.bf16.mxu0 0
    %1062 = vmatpush1.bf16.msra.mxu0 0
    %1063 = vmatprep.subr.bf16.mxu0 0
    %1064 = vmatpush1.bf16.msra.mxu0 0
    %1065 = vmatprep.subr.bf16.mxu0 0
    %1066 = vmatpush1.bf16.msra.mxu0 0
    %1067 = vmatprep.subr.bf16.mxu0 0
    %1068 = vmatpush1.bf16.msra.mxu0 0
    %1069 = vmatprep.mubr.bf16.mxu0 0
    %1070 = vmatmul.mubr.bf16.gmra.mrb[0].mxu0 %v1032
    %v1071 = vpop.f32.mrb[0].mxu0
    %v1072 = vadd.f32 0.0, %v1071
    %v1073 = vpop.f32.mrb[0].mxu0
    %v1074 = vpop.f32.mrb[0].mxu0
    %v1075 = vpop.f32.mrb[0].mxu0
    %1076 = vdwg.mxu0
    %v1077 = vsel %vm259, %v1072, -inf
    %1078 = vmax.xlane.f32.xlu0 %v1077
    %v1079 = vpop.xlane.xlu0 %1078
    %v1080 = vsub.f32 %v1072, %v1079
    %v1081 = vmul.f32 %v1080, 1.442695
    %v1082 = vpow.pop %v1081
    %v1083 = vsel %vm259, %v1082, 0.0
    %1084 = vadd.xlane.f32.xlu0 %v1083
    %v1085 = vpop.xlane.xlu0 %1084
    %v1086 = vrcp.pop %v1085
    %v1087 = vmul.f32 %v1082, %v1086
    %v1088 = vpack.c.bf16 %v1087, %v1087
    %1089 = vrot.lane.b32.xlu0 %v242, 120
    %v1090 = vpop.permute.xlu0 %1089
    %v1092 = vsel %vm259, %v1088, 0
    %v1095 = vsel %vm259, %v1090, 0
    %1097 = vmatprep.subr.bf16.mxu0 0
    %1098 = vmatpush1.bf16.xpose.msra.mxu0 %v1095
    %1099 = vmatprep.subr.bf16.mxu0 0
    %1100 = vmatpush1.bf16.xpose.msra.mxu0 0
    %1101 = vmatprep.subr.bf16.mxu0 0
    %1102 = vmatpush1.bf16.xpose.msra.mxu0 0
    %1103 = vmatprep.subr.bf16.mxu0 0
    %1104 = vmatpush1.bf16.xpose.msra.mxu0 0
    %1105 = vmatprep.subr.bf16.mxu0 0
    %1106 = vmatpush1.bf16.xpose.msra.mxu0 0
    %1107 = vmatprep.subr.bf16.mxu0 0
    %1108 = vmatpush1.bf16.xpose.msra.mxu0 0
    %1109 = vmatprep.subr.bf16.mxu0 0
    %1110 = vmatpush1.bf16.xpose.msra.mxu0 0
    %1111 = vmatprep.subr.bf16.mxu0 0
    %1112 = vmatpush1.bf16.xpose.msra.mxu0 0
    %1113 = vmatprep.subr.bf16.mxu0 0
    %1114 = vmatpush1.bf16.xpose.msra.mxu0 0
    %1115 = vmatprep.subr.bf16.mxu0 0
    %1116 = vmatpush1.bf16.xpose.msra.mxu0 0
    %1117 = vmatprep.subr.bf16.mxu0 0
    %1118 = vmatpush1.bf16.xpose.msra.mxu0 0
    %1119 = vmatprep.subr.bf16.mxu0 0
    %1120 = vmatpush1.bf16.xpose.msra.mxu0 0
    %1121 = vmatprep.subr.bf16.mxu0 0
    %1122 = vmatpush1.bf16.xpose.msra.mxu0 0
    %1123 = vmatprep.subr.bf16.mxu0 0
    %1124 = vmatpush1.bf16.xpose.msra.mxu0 0
    %1125 = vmatprep.subr.bf16.mxu0 0
    %1126 = vmatpush1.bf16.xpose.msra.mxu0 0
    %1127 = vmatprep.subr.bf16.mxu0 0
    %1128 = vmatpush1.bf16.xpose.msra.mxu0 0
    %1129 = vmatprep.mubr.bf16.mxu0 0
    %1130 = vmatmul.mubr.bf16.gmra.mrb[0].mxu0 %v1092
    %v1131 = vpop.f32.mrb[0].mxu0
    %v1132 = vadd.f32 0.0, %v1131
    %v1133 = vpop.f32.mrb[0].mxu0
    %v1134 = vpop.f32.mrb[0].mxu0
    %v1135 = vpop.f32.mrb[0].mxu0
    %1136 = vdwg.mxu0
    %1137 = vrot.lane.b32.xlu0 %v613, 120
    %v1138 = vpop.permute.xlu0 %1137
    %1140 = vxpose.xlu0.c.b16.start [1/8] %v1138, 128
    %1141 = vxpose.xlu0.c.b16.cont [2/8] 0, 128
    %1142 = vxpose.xlu0.c.b16.cont [3/8] 0, 128
    %1143 = vxpose.xlu0.c.b16.cont [4/8] 0, 128
    %1144 = vxpose.xlu0.c.b16.cont [5/8] 0, 128
    %1145 = vxpose.xlu0.c.b16.cont [6/8] 0, 128
    %1146 = vxpose.xlu0.c.b16.cont [7/8] 0, 128
    %1147 = vxpose.xlu0.c.b16.end [8/8] 0, 128
    %v1148 = vpop.trf.xlu0
    %v1149 = vpop.trf.xlu0
    %v1150 = vpop.trf.xlu0
    %v1151 = vpop.trf.xlu0
    %v1152 = vpop.trf.xlu0
    %v1153 = vpop.trf.xlu0
    %v1154 = vpop.trf.xlu0
    %v1155 = vpop.trf.xlu0
    %1156 = vrot.lane.b32.xlu0 %v632, 120
    %v1157 = vpop.permute.xlu0 %1156
    %v1159 = vsel %vm259, %v1148, 0
    %v1162 = vsel %vm263, %v1157, 0
    %1164 = vmatprep.subr.bf16.mxu0 0
    %1165 = vmatpush1.bf16.msra.mxu0 %v1162
    %1166 = vmatprep.subr.bf16.mxu0 0
    %1167 = vmatpush1.bf16.msra.mxu0 0
    %1168 = vmatprep.subr.bf16.mxu0 0
    %1169 = vmatpush1.bf16.msra.mxu0 0
    %1170 = vmatprep.subr.bf16.mxu0 0
    %1171 = vmatpush1.bf16.msra.mxu0 0
    %1172 = vmatprep.subr.bf16.mxu0 0
    %1173 = vmatpush1.bf16.msra.mxu0 0
    %1174 = vmatprep.subr.bf16.mxu0 0
    %1175 = vmatpush1.bf16.msra.mxu0 0
    %1176 = vmatprep.subr.bf16.mxu0 0
    %1177 = vmatpush1.bf16.msra.mxu0 0
    %1178 = vmatprep.subr.bf16.mxu0 0
    %1179 = vmatpush1.bf16.msra.mxu0 0
    %1180 = vmatprep.subr.bf16.mxu0 0
    %1181 = vmatpush1.bf16.msra.mxu0 0
    %1182 = vmatprep.subr.bf16.mxu0 0
    %1183 = vmatpush1.bf16.msra.mxu0 0
    %1184 = vmatprep.subr.bf16.mxu0 0
    %1185 = vmatpush1.bf16.msra.mxu0 0
    %1186 = vmatprep.subr.bf16.mxu0 0
    %1187 = vmatpush1.bf16.msra.mxu0 0
    %1188 = vmatprep.subr.bf16.mxu0 0
    %1189 = vmatpush1.bf16.msra.mxu0 0
    %1190 = vmatprep.subr.bf16.mxu0 0
    %1191 = vmatpush1.bf16.msra.mxu0 0
    %1192 = vmatprep.subr.bf16.mxu0 0
    %1193 = vmatpush1.bf16.msra.mxu0 0
    %1194 = vmatprep.subr.bf16.mxu0 0
    %1195 = vmatpush1.bf16.msra.mxu0 0
    %1196 = vmatprep.mubr.bf16.mxu0 0
    %1197 = vmatmul.mubr.bf16.gmra.mrb[0].mxu0 %v1159
    %v1198 = vpop.f32.mrb[0].mxu0
    %v1199 = vadd.f32 0.0, %v1198
    %v1200 = vpop.f32.mrb[0].mxu0
    %v1201 = vpop.f32.mrb[0].mxu0
    %v1202 = vpop.f32.mrb[0].mxu0
    %1203 = vdwg.mxu0
    %v1204 = vsel %vm259, %v1199, -inf
    %1205 = vmax.xlane.f32.xlu0 %v1204
    %v1206 = vpop.xlane.xlu0 %1205
    %v1207 = vsub.f32 %v1199, %v1206
    %v1208 = vmul.f32 %v1207, 1.442695
    %v1209 = vpow.pop %v1208
    %v1210 = vsel %vm259, %v1209, 0.0
    %1211 = vadd.xlane.f32.xlu0 %v1210
    %v1212 = vpop.xlane.xlu0 %1211
    %v1213 = vrcp.pop %v1212
    %v1214 = vmul.f32 %v1209, %v1213
    %v1215 = vpack.c.bf16 %v1214, %v1214
    %1216 = vrot.lane.b32.xlu0 %v692, 120
    %v1217 = vpop.permute.xlu0 %1216
    %v1219 = vsel %vm259, %v1215, 0
    %v1222 = vsel %vm259, %v1217, 0
    %1224 = vmatprep.subr.bf16.mxu0 0
    %1225 = vmatpush1.bf16.xpose.msra.mxu0 %v1222
    %1226 = vmatprep.subr.bf16.mxu0 0
    %1227 = vmatpush1.bf16.xpose.msra.mxu0 0
    %1228 = vmatprep.subr.bf16.mxu0 0
    %1229 = vmatpush1.bf16.xpose.msra.mxu0 0
    %1230 = vmatprep.subr.bf16.mxu0 0
    %1231 = vmatpush1.bf16.xpose.msra.mxu0 0
    %1232 = vmatprep.subr.bf16.mxu0 0
    %1233 = vmatpush1.bf16.xpose.msra.mxu0 0
    %1234 = vmatprep.subr.bf16.mxu0 0
    %1235 = vmatpush1.bf16.xpose.msra.mxu0 0
    %1236 = vmatprep.subr.bf16.mxu0 0
    %1237 = vmatpush1.bf16.xpose.msra.mxu0 0
    %1238 = vmatprep.subr.bf16.mxu0 0
    %1239 = vmatpush1.bf16.xpose.msra.mxu0 0
    %1240 = vmatprep.subr.bf16.mxu0 0
    %1241 = vmatpush1.bf16.xpose.msra.mxu0 0
    %1242 = vmatprep.subr.bf16.mxu0 0
    %1243 = vmatpush1.bf16.xpose.msra.mxu0 0
    %1244 = vmatprep.subr.bf16.mxu0 0
    %1245 = vmatpush1.bf16.xpose.msra.mxu0 0
    %1246 = vmatprep.subr.bf16.mxu0 0
    %1247 = vmatpush1.bf16.xpose.msra.mxu0 0
    %1248 = vmatprep.subr.bf16.mxu0 0
    %1249 = vmatpush1.bf16.xpose.msra.mxu0 0
    %1250 = vmatprep.subr.bf16.mxu0 0
    %1251 = vmatpush1.bf16.xpose.msra.mxu0 0
    %1252 = vmatprep.subr.bf16.mxu0 0
    %1253 = vmatpush1.bf16.xpose.msra.mxu0 0
    %1254 = vmatprep.subr.bf16.mxu0 0
    %1255 = vmatpush1.bf16.xpose.msra.mxu0 0
    %1256 = vmatprep.mubr.bf16.mxu0 0
    %1257 = vmatmul.mubr.bf16.gmra.mrb[0].mxu0 %v1219
    %v1258 = vpop.f32.mrb[0].mxu0
    %v1259 = vadd.f32 0.0, %v1258
    %v1260 = vpop.f32.mrb[0].mxu0
    %v1261 = vpop.f32.mrb[0].mxu0
    %v1262 = vpop.f32.mrb[0].mxu0
    %1263 = vdwg.mxu0
    %1265 = vrot.lane.b32.xlu0 %v1005, 8
    %v1266 = vpop.permute.xlu0 %1265
    %1269 = vrot.lane.b32.xlu0 %v1132, 16
    %v1270 = vpop.permute.xlu0 %1269
    %1273 = vrot.lane.b32.xlu0 %v1259, 24
    %v1274 = vpop.permute.xlu0 %1273
    %v1276 = vsel %vm259, %v878, %v1266
    %v1277 = vsel %vm752, %v1276, %v1270
    %v1278 = vsel %vm754, %v1277, %v1274
    %v1279 = vpack.c.bf16 %v1278, %v755
    %v1280 = vlaneseq
    %v1281 = vshrl.u32 %v1280, 7
    %v1282 = vsub.s32 2, %v1281
    %v1283 = vrot.slane %v30, %v1282
    %v1288 = vunpack.c.l.b16 %v43
    %v1289 = vunpack.c.l.b16 %v44
    %v1290 = vunpack.c.l.b16 %v45
    %v1291 = vunpack.c.l.b16 %v46
    %v1292 = vpack.c.b16 %v1289, %v1288
    %v1293 = vpack.c.b16 %v1291, %v1290
    %v1297 = vsel %vm60, %v1279, 0
    %1299 = vmatprep.subr.bf16.mxu0 0
    %1300 = vmatpush1.bf16.msra.mxu0 %v1292
    %1301 = vmatprep.subr.bf16.mxu0 0
    %1302 = vmatpush1.bf16.msra.mxu0 %v1293
    %1303 = vmatprep.subr.bf16.mxu0 0
    %1304 = vmatpush1.bf16.msra.mxu0 0
    %1305 = vmatprep.subr.bf16.mxu0 0
    %1306 = vmatpush1.bf16.msra.mxu0 0
    %1307 = vmatprep.subr.bf16.mxu0 0
    %1308 = vmatpush1.bf16.msra.mxu0 0
    %1309 = vmatprep.subr.bf16.mxu0 0
    %1310 = vmatpush1.bf16.msra.mxu0 0
    %1311 = vmatprep.subr.bf16.mxu0 0
    %1312 = vmatpush1.bf16.msra.mxu0 0
    %1313 = vmatprep.subr.bf16.mxu0 0
    %1314 = vmatpush1.bf16.msra.mxu0 0
    %1315 = vmatprep.subr.bf16.mxu0 0
    %1316 = vmatpush1.bf16.msra.mxu0 0
    %1317 = vmatprep.subr.bf16.mxu0 0
    %1318 = vmatpush1.bf16.msra.mxu0 0
    %1319 = vmatprep.subr.bf16.mxu0 0
    %1320 = vmatpush1.bf16.msra.mxu0 0
    %1321 = vmatprep.subr.bf16.mxu0 0
    %1322 = vmatpush1.bf16.msra.mxu0 0
    %1323 = vmatprep.subr.bf16.mxu0 0
    %1324 = vmatpush1.bf16.msra.mxu0 0
    %1325 = vmatprep.subr.bf16.mxu0 0
    %1326 = vmatpush1.bf16.msra.mxu0 0
    %1327 = vmatprep.subr.bf16.mxu0 0
    %1328 = vmatpush1.bf16.msra.mxu0 0
    %1329 = vmatprep.subr.bf16.mxu0 0
    %1330 = vmatpush1.bf16.msra.mxu0 0
    %1331 = vmatprep.mubr.bf16.mxu0 0
    %1332 = vmatmul.mubr.bf16.gmra.mrb[0].mxu0 %v1297
    %v1333 = vpop.f32.mrb[0].mxu0
    %v1334 = vadd.f32 %v1283, %v1333
    %v1335 = vpop.f32.mrb[0].mxu0
    %v1336 = vpop.f32.mrb[0].mxu0
    %v1337 = vadd.f32 %v1283, %v1336
    %v1338 = vpop.f32.mrb[0].mxu0
    %1339 = vdwg.mxu0
    %v1340 = vadd.f32 %v28, %v1334
    %v1341 = vadd.f32 %v29, %v1337
    %v1342 = vsel %vm60, %v1340, 0.0
    %1343 = vadd.xlane.f32.xlu0 %v1342
    %v1344 = vpop.xlane.xlu0 %1343
    %v1345 = vsel %vm60, %v1341, 0.0
    %1346 = vadd.xlane.f32.xlu0 %v1345
    %v1347 = vpop.xlane.xlu0 %1346
    %v1348 = vmul.f32 %v1344, %v67
    %v1349 = vmul.f32 %v1347, %v67
    %v1350 = vsub.f32 %v1340, %v1348
    %v1351 = vsub.f32 %v1341, %v1349
    %v1352 = vmul.f32 %v1350, %v1350
    %v1353 = vmul.f32 %v1351, %v1351
    %v1354 = vsel %vm60, %v1352, 0.0
    %1355 = vadd.xlane.f32.xlu0 %v1354
    %v1356 = vpop.xlane.xlu0 %1355
    %v1357 = vsel %vm60, %v1353, 0.0
    %1358 = vadd.xlane.f32.xlu0 %v1357
    %v1359 = vpop.xlane.xlu0 %1358
    %v1360 = vmul.f32 %v1356, %v67
    %v1361 = vmul.f32 %v1359, %v67
    %v1362 = vadd.f32 %v1360, 1e-05
    %v1363 = vadd.f32 %v1361, 1e-05
    %v1364 = vrsqrt.pop %v1362
    %v1365 = vrsqrt.pop %v1363
    %v1366 = vmul.f32 %v1350, %v1364
    %v1367 = vmul.f32 %v1351, %v1365
    %v1368 = vlaneseq
    %v1369 = vshrl.u32 %v1368, 7
    %v1370 = vsub.s32 3, %v1369
    %v1371 = vrot.slane %v30, %v1370
    %v1372 = vmul.f32 %v1366, %v1371
    %v1373 = vmul.f32 %v1367, %v1371
    %v1374 = vlaneseq
    %v1375 = vshrl.u32 %v1374, 7
    %v1376 = vsub.s32 4, %v1375
    %v1377 = vrot.slane %v30, %v1376
    %v1378 = vadd.f32 %v1372, %v1377
    %v1379 = vadd.f32 %v1373, %v1377
    %v1380 = vpack.c.bf16 %v1379, %v1378
    %v1382 = vlaneseq
    %v1383 = vshrl.u32 %v1382, 7
    %v1384 = vsub.s32 0, %v1383
    %v1385 = vrot.slane %v51, %v1384
    %v1391 = vunpack.c.l.b16 %v47
    %v1392 = vunpack.c.l.b16 %v48
    %v1393 = vunpack.c.l.b16 %v49
    %v1394 = vunpack.c.l.b16 %v50
    %v1395 = vpack.c.b16 %v1392, %v1391
    %v1396 = vpack.c.b16 %v1394, %v1393
    %v1400 = vsel %vm60, %v1380, 0
    %1402 = vmatprep.subr.bf16.mxu0 0
    %1403 = vmatpush1.bf16.msra.mxu0 %v1395
    %1404 = vmatprep.subr.bf16.mxu0 0
    %1405 = vmatpush1.bf16.msra.mxu0 %v1396
    %1406 = vmatprep.subr.bf16.mxu0 0
    %1407 = vmatpush1.bf16.msra.mxu0 0
    %1408 = vmatprep.subr.bf16.mxu0 0
    %1409 = vmatpush1.bf16.msra.mxu0 0
    %1410 = vmatprep.subr.bf16.mxu0 0
    %1411 = vmatpush1.bf16.msra.mxu0 0
    %1412 = vmatprep.subr.bf16.mxu0 0
    %1413 = vmatpush1.bf16.msra.mxu0 0
    %1414 = vmatprep.subr.bf16.mxu0 0
    %1415 = vmatpush1.bf16.msra.mxu0 0
    %1416 = vmatprep.subr.bf16.mxu0 0
    %1417 = vmatpush1.bf16.msra.mxu0 0
    %1418 = vmatprep.subr.bf16.mxu0 0
    %1419 = vmatpush1.bf16.msra.mxu0 0
    %1420 = vmatprep.subr.bf16.mxu0 0
    %1421 = vmatpush1.bf16.msra.mxu0 0
    %1422 = vmatprep.subr.bf16.mxu0 0
    %1423 = vmatpush1.bf16.msra.mxu0 0
    %1424 = vmatprep.subr.bf16.mxu0 0
    %1425 = vmatpush1.bf16.msra.mxu0 0
    %1426 = vmatprep.subr.bf16.mxu0 0
    %1427 = vmatpush1.bf16.msra.mxu0 0
    %1428 = vmatprep.subr.bf16.mxu0 0
    %1429 = vmatpush1.bf16.msra.mxu0 0
    %1430 = vmatprep.subr.bf16.mxu0 0
    %1431 = vmatpush1.bf16.msra.mxu0 0
    %1432 = vmatprep.subr.bf16.mxu0 0
    %1433 = vmatpush1.bf16.msra.mxu0 0
    %1434 = vmatprep.mubr.bf16.mxu0 0
    %1435 = vmatmul.mubr.bf16.gmra.mrb[0].mxu0 %v1400
    %v1436 = vpop.f32.mrb[0].mxu0
    %v1437 = vadd.f32 %v1385, %v1436
    %v1438 = vpop.f32.mrb[0].mxu0
    %v1439 = vpop.f32.mrb[0].mxu0
    %v1440 = vadd.f32 %v1385, %v1439
    %v1441 = vpop.f32.mrb[0].mxu0
    %1442 = vdwg.mxu0
    %v1443 = vmul.f32 %v1437, 0.5
    %v1444 = vmul.f32 %v1440, 0.5
    %v1445 = vmul.f32 %v1437, 0.044715
    %v1446 = vmul.f32 %v1440, 0.044715
    %v1447 = vmul.f32 %v1445, %v1437
    %v1448 = vmul.f32 %v1446, %v1440
    %v1449 = vmul.f32 %v1447, %v1437
    %v1450 = vmul.f32 %v1448, %v1440
    %v1451 = vadd.f32 %v1437, %v1449
    %v1452 = vadd.f32 %v1440, %v1450
    %v1453 = vmul.f32 %v1451, 0.7978846
    %v1454 = vmul.f32 %v1452, 0.7978846
    %v1455 = vtanh.pop %v1453
    %v1456 = vtanh.pop %v1454
    %v1457 = vadd.f32 %v1455, 1.0
    %v1458 = vadd.f32 %v1456, 1.0
    %v1459 = vmul.f32 %v1443, %v1457
    %v1460 = vmul.f32 %v1444, %v1458
    %v1461 = vpack.c.bf16 %v1460, %v1459
    %v1462 = vlaneseq
    %v1463 = vshrl.u32 %v1462, 7
    %v1464 = vsub.s32 5, %v1463
    %v1465 = vrot.slane %v30, %v1464
    %v1474 = vunpack.c.l.b16 %v52
    %v1475 = vunpack.c.l.b16 %v53
    %v1476 = vunpack.c.l.b16 %v54
    %v1477 = vunpack.c.l.b16 %v55
    %v1478 = vunpack.c.l.b16 %v56
    %v1479 = vunpack.c.l.b16 %v57
    %v1480 = vunpack.c.l.b16 %v58
    %v1481 = vunpack.c.l.b16 %v59
    %v1482 = vpack.c.b16 %v1475, %v1474
    %v1483 = vpack.c.b16 %v1477, %v1476
    %v1484 = vpack.c.b16 %v1479, %v1478
    %v1485 = vpack.c.b16 %v1481, %v1480
    %vm1490 = vcmask 523264
    %v1492 = vsel %vm1490, %v1461, 0
    %1494 = vmatprep.subr.bf16.mxu0 0
    %1495 = vmatpush1.bf16.msra.mxu0 %v1482
    %1496 = vmatprep.subr.bf16.mxu0 0
    %1497 = vmatpush1.bf16.msra.mxu0 %v1483
    %1498 = vmatprep.subr.bf16.mxu0 0
    %1499 = vmatpush1.bf16.msra.mxu0 %v1484
    %1500 = vmatprep.subr.bf16.mxu0 0
    %1501 = vmatpush1.bf16.msra.mxu0 %v1485
    %1502 = vmatprep.subr.bf16.mxu0 0
    %1503 = vmatpush1.bf16.msra.mxu0 0
    %1504 = vmatprep.subr.bf16.mxu0 0
    %1505 = vmatpush1.bf16.msra.mxu0 0
    %1506 = vmatprep.subr.bf16.mxu0 0
    %1507 = vmatpush1.bf16.msra.mxu0 0
    %1508 = vmatprep.subr.bf16.mxu0 0
    %1509 = vmatpush1.bf16.msra.mxu0 0
    %1510 = vmatprep.subr.bf16.mxu0 0
    %1511 = vmatpush1.bf16.msra.mxu0 0
    %1512 = vmatprep.subr.bf16.mxu0 0
    %1513 = vmatpush1.bf16.msra.mxu0 0
    %1514 = vmatprep.subr.bf16.mxu0 0
    %1515 = vmatpush1.bf16.msra.mxu0 0
    %1516 = vmatprep.subr.bf16.mxu0 0
    %1517 = vmatpush1.bf16.msra.mxu0 0
    %1518 = vmatprep.subr.bf16.mxu0 0
    %1519 = vmatpush1.bf16.msra.mxu0 0
    %1520 = vmatprep.subr.bf16.mxu0 0
    %1521 = vmatpush1.bf16.msra.mxu0 0
    %1522 = vmatprep.subr.bf16.mxu0 0
    %1523 = vmatpush1.bf16.msra.mxu0 0
    %1524 = vmatprep.subr.bf16.mxu0 0
    %1525 = vmatpush1.bf16.msra.mxu0 0
    %1526 = vmatprep.mubr.bf16.mxu0 0
    %1527 = vmatmul.mubr.bf16.gmra.mrb[0].mxu0 %v1492
    %v1528 = vpop.f32.mrb[0].mxu0
    %v1529 = vadd.f32 %v1465, %v1528
    %v1530 = vpop.f32.mrb[0].mxu0
    %v1531 = vpop.f32.mrb[0].mxu0
    %v1532 = vadd.f32 %v1465, %v1531
    %v1533 = vpop.f32.mrb[0].mxu0
    %1534 = vdwg.mxu0
    %v1535 = vadd.f32 %v1340, %v1529
    %v1536 = vadd.f32 %v1341, %v1532
    %1537 = vst.msk [vmem:[#allocation2] sm:$0xff] %vm60, %v1535
    %1538 = vst.msk [vmem:[#allocation2 + $0x8] sm:$0xff] %vm60, %v1536
    // Predicated region
    $region30: #{tpu_custom_call.1} parent=1 // pred_check
      _
    $region31: #{tpu_custom_call.1} parent=1 // pred_check_branch
      %1540 = sbr.rel (0) target = $region33
    $region32: #{tpu_custom_call.1} parent=1 // pred_region
      %s1542 = ssub.s32 256, 256
      %1543 = vsyncadd [#allocation3], %s1542
      %s1544 = sshll.u32 [#allocation2], 4
      %s1545 = int_to_ptr.vmem [resolvable:$true] %s1544
      %1550 = dma.vmem_to_hbm [thread:$0]  %s1545, 256, %s7, [#allocation3], 128, 128, 8
    $region33: #{tpu_custom_call.1} parent=1 // pred_fallthru
      _
    // Predicated region
    $region34: #{tpu_custom_call.1} parent=1 // pred_check
      _
    $region35: #{tpu_custom_call.1} parent=1 // pred_check_branch
      %1552 = sbr.rel (0) target = $region37
    $region36: #{tpu_custom_call.1} parent=1 // pred_region
      %1553 = dma.done [#allocation3], 256
    $region37: #{tpu_custom_call.1} parent=1 // pred_fallthru
      _
    %1554 = vsyncpa [#allocation3], 1

</llo_original>
